<compile_context>
chip_gen: v7x
topology: tpu7x:2x2x1
jax: 0.10.0
libtpu: 0.0.40
codegen_flags: <defaults>
</compile_context>

<pallas_src>
import functools

import jax
import jax.numpy as jnp
from jax import lax
from jax.experimental import pallas as pl
from jax.experimental.pallas import tpu as pltpu

_VMEM_LIMIT = 64 * 1024 * 1024  # fits v7x (64 MiB physical) and v5e/v6e


def _blk(dim, pref):
    """Tile size: use `pref` only when it divides `dim`, else the full dim (keeps edge
    blocks exact; pref values are multiples of (8,128) so BlockSpec constraints hold)."""
    if dim > pref and dim % pref == 0:
        return pref
    return dim


# ----------------------------- tiled linear (+bias, +act) ------------------------------

def _matmul_bias_kernel(x_ref, w_ref, b_ref, o_ref, acc_ref, *, activation):
    @pl.when(pl.program_id(2) == 0)
    def _():
        acc_ref[...] = jnp.zeros_like(acc_ref)

    acc_ref[...] += jnp.dot(x_ref[...].astype(jnp.bfloat16),
                            w_ref[...].astype(jnp.bfloat16),
                            preferred_element_type=jnp.float32)

    @pl.when(pl.program_id(2) == pl.num_programs(2) - 1)
    def _():
        acc = acc_ref[...] + b_ref[...]
        if activation == "relu":
            acc = jnp.maximum(acc, 0.0)
        elif activation == "gelu":
            # TODO(synk): PyTorch BERT default is exact erf-GELU; tanh approx used here.
            acc = jax.nn.gelu(acc, approximate=True)
        o_ref[...] = acc.astype(o_ref.dtype)


def linear(x, w, b, activation="none", tm=256, tn=512, tk=512):
    """x: (M, K), w: (K, N), b: (N,) -> (M, N)."""
    M, K = x.shape
    N = w.shape[1]
    bm, bn, bk = _blk(M, tm), _blk(N, tn), _blk(K, tk)
    grid = (M // bm, N // bn, K // bk)
    return pl.pallas_call(
        functools.partial(_matmul_bias_kernel, activation=activation),
        grid=grid,
        in_specs=[
            pl.BlockSpec((bm, bk), lambda i, j, k: (i, k)),
            pl.BlockSpec((bk, bn), lambda i, j, k: (k, j)),
            pl.BlockSpec((1, bn), lambda i, j, k: (0, j)),
        ],
        out_specs=pl.BlockSpec((bm, bn), lambda i, j, k: (i, j)),
        out_shape=jax.ShapeDtypeStruct((M, N), jnp.float32),
        scratch_shapes=[pltpu.VMEM((bm, bn), jnp.float32)],
        compiler_params=pltpu.CompilerParams(
            dimension_semantics=("parallel", "parallel", "arbitrary"),
            vmem_limit_bytes=_VMEM_LIMIT),
    )(x, w, b.reshape(1, N))


# ----------------------------- LayerNorm (standalone + fused) ------------------------------

def _ln(y, g, b, eps):
    mu = jnp.mean(y, axis=-1, keepdims=True)
    var = jnp.mean((y - mu) ** 2, axis=-1, keepdims=True)
    return (y - mu) * lax.rsqrt(var + eps) * g + b


def _layernorm_kernel(x_ref, g_ref, b_ref, o_ref, *, eps):
    o_ref[...] = _ln(x_ref[...].astype(jnp.float32), g_ref[...], b_ref[...], eps)


def layernorm(x, g, b, eps=1e-12):
    M, H = x.shape
    bm = _blk(M, 256)
    return pl.pallas_call(
        functools.partial(_layernorm_kernel, eps=eps),
        grid=(M // bm,),
        in_specs=[pl.BlockSpec((bm, H), lambda i: (i, 0)),
                  pl.BlockSpec((1, H), lambda i: (0, 0)),
                  pl.BlockSpec((1, H), lambda i: (0, 0))],
        out_specs=pl.BlockSpec((bm, H), lambda i: (i, 0)),
        out_shape=jax.ShapeDtypeStruct((M, H), jnp.float32),
        compiler_params=pltpu.CompilerParams(dimension_semantics=("parallel",)),
    )(x, g.reshape(1, H), b.reshape(1, H))


def _linear_add_ln_kernel(x_ref, res_ref, w_ref, b_ref, g_ref, bb_ref, o_ref, *, eps):
    y = jnp.dot(x_ref[...].astype(jnp.bfloat16), w_ref[...].astype(jnp.bfloat16),
                preferred_element_type=jnp.float32)
    y = y + b_ref[...] + res_ref[...]
    o_ref[...] = _ln(y, g_ref[...], bb_ref[...], eps)


def linear_add_ln(x, res, w, b, g, bb, eps=1e-12):
    """LayerNorm(x @ w + b + res); grid over row tiles (full N kept resident for LN)."""
    M, K = x.shape
    N = w.shape[1]
    bm = _blk(M, 256)
    return pl.pallas_call(
        functools.partial(_linear_add_ln_kernel, eps=eps),
        grid=(M // bm,),
        in_specs=[pl.BlockSpec((bm, K), lambda i: (i, 0)),
                  pl.BlockSpec((bm, N), lambda i: (i, 0)),
                  pl.BlockSpec((K, N), lambda i: (0, 0)),
                  pl.BlockSpec((1, N), lambda i: (0, 0)),
                  pl.BlockSpec((1, N), lambda i: (0, 0)),
                  pl.BlockSpec((1, N), lambda i: (0, 0))],
        out_specs=pl.BlockSpec((bm, N), lambda i: (i, 0)),
        out_shape=jax.ShapeDtypeStruct((M, N), jnp.float32),
        compiler_params=pltpu.CompilerParams(
            dimension_semantics=("parallel",), vmem_limit_bytes=_VMEM_LIMIT),
    )(x, res, w, b.reshape(1, N), g.reshape(1, N), bb.reshape(1, N))


# ----------------------------- fused FFN block ------------------------------

def _ffn_ln_kernel(x_ref, w1_ref, b1_ref, w2_ref, b2_ref, g_ref, bb_ref, o_ref, *, eps):
    x = x_ref[...]
    h = jnp.dot(x.astype(jnp.bfloat16), w1_ref[...].astype(jnp.bfloat16),
                preferred_element_type=jnp.float32) + b1_ref[...]
    h = jax.nn.gelu(h, approximate=True)
    y = jnp.dot(h.astype(jnp.bfloat16), w2_ref[...].astype(jnp.bfloat16),
                preferred_element_type=jnp.float32) + b2_ref[...] + x
    o_ref[...] = _ln(y, g_ref[...], bb_ref[...], eps)


def ffn_block(x, w1, b1, w2, b2, g, bb, eps=1e-12):
    """LayerNorm(gelu(x@w1+b1)@w2 + b2 + x); (M, ffn) intermediate stays in VMEM."""
    M, H = x.shape
    F = w1.shape[1]
    bm = _blk(M, 256)
    return pl.pallas_call(
        functools.partial(_ffn_ln_kernel, eps=eps),
        grid=(M // bm,),
        in_specs=[pl.BlockSpec((bm, H), lambda i: (i, 0)),
                  pl.BlockSpec((H, F), lambda i: (0, 0)),
                  pl.BlockSpec((1, F), lambda i: (0, 0)),
                  pl.BlockSpec((F, H), lambda i: (0, 0)),
                  pl.BlockSpec((1, H), lambda i: (0, 0)),
                  pl.BlockSpec((1, H), lambda i: (0, 0)),
                  pl.BlockSpec((1, H), lambda i: (0, 0))],
        out_specs=pl.BlockSpec((bm, H), lambda i: (i, 0)),
        out_shape=jax.ShapeDtypeStruct((M, H), jnp.float32),
        compiler_params=pltpu.CompilerParams(
            dimension_semantics=("parallel",), vmem_limit_bytes=_VMEM_LIMIT),
    )(x, w1, b1.reshape(1, F), w2, b2.reshape(1, H), g.reshape(1, H), bb.reshape(1, H))


# ----------------------------- multi-head attention ------------------------------

def _mha_core(q_of, k_of, v_of, num_heads, scale, bias):
    outs = []
    for h in range(num_heads):
        q, k, v = q_of(h), k_of(h), v_of(h)            # (Sq, hd), (Sk, hd), (Sk, hd) bf16
        s = lax.dot_general(q, k, (((1,), (1,)), ((), ())),
                            preferred_element_type=jnp.float32) * scale
        if bias is not None:
            s = s + bias
        m = jnp.max(s, axis=-1, keepdims=True)
        p = jnp.exp(s - m)
        p = p * pl.reciprocal(jnp.sum(p, axis=-1, keepdims=True), approx=True)
        outs.append(jnp.dot(p.astype(jnp.bfloat16), v, preferred_element_type=jnp.float32))
    return jnp.concatenate(outs, axis=-1)              # lane-dense (Sq, H)


def _self_attn_kernel(qkv_ref, o_ref, *, num_heads, scale):
    # qkv_ref: (S, 3H) with [Q | K | V] packed along lanes; o_ref: (S, H)
    H = o_ref.shape[-1]
    hd = H // num_heads
    S = qkv_ref.shape[0]
    row = lax.broadcasted_iota(jnp.int32, (S, S), 0)
    col = lax.broadcasted_iota(jnp.int32, (S, S), 1)
    bias = jnp.where(col <= row, 0.0, -1e9).astype(jnp.float32)   # causal, built in-kernel
    out = _mha_core(
        lambda h: qkv_ref[:, pl.ds(h * hd, hd)].astype(jnp.bfloat16),
        lambda h: qkv_ref[:, pl.ds(H + h * hd, hd)].astype(jnp.bfloat16),
        lambda h: qkv_ref[:, pl.ds(2 * H + h * hd, hd)].astype(jnp.bfloat16),
        num_heads, scale, bias)
    o_ref[...] = out.astype(o_ref.dtype)


def _cross_attn_kernel(q_ref, kv_ref, o_ref, *, num_heads, scale):
    # q_ref: (Sq, H); kv_ref: (Sk, 2H) with [K | V]; o_ref: (Sq, H); no mask.
    H = o_ref.shape[-1]
    hd = H // num_heads
    out = _mha_core(
        lambda h: q_ref[:, pl.ds(h * hd, hd)].astype(jnp.bfloat16),
        lambda h: kv_ref[:, pl.ds(h * hd, hd)].astype(jnp.bfloat16),
        lambda h: kv_ref[:, pl.ds(H + h * hd, hd)].astype(jnp.bfloat16),
        num_heads, scale, None)
    o_ref[...] = out.astype(o_ref.dtype)


def self_attention(qkv, num_heads, scale):
    B, S, H3 = qkv.shape
    H = H3 // 3
    return pl.pallas_call(
        functools.partial(_self_attn_kernel, num_heads=num_heads, scale=scale),
        grid=(B,),
        in_specs=[pl.BlockSpec((None, S, H3), lambda b: (b, 0, 0))],
        out_specs=pl.BlockSpec((None, S, H), lambda b: (b, 0, 0)),
        out_shape=jax.ShapeDtypeStruct((B, S, H), jnp.float32),
        compiler_params=pltpu.CompilerParams(dimension_semantics=("parallel",)),
    )(qkv)


def cross_attention(q, kv, num_heads, scale):
    B, S, H = q.shape
    Se = kv.shape[1]
    return pl.pallas_call(
        functools.partial(_cross_attn_kernel, num_heads=num_heads, scale=scale),
        grid=(B,),
        in_specs=[pl.BlockSpec((None, S, H), lambda b: (b, 0, 0)),
                  pl.BlockSpec((None, Se, 2 * H), lambda b: (b, 0, 0))],
        out_specs=pl.BlockSpec((None, S, H), lambda b: (b, 0, 0)),
        out_shape=jax.ShapeDtypeStruct((B, S, H), jnp.float32),
        compiler_params=pltpu.CompilerParams(dimension_semantics=("parallel",)),
    )(q, kv)


# ----------------------------- fused Conv1d + ReLU + mean-pool ------------------------------

def _conv_pool_kernel(x_ref, w_ref, b_ref, o_ref, acc_ref, *, K, pool):
    # x_ref: (T + K - 1, C) padded waveform (channels-last); w_ref: (K, C, L); o_ref: (S, L)
    T, L = acc_ref.shape
    S = o_ref.shape[0]
    acc = jnp.zeros((T, L), jnp.float32)
    for k in range(K):                                   # K shifted matmuls, no im2col
        acc = acc + jnp.dot(x_ref[pl.ds(k, T), :], w_ref[k],
                            preferred_element_type=jnp.float32)
    acc_ref[...] = jnp.maximum(acc + b_ref[...], 0.0)    # conv bias + ReLU
    pooled = acc_ref[pl.ds(0, S, stride=pool), :]        # strided reads do the mean-pool
    for p in range(1, pool):
        pooled = pooled + acc_ref[pl.ds(p, S, stride=pool), :]
    o_ref[...] = pooled * (1.0 / pool)


def cnn_encoder_pool(params, waveform, cfg):
    """Conv1d(music_dim, latent_dim, k, padding=same) + ReLU + MeanPooler, fused per batch."""
    B, C, T = waveform.shape
    K = cfg["conv_k"]
    pad = K // 2
    pool = cfg["pool_size"]
    L = cfg["latent_dim"]
    S = T // pool
    x = jnp.transpose(waveform, (0, 2, 1))               # NCW -> NWC (channels-last)
    x = jnp.pad(x, ((0, 0), (pad, pad), (0, 0)))         # (B, T + 2*pad, C)
    return pl.pallas_call(
        functools.partial(_conv_pool_kernel, K=K, pool=pool),
        grid=(B,),
        in_specs=[pl.BlockSpec((None, T + 2 * pad, C), lambda b: (b, 0, 0)),
                  pl.BlockSpec((K, C, L), lambda b: (0, 0, 0)),
                  pl.BlockSpec((1, L), lambda b: (0, 0))],
        out_specs=pl.BlockSpec((None, S, L), lambda b: (b, 0, 0)),
        out_shape=jax.ShapeDtypeStruct((B, S, L), jnp.float32),
        scratch_shapes=[pltpu.VMEM((T, L), jnp.float32)],
        compiler_params=pltpu.CompilerParams(dimension_semantics=("parallel",)),
    )(x, params["conv_w"], params["conv_b"].reshape(1, L))


# ------------------------------- Model glue --------------------------------

def init_params(key, cfg):
    def nrm(k, shape, scale=0.02):
        return scale * jax.random.normal(k, shape, jnp.float32)

    keys = iter(jax.random.split(key, 64))
    H, L, V, F = cfg["hidden"], cfg["latent_dim"], cfg["vocab"], cfg["ffn"]
    K, C = cfg["conv_k"], cfg["music_dim"]
    p = {}
    p["conv_w"] = nrm(next(keys), (K, C, L))             # Conv1d weight, (k, in, out) layout
    p["conv_b"] = jnp.zeros((L,), jnp.float32)
    p["tok_emb"] = nrm(next(keys), (V, H))
    p["pos_emb"] = nrm(next(keys), (cfg["max_pos"], H))
    p["emb_ln_g"] = jnp.ones((H,), jnp.float32)
    p["emb_ln_b"] = jnp.zeros((H,), jnp.float32)
    layers = []
    for _ in range(cfg["layers"]):
        lp = {
            "qkv_w": nrm(next(keys), (H, 3 * H)), "qkv_b": jnp.zeros((3 * H,), jnp.float32),
            "o_w": nrm(next(keys), (H, H)), "o_b": jnp.zeros((H,), jnp.float32),
            "cq_w": nrm(next(keys), (H, H)), "cq_b": jnp.zeros((H,), jnp.float32),
            "ckv_w": nrm(next(keys), (L, 2 * H)), "ckv_b": jnp.zeros((2 * H,), jnp.float32),
            "co_w": nrm(next(keys), (H, H)), "co_b": jnp.zeros((H,), jnp.float32),
            "f1_w": nrm(next(keys), (H, F)), "f1_b": jnp.zeros((F,), jnp.float32),
            "f2_w": nrm(next(keys), (F, H)), "f2_b": jnp.zeros((H,), jnp.float32),
        }
        for ln in ("ln1", "ln2", "ln3"):
            lp[ln + "_g"] = jnp.ones((H,), jnp.float32)
            lp[ln + "_b"] = jnp.zeros((H,), jnp.float32)
        layers.append(lp)
    p["layers"] = layers
    p["lm_w"] = nrm(next(keys), (H, V))
    p["lm_b"] = jnp.zeros((V,), jnp.float32)
    return p


def encoder_decoder_forward(params, waveform, input_ids, cfg):
    B, S = input_ids.shape
    H, V, L = cfg["hidden"], cfg["vocab"], cfg["latent_dim"]
    nh = cfg["heads"]
    hd = H // nh
    scale = 1.0 / float(hd) ** 0.5

    # wave_encoder + pool_wave (fused)
    enc = cnn_encoder_pool(params, waveform, cfg)        # (B, Se, latent_dim)
    Se = enc.shape[1]
    e2 = enc.reshape(B * Se, L)

    # text_decoder embeddings
    x = jnp.take(params["tok_emb"], input_ids, axis=0) + params["pos_emb"][:S][None, :, :]
    x2 = layernorm(x.reshape(B * S, H), params["emb_ln_g"], params["emb_ln_b"])

    # BERT-style decoder layers with cross-attention (layer=5)
    for lp in params["layers"]:
        # --- causal self-attention block ---
        qkv = linear(x2, lp["qkv_w"], lp["qkv_b"])                        # fused Q/K/V proj
        a = self_attention(qkv.reshape(B, S, 3 * H), nh, scale).reshape(B * S, H)
        x2 = linear_add_ln(a, x2, lp["o_w"], lp["o_b"], lp["ln1_g"], lp["ln1_b"])
        # --- cross-attention to encoder_hidden_states ---
        qc = linear(x2, lp["cq_w"], lp["cq_b"])
        ckv = linear(e2, lp["ckv_w"], lp["ckv_b"])                        # fused K/V proj
        c = cross_attention(qc.reshape(B, S, H), ckv.reshape(B, Se, 2 * H),
                            nh, scale).reshape(B * S, H)
        x2 = linear_add_ln(c, x2, lp["co_w"], lp["co_b"], lp["ln2_g"], lp["ln2_b"])
        # --- feed-forward block (fully fused) ---
        x2 = ffn_block(x2, lp["f1_w"], lp["f1_b"], lp["f2_w"], lp["f2_b"],
                       lp["ln3_g"], lp["ln3_b"])

    logits = linear(x2, params["lm_w"], params["lm_b"])
    return logits.reshape(B, S, V)


# TODO(synk): generate() (beam-search / sampling autoregressive decoding) and
# load_pretrained() checkpoint loading are intentionally not implemented.


if __name__ == "__main__":
    cfg = dict(music_dim=4, latent_dim=32, pool_size=4, hidden=32, heads=4,
               ffn=64, vocab=64, layers=5, conv_k=3, max_pos=64)
    B, T, S = 2, 32, 8

    key = jax.random.PRNGKey(0)
    k_wave, k_ids, k_par = jax.random.split(key, 3)
    waveform = jax.random.normal(k_wave, (B, cfg["music_dim"], T), jnp.float32)  # NCW
    input_ids = jax.random.randint(k_ids, (B, S), 0, cfg["vocab"])
    params = init_params(k_par, cfg)

    fwd = jax.jit(functools.partial(encoder_decoder_forward, cfg=cfg))
    logits = jax.block_until_ready(fwd(params, waveform, input_ids))
    assert logits.shape == (B, S, cfg["vocab"]), logits.shape
    assert bool(jnp.all(jnp.isfinite(logits)))
    print("KERNEL_OK")
</pallas_src>

<mosaic_0001>
module attributes {stable_mosaic.version = 11 : i64} {
  func.func @_matmul_bias_kernel(%arg0: i32, %arg1: i32, %arg2: i32, %arg3: memref<16x32xf32, #tpu.memory_space<vmem>>, %arg4: memref<32x64xf32, #tpu.memory_space<vmem>>, %arg5: memref<1x64xf32, #tpu.memory_space<vmem>>, %arg6: memref<16x64xf32, #tpu.memory_space<vmem>>, %arg7: memref<16x64xf32, #tpu.memory_space<vmem>>) attributes {dimension_semantics = [#tpu.dimension_semantics<parallel>, #tpu.dimension_semantics<parallel>, #tpu.dimension_semantics<arbitrary>], iteration_bounds = array<i64: 1, 1, 1>, scalar_prefetch = 0 : i64, scratch_operands = 1 : i64, tpu.core_type = #tpu.core_type<tc>, window_params = [{transform_indices = @transform_0, window_bounds = array<i64: 16, 32>}, {transform_indices = @transform_1, window_bounds = array<i64: 32, 64>}, {transform_indices = @transform_2, window_bounds = array<i64: 1, 64>}, {transform_indices = @transform_3, window_bounds = array<i64: 16, 64>}]} {
    %c0_i32 = arith.constant 0 : i32
    %0 = arith.cmpi eq, %arg2, %c0_i32 : i32
    %1 = arith.extui %0 : i1 to i32
    %c0_i32_0 = arith.constant 0 : i32
    %2 = arith.cmpi ne, %1, %c0_i32_0 : i32
    scf.if %2 {
      %cst_10 = arith.constant 0.000000e+00 : f32
      %14 = vector.broadcast %cst_10 : f32 to vector<16x64xf32>
      %c0_11 = arith.constant 0 : index
      %c0_12 = arith.constant 0 : index
      %15 = vector.load %arg7[%c0_11, %c0_12] : memref<16x64xf32, #tpu.memory_space<vmem>>, vector<16x64xf32>
      tpu.vector_store %arg7[%c0_11, %c0_12], %14 {strides = array<i32>} : memref<16x64xf32, #tpu.memory_space<vmem>>, vector<16x64xf32>,
    } else {
    }
    %c0 = arith.constant 0 : index
    %c0_1 = arith.constant 0 : index
    %3 = vector.load %arg7[%c0, %c0_1] : memref<16x64xf32, #tpu.memory_space<vmem>>, vector<16x64xf32>
    %c0_2 = arith.constant 0 : index
    %c0_3 = arith.constant 0 : index
    %4 = vector.load %arg3[%c0_2, %c0_3] : memref<16x32xf32, #tpu.memory_space<vmem>>, vector<16x32xf32>
    %5 = arith.truncf %4 : vector<16x32xf32> to vector<16x32xbf16>
    %c0_4 = arith.constant 0 : index
    %c0_5 = arith.constant 0 : index
    %6 = vector.load %arg4[%c0_4, %c0_5] : memref<32x64xf32, #tpu.memory_space<vmem>>, vector<32x64xf32>
    %7 = arith.truncf %6 : vector<32x64xf32> to vector<32x64xbf16>
    %cst = arith.constant dense<0.000000e+00> : vector<16x64xf32>
    %8 = tpu.matmul %5, %7, %cst {dimension_numbers = #tpu.dot_dimension_numbers<[1], [0], [0], [1], [0, 0, 1, 1], [], []>} : vector<16x32xbf16>, vector<32x64xbf16>, vector<16x64xf32> -> vector<16x64xf32>
    %9 = arith.addf %3, %8 : vector<16x64xf32>
    %c0_6 = arith.constant 0 : index
    %c0_7 = arith.constant 0 : index
    %10 = vector.load %arg7[%c0_6, %c0_7] : memref<16x64xf32, #tpu.memory_space<vmem>>, vector<16x64xf32>
    tpu.vector_store %arg7[%c0_6, %c0_7], %9 {strides = array<i32>} : memref<16x64xf32, #tpu.memory_space<vmem>>, vector<16x64xf32>,
    %c0_i32_8 = arith.constant 0 : i32
    %11 = arith.cmpi eq, %arg2, %c0_i32_8 : i32
    %12 = arith.extui %11 : i1 to i32
    %c0_i32_9 = arith.constant 0 : i32
    %13 = arith.cmpi ne, %12, %c0_i32_9 : i32
    scf.if %13 {
      %c0_10 = arith.constant 0 : index
      %c0_11 = arith.constant 0 : index
      %14 = vector.load %arg7[%c0_10, %c0_11] : memref<16x64xf32, #tpu.memory_space<vmem>>, vector<16x64xf32>
      %c0_12 = arith.constant 0 : index
      %c0_13 = arith.constant 0 : index
      %15 = vector.load %arg5[%c0_12, %c0_13] : memref<1x64xf32, #tpu.memory_space<vmem>>, vector<1x64xf32>
      %16 = vector.broadcast %15 : vector<1x64xf32> to vector<16x64xf32>
      %17 = arith.addf %14, %16 : vector<16x64xf32>
      %c0_14 = arith.constant 0 : index
      %c0_15 = arith.constant 0 : index
      %18 = vector.load %arg6[%c0_14, %c0_15] : memref<16x64xf32, #tpu.memory_space<vmem>>, vector<16x64xf32>
      tpu.vector_store %arg6[%c0_14, %c0_15], %17 {strides = array<i32>} : memref<16x64xf32, #tpu.memory_space<vmem>>, vector<16x64xf32>,
    } else {
    }
    return
  }
  func.func @transform_0(%arg0: i32, %arg1: i32, %arg2: i32) -> (i32, i32) {
    %c0_i32 = arith.constant 0 : i32
    return %arg0, %arg2 : i32, i32
  }
  func.func @transform_1(%arg0: i32, %arg1: i32, %arg2: i32) -> (i32, i32) {
    %c0_i32 = arith.constant 0 : i32
    return %arg2, %arg1 : i32, i32
  }
  func.func @transform_2(%arg0: i32, %arg1: i32, %arg2: i32) -> (i32, i32) {
    %c0_i32 = arith.constant 0 : i32
    %c0_i32_0 = arith.constant 0 : i32
    return %c0_i32, %arg1 : i32, i32
  }
  func.func @transform_3(%arg0: i32, %arg1: i32, %arg2: i32) -> (i32, i32) {
    %c0_i32 = arith.constant 0 : i32
    return %arg0, %arg1 : i32, i32
  }
}

module attributes {stable_mosaic.version = 11 : i64} {
  func.func @_conv_pool_kernel(%arg0: i32, %arg1: memref<1x34x4xf32, #tpu.memory_space<vmem>>, %arg2: memref<3x4x32xf32, #tpu.memory_space<vmem>>, %arg3: memref<1x32xf32, #tpu.memory_space<vmem>>, %arg4: memref<1x8x32xf32, #tpu.memory_space<vmem>>, %arg5: memref<32x32xf32, #tpu.memory_space<vmem>>) attributes {dimension_semantics = [#tpu.dimension_semantics<parallel>], iteration_bounds = array<i64: 2>, scalar_prefetch = 0 : i64, scratch_operands = 1 : i64, tpu.core_type = #tpu.core_type<tc>, window_params = [{transform_indices = @transform_0, window_bounds = array<i64: 1, 34, 4>}, {pipeline_mode = #tpu.pipeline_mode<synchronous>, transform_indices = @transform_1, window_bounds = array<i64: 3, 4, 32>}, {pipeline_mode = #tpu.pipeline_mode<synchronous>, transform_indices = @transform_2, window_bounds = array<i64: 1, 32>}, {transform_indices = @transform_3, window_bounds = array<i64: 1, 8, 32>}]} {
    %cst = arith.constant 0.000000e+00 : f32
    %0 = vector.broadcast %cst : f32 to vector<32x32xf32>
    %c0 = arith.constant 0 : index
    %c0_0 = arith.constant 0 : index
    %c0_1 = arith.constant 0 : index
    %1 = vector.load %arg1[%c0, %c0_0, %c0_1] : memref<1x34x4xf32, #tpu.memory_space<vmem>>, vector<1x32x4xf32>
    %2 = vector.shape_cast %1 : vector<1x32x4xf32> to vector<32x4xf32>
    %c0_2 = arith.constant 0 : index
    %c0_3 = arith.constant 0 : index
    %c0_4 = arith.constant 0 : index
    %3 = vector.load %arg2[%c0_2, %c0_3, %c0_4] : memref<3x4x32xf32, #tpu.memory_space<vmem>>, vector<1x4x32xf32>
    %4 = vector.shape_cast %3 : vector<1x4x32xf32> to vector<4x32xf32>
    %cst_5 = arith.constant dense<0.000000e+00> : vector<32x32xf32>
    %5 = tpu.matmul %2, %4, %cst_5 {dimension_numbers = #tpu.dot_dimension_numbers<[1], [0], [0], [1], [0, 0, 1, 1], [], []>} : vector<32x4xf32>, vector<4x32xf32>, vector<32x32xf32> -> vector<32x32xf32>
    %6 = arith.addf %0, %5 : vector<32x32xf32>
    %c0_6 = arith.constant 0 : index
    %c1 = arith.constant 1 : index
    %c0_7 = arith.constant 0 : index
    %7 = vector.load %arg1[%c0_6, %c1, %c0_7] : memref<1x34x4xf32, #tpu.memory_space<vmem>>, vector<1x32x4xf32>
    %8 = vector.shape_cast %7 : vector<1x32x4xf32> to vector<32x4xf32>
    %c1_8 = arith.constant 1 : index
    %c0_9 = arith.constant 0 : index
    %c0_10 = arith.constant 0 : index
    %9 = vector.load %arg2[%c1_8, %c0_9, %c0_10] : memref<3x4x32xf32, #tpu.memory_space<vmem>>, vector<1x4x32xf32>
    %10 = vector.shape_cast %9 : vector<1x4x32xf32> to vector<4x32xf32>
    %cst_11 = arith.constant dense<0.000000e+00> : vector<32x32xf32>
    %11 = tpu.matmul %8, %10, %cst_11 {dimension_numbers = #tpu.dot_dimension_numbers<[1], [0], [0], [1], [0, 0, 1, 1], [], []>} : vector<32x4xf32>, vector<4x32xf32>, vector<32x32xf32> -> vector<32x32xf32>
    %12 = arith.addf %6, %11 : vector<32x32xf32>
    %c0_12 = arith.constant 0 : index
    %c2 = arith.constant 2 : index
    %c0_13 = arith.constant 0 : index
    %13 = vector.load %arg1[%c0_12, %c2, %c0_13] : memref<1x34x4xf32, #tpu.memory_space<vmem>>, vector<1x32x4xf32>
    %14 = vector.shape_cast %13 : vector<1x32x4xf32> to vector<32x4xf32>
    %c2_14 = arith.constant 2 : index
    %c0_15 = arith.constant 0 : index
    %c0_16 = arith.constant 0 : index
    %15 = vector.load %arg2[%c2_14, %c0_15, %c0_16] : memref<3x4x32xf32, #tpu.memory_space<vmem>>, vector<1x4x32xf32>
    %16 = vector.shape_cast %15 : vector<1x4x32xf32> to vector<4x32xf32>
    %cst_17 = arith.constant dense<0.000000e+00> : vector<32x32xf32>
    %17 = tpu.matmul %14, %16, %cst_17 {dimension_numbers = #tpu.dot_dimension_numbers<[1], [0], [0], [1], [0, 0, 1, 1], [], []>} : vector<32x4xf32>, vector<4x32xf32>, vector<32x32xf32> -> vector<32x32xf32>
    %18 = arith.addf %12, %17 : vector<32x32xf32>
    %c0_18 = arith.constant 0 : index
    %c0_19 = arith.constant 0 : index
    %19 = vector.load %arg3[%c0_18, %c0_19] : memref<1x32xf32, #tpu.memory_space<vmem>>, vector<1x32xf32>
    %20 = vector.broadcast %19 : vector<1x32xf32> to vector<32x32xf32>
    %21 = arith.addf %18, %20 : vector<32x32xf32>
    %cst_20 = arith.constant 0.000000e+00 : f32
    %22 = vector.broadcast %cst_20 : f32 to vector<32x32xf32>
    %23 = arith.maximumf %21, %22 : vector<32x32xf32>
    %c0_21 = arith.constant 0 : index
    %c0_22 = arith.constant 0 : index
    %24 = vector.load %arg5[%c0_21, %c0_22] : memref<32x32xf32, #tpu.memory_space<vmem>>, vector<32x32xf32>
    tpu.vector_store %arg5[%c0_21, %c0_22], %23 {strides = array<i32>} : memref<32x32xf32, #tpu.memory_space<vmem>>, vector<32x32xf32>,
    %c0_23 = arith.constant 0 : index
    %c0_24 = arith.constant 0 : index
    %25 = tpu.strided_load %arg5[%c0_23, %c0_24] {strides = array<i32: 4, 1>} : memref<32x32xf32, #tpu.memory_space<vmem>>, vector<8x32xf32>
    %c1_25 = arith.constant 1 : index
    %c0_26 = arith.constant 0 : index
    %26 = tpu.strided_load %arg5[%c1_25, %c0_26] {strides = array<i32: 4, 1>} : memref<32x32xf32, #tpu.memory_space<vmem>>, vector<8x32xf32>
    %27 = arith.addf %25, %26 : vector<8x32xf32>
    %c2_27 = arith.constant 2 : index
    %c0_28 = arith.constant 0 : index
    %28 = tpu.strided_load %arg5[%c2_27, %c0_28] {strides = array<i32: 4, 1>} : memref<32x32xf32, #tpu.memory_space<vmem>>, vector<8x32xf32>
    %29 = arith.addf %27, %28 : vector<8x32xf32>
    %c3 = arith.constant 3 : index
    %c0_29 = arith.constant 0 : index
    %30 = tpu.strided_load %arg5[%c3, %c0_29] {strides = array<i32: 4, 1>} : memref<32x32xf32, #tpu.memory_space<vmem>>, vector<8x32xf32>
    %31 = arith.addf %29, %30 : vector<8x32xf32>
    %cst_30 = arith.constant 2.500000e-01 : f32
    %32 = vector.broadcast %cst_30 : f32 to vector<8x32xf32>
    %33 = arith.mulf %31, %32 : vector<8x32xf32>
    %c0_31 = arith.constant 0 : index
    %c0_32 = arith.constant 0 : index
    %c0_33 = arith.constant 0 : index
    %34 = vector.load %arg4[%c0_31, %c0_32, %c0_33] : memref<1x8x32xf32, #tpu.memory_space<vmem>>, vector<1x8x32xf32>
    %35 = vector.shape_cast %34 : vector<1x8x32xf32> to vector<8x32xf32>
    %36 = vector.shape_cast %33 : vector<8x32xf32> to vector<1x8x32xf32>
    tpu.vector_store %arg4[%c0_31, %c0_32, %c0_33], %36 {strides = array<i32>} : memref<1x8x32xf32, #tpu.memory_space<vmem>>, vector<1x8x32xf32>,
    return
  }
  func.func @transform_0(%arg0: i32) -> (i32, i32, i32) {
    %c0_i32 = arith.constant 0 : i32
    %c0_i32_0 = arith.constant 0 : i32
    %c0_i32_1 = arith.constant 0 : i32
    return %arg0, %c0_i32, %c0_i32_0 : i32, i32, i32
  }
  func.func @transform_1(%arg0: i32) -> (i32, i32, i32) {
    %c0_i32 = arith.constant 0 : i32
    %c0_i32_0 = arith.constant 0 : i32
    %c0_i32_1 = arith.constant 0 : i32
    %c0_i32_2 = arith.constant 0 : i32
    return %c0_i32, %c0_i32_0, %c0_i32_1 : i32, i32, i32
  }
  func.func @transform_2(%arg0: i32) -> (i32, i32) {
    %c0_i32 = arith.constant 0 : i32
    %c0_i32_0 = arith.constant 0 : i32
    %c0_i32_1 = arith.constant 0 : i32
    return %c0_i32, %c0_i32_0 : i32, i32
  }
  func.func @transform_3(%arg0: i32) -> (i32, i32, i32) {
    %c0_i32 = arith.constant 0 : i32
    %c0_i32_0 = arith.constant 0 : i32
    %c0_i32_1 = arith.constant 0 : i32
    return %arg0, %c0_i32, %c0_i32_0 : i32, i32, i32
  }
}

module attributes {stable_mosaic.version = 11 : i64} {
  func.func @_matmul_bias_kernel(%arg0: i32, %arg1: i32, %arg2: i32, %arg3: memref<16x32xf32, #tpu.memory_space<vmem>>, %arg4: memref<32x96xf32, #tpu.memory_space<vmem>>, %arg5: memref<1x96xf32, #tpu.memory_space<vmem>>, %arg6: memref<16x96xf32, #tpu.memory_space<vmem>>, %arg7: memref<16x96xf32, #tpu.memory_space<vmem>>) attributes {dimension_semantics = [#tpu.dimension_semantics<parallel>, #tpu.dimension_semantics<parallel>, #tpu.dimension_semantics<arbitrary>], iteration_bounds = array<i64: 1, 1, 1>, scalar_prefetch = 0 : i64, scratch_operands = 1 : i64, tpu.core_type = #tpu.core_type<tc>, window_params = [{transform_indices = @transform_0, window_bounds = array<i64: 16, 32>}, {transform_indices = @transform_1, window_bounds = array<i64: 32, 96>}, {transform_indices = @transform_2, window_bounds = array<i64: 1, 96>}, {transform_indices = @transform_3, window_bounds = array<i64: 16, 96>}]} {
    %c0_i32 = arith.constant 0 : i32
    %0 = arith.cmpi eq, %arg2, %c0_i32 : i32
    %1 = arith.extui %0 : i1 to i32
    %c0_i32_0 = arith.constant 0 : i32
    %2 = arith.cmpi ne, %1, %c0_i32_0 : i32
    scf.if %2 {
      %cst_10 = arith.constant 0.000000e+00 : f32
      %14 = vector.broadcast %cst_10 : f32 to vector<16x96xf32>
      %c0_11 = arith.constant 0 : index
      %c0_12 = arith.constant 0 : index
      %15 = vector.load %arg7[%c0_11, %c0_12] : memref<16x96xf32, #tpu.memory_space<vmem>>, vector<16x96xf32>
      tpu.vector_store %arg7[%c0_11, %c0_12], %14 {strides = array<i32>} : memref<16x96xf32, #tpu.memory_space<vmem>>, vector<16x96xf32>,
    } else {
    }
    %c0 = arith.constant 0 : index
    %c0_1 = arith.constant 0 : index
    %3 = vector.load %arg7[%c0, %c0_1] : memref<16x96xf32, #tpu.memory_space<vmem>>, vector<16x96xf32>
    %c0_2 = arith.constant 0 : index
    %c0_3 = arith.constant 0 : index
    %4 = vector.load %arg3[%c0_2, %c0_3] : memref<16x32xf32, #tpu.memory_space<vmem>>, vector<16x32xf32>
    %5 = arith.truncf %4 : vector<16x32xf32> to vector<16x32xbf16>
    %c0_4 = arith.constant 0 : index
    %c0_5 = arith.constant 0 : index
    %6 = vector.load %arg4[%c0_4, %c0_5] : memref<32x96xf32, #tpu.memory_space<vmem>>, vector<32x96xf32>
    %7 = arith.truncf %6 : vector<32x96xf32> to vector<32x96xbf16>
    %cst = arith.constant dense<0.000000e+00> : vector<16x96xf32>
    %8 = tpu.matmul %5, %7, %cst {dimension_numbers = #tpu.dot_dimension_numbers<[1], [0], [0], [1], [0, 0, 1, 1], [], []>} : vector<16x32xbf16>, vector<32x96xbf16>, vector<16x96xf32> -> vector<16x96xf32>
    %9 = arith.addf %3, %8 : vector<16x96xf32>
    %c0_6 = arith.constant 0 : index
    %c0_7 = arith.constant 0 : index
    %10 = vector.load %arg7[%c0_6, %c0_7] : memref<16x96xf32, #tpu.memory_space<vmem>>, vector<16x96xf32>
    tpu.vector_store %arg7[%c0_6, %c0_7], %9 {strides = array<i32>} : memref<16x96xf32, #tpu.memory_space<vmem>>, vector<16x96xf32>,
    %c0_i32_8 = arith.constant 0 : i32
    %11 = arith.cmpi eq, %arg2, %c0_i32_8 : i32
    %12 = arith.extui %11 : i1 to i32
    %c0_i32_9 = arith.constant 0 : i32
    %13 = arith.cmpi ne, %12, %c0_i32_9 : i32
    scf.if %13 {
      %c0_10 = arith.constant 0 : index
      %c0_11 = arith.constant 0 : index
      %14 = vector.load %arg7[%c0_10, %c0_11] : memref<16x96xf32, #tpu.memory_space<vmem>>, vector<16x96xf32>
      %c0_12 = arith.constant 0 : index
      %c0_13 = arith.constant 0 : index
      %15 = vector.load %arg5[%c0_12, %c0_13] : memref<1x96xf32, #tpu.memory_space<vmem>>, vector<1x96xf32>
      %16 = vector.broadcast %15 : vector<1x96xf32> to vector<16x96xf32>
      %17 = arith.addf %14, %16 : vector<16x96xf32>
      %c0_14 = arith.constant 0 : index
      %c0_15 = arith.constant 0 : index
      %18 = vector.load %arg6[%c0_14, %c0_15] : memref<16x96xf32, #tpu.memory_space<vmem>>, vector<16x96xf32>
      tpu.vector_store %arg6[%c0_14, %c0_15], %17 {strides = array<i32>} : memref<16x96xf32, #tpu.memory_space<vmem>>, vector<16x96xf32>,
    } else {
    }
    return
  }
  func.func @transform_0(%arg0: i32, %arg1: i32, %arg2: i32) -> (i32, i32) {
    %c0_i32 = arith.constant 0 : i32
    return %arg0, %arg2 : i32, i32
  }
  func.func @transform_1(%arg0: i32, %arg1: i32, %arg2: i32) -> (i32, i32) {
    %c0_i32 = arith.constant 0 : i32
    return %arg2, %arg1 : i32, i32
  }
  func.func @transform_2(%arg0: i32, %arg1: i32, %arg2: i32) -> (i32, i32) {
    %c0_i32 = arith.constant 0 : i32
    %c0_i32_0 = arith.constant 0 : i32
    return %c0_i32, %arg1 : i32, i32
  }
  func.func @transform_3(%arg0: i32, %arg1: i32, %arg2: i32) -> (i32, i32) {
    %c0_i32 = arith.constant 0 : i32
    return %arg0, %arg1 : i32, i32
  }
}

module attributes {stable_mosaic.version = 11 : i64} {
  func.func @_layernorm_kernel(%arg0: i32, %arg1: memref<16x32xf32, #tpu.memory_space<vmem>>, %arg2: memref<1x32xf32, #tpu.memory_space<vmem>>, %arg3: memref<1x32xf32, #tpu.memory_space<vmem>>, %arg4: memref<16x32xf32, #tpu.memory_space<vmem>>) attributes {dimension_semantics = [#tpu.dimension_semantics<parallel>], iteration_bounds = array<i64: 1>, scalar_prefetch = 0 : i64, scratch_operands = 0 : i64, tpu.core_type = #tpu.core_type<tc>, window_params = [{transform_indices = @transform_0, window_bounds = array<i64: 16, 32>}, {pipeline_mode = #tpu.pipeline_mode<synchronous>, transform_indices = @transform_1, window_bounds = array<i64: 1, 32>}, {pipeline_mode = #tpu.pipeline_mode<synchronous>, transform_indices = @transform_2, window_bounds = array<i64: 1, 32>}, {transform_indices = @transform_3, window_bounds = array<i64: 16, 32>}]} {
    %c0 = arith.constant 0 : index
    %c0_0 = arith.constant 0 : index
    %0 = vector.load %arg1[%c0, %c0_0] : memref<16x32xf32, #tpu.memory_space<vmem>>, vector<16x32xf32>
    %c0_1 = arith.constant 0 : index
    %c0_2 = arith.constant 0 : index
    %1 = vector.load %arg2[%c0_1, %c0_2] : memref<1x32xf32, #tpu.memory_space<vmem>>, vector<1x32xf32>
    %c0_3 = arith.constant 0 : index
    %c0_4 = arith.constant 0 : index
    %2 = vector.load %arg3[%c0_3, %c0_4] : memref<1x32xf32, #tpu.memory_space<vmem>>, vector<1x32xf32>
    %cst = arith.constant dense<0.000000e+00> : vector<16xf32>
    %3 = vector.multi_reduction <add>, %0, %cst [1] : vector<16x32xf32> to vector<16xf32>
    %4 = vector.shape_cast %3 : vector<16xf32> to vector<16x1xf32>
    %cst_5 = arith.constant 3.200000e+01 : f32
    %5 = vector.broadcast %cst_5 : f32 to vector<16x1xf32>
    %6 = arith.divf %4, %5 : vector<16x1xf32>
    %7 = vector.broadcast %6 : vector<16x1xf32> to vector<16x32xf32>
    %8 = arith.subf %0, %7 : vector<16x32xf32>
    %9 = arith.mulf %8, %8 : vector<16x32xf32>
    %cst_6 = arith.constant dense<0.000000e+00> : vector<16xf32>
    %10 = vector.multi_reduction <add>, %9, %cst_6 [1] : vector<16x32xf32> to vector<16xf32>
    %11 = vector.shape_cast %10 : vector<16xf32> to vector<16x1xf32>
    %cst_7 = arith.constant 3.200000e+01 : f32
    %12 = vector.broadcast %cst_7 : f32 to vector<16x1xf32>
    %13 = arith.divf %11, %12 : vector<16x1xf32>
    %14 = vector.broadcast %6 : vector<16x1xf32> to vector<16x32xf32>
    %15 = arith.subf %0, %14 : vector<16x32xf32>
    %cst_8 = arith.constant 9.99999996E-13 : f32
    %16 = vector.broadcast %cst_8 : f32 to vector<16x1xf32>
    %17 = arith.addf %13, %16 : vector<16x1xf32>
    %18 = math.rsqrt %17 : vector<16x1xf32>
    %19 = vector.broadcast %18 : vector<16x1xf32> to vector<16x32xf32>
    %20 = arith.mulf %15, %19 : vector<16x32xf32>
    %21 = vector.broadcast %1 : vector<1x32xf32> to vector<16x32xf32>
    %22 = arith.mulf %20, %21 : vector<16x32xf32>
    %23 = vector.broadcast %2 : vector<1x32xf32> to vector<16x32xf32>
    %24 = arith.addf %22, %23 : vector<16x32xf32>
    %c0_9 = arith.constant 0 : index
    %c0_10 = arith.constant 0 : index
    %25 = vector.load %arg4[%c0_9, %c0_10] : memref<16x32xf32, #tpu.memory_space<vmem>>, vector<16x32xf32>
    tpu.vector_store %arg4[%c0_9, %c0_10], %24 {strides = array<i32>} : memref<16x32xf32, #tpu.memory_space<vmem>>, vector<16x32xf32>,
    return
  }
  func.func @transform_0(%arg0: i32) -> (i32, i32) {
    %c0_i32 = arith.constant 0 : i32
    %c0_i32_0 = arith.constant 0 : i32
    return %arg0, %c0_i32 : i32, i32
  }
  func.func @transform_1(%arg0: i32) -> (i32, i32) {
    %c0_i32 = arith.constant 0 : i32
    %c0_i32_0 = arith.constant 0 : i32
    %c0_i32_1 = arith.constant 0 : i32
    return %c0_i32, %c0_i32_0 : i32, i32
  }
  func.func @transform_2(%arg0: i32) -> (i32, i32) {
    %c0_i32 = arith.constant 0 : i32
    %c0_i32_0 = arith.constant 0 : i32
    %c0_i32_1 = arith.constant 0 : i32
    return %c0_i32, %c0_i32_0 : i32, i32
  }
  func.func @transform_3(%arg0: i32) -> (i32, i32) {
    %c0_i32 = arith.constant 0 : i32
    %c0_i32_0 = arith.constant 0 : i32
    return %arg0, %c0_i32 : i32, i32
  }
}

module attributes {stable_mosaic.version = 11 : i64} {
  func.func @_self_attn_kernel(%arg0: i32, %arg1: memref<1x8x96xf32, #tpu.memory_space<vmem>>, %arg2: memref<1x8x32xf32, #tpu.memory_space<vmem>>) attributes {dimension_semantics = [#tpu.dimension_semantics<parallel>], iteration_bounds = array<i64: 2>, scalar_prefetch = 0 : i64, scratch_operands = 0 : i64, tpu.core_type = #tpu.core_type<tc>, window_params = [{transform_indices = @transform_0, window_bounds = array<i64: 1, 8, 96>}, {transform_indices = @transform_1, window_bounds = array<i64: 1, 8, 32>}]} {
    %0 = tpu.iota {dimensions = array<i32: 0>} : vector<8x8xi32>
    %1 = tpu.iota {dimensions = array<i32: 1>} : vector<8x8xi32>
    %2 = arith.cmpi sle, %1, %0 : vector<8x8xi32>
    %cst = arith.constant 0.000000e+00 : f32
    %cst_0 = arith.constant -1.000000e+09 : f32
    %3 = vector.broadcast %cst : f32 to vector<8x8xf32>
    %4 = vector.broadcast %cst_0 : f32 to vector<8x8xf32>
    %5 = arith.select %2, %3, %4 : vector<8x8xi1>, vector<8x8xf32>
    %c0 = arith.constant 0 : index
    %c0_1 = arith.constant 0 : index
    %c0_2 = arith.constant 0 : index
    %6 = vector.load %arg1[%c0, %c0_1, %c0_2] : memref<1x8x96xf32, #tpu.memory_space<vmem>>, vector<1x8x8xf32>
    %7 = vector.shape_cast %6 : vector<1x8x8xf32> to vector<8x8xf32>
    %8 = arith.truncf %7 : vector<8x8xf32> to vector<8x8xbf16>
    %c0_3 = arith.constant 0 : index
    %c0_4 = arith.constant 0 : index
    %c32 = arith.constant 32 : index
    %9 = vector.load %arg1[%c0_3, %c0_4, %c32] : memref<1x8x96xf32, #tpu.memory_space<vmem>>, vector<1x8x8xf32>
    %10 = vector.shape_cast %9 : vector<1x8x8xf32> to vector<8x8xf32>
    %11 = arith.truncf %10 : vector<8x8xf32> to vector<8x8xbf16>
    %c0_5 = arith.constant 0 : index
    %c0_6 = arith.constant 0 : index
    %c64 = arith.constant 64 : index
    %12 = vector.load %arg1[%c0_5, %c0_6, %c64] : memref<1x8x96xf32, #tpu.memory_space<vmem>>, vector<1x8x8xf32>
    %13 = vector.shape_cast %12 : vector<1x8x8xf32> to vector<8x8xf32>
    %14 = arith.truncf %13 : vector<8x8xf32> to vector<8x8xbf16>
    %cst_7 = arith.constant dense<0.000000e+00> : vector<8x8xf32>
    %15 = tpu.matmul %8, %11, %cst_7 {dimension_numbers = #tpu.dot_dimension_numbers<[1], [1], [0], [0], [0, 0, 1, 0], [], []>} : vector<8x8xbf16>, vector<8x8xbf16>, vector<8x8xf32> -> vector<8x8xf32>
    %cst_8 = arith.constant 0.353553385 : f32
    %16 = vector.broadcast %cst_8 : f32 to vector<8x8xf32>
    %17 = arith.mulf %15, %16 : vector<8x8xf32>
    %18 = arith.addf %17, %5 : vector<8x8xf32>
    %cst_9 = arith.constant dense<0xFF800000> : vector<8xf32>
    %19 = vector.multi_reduction <maximumf>, %18, %cst_9 [1] : vector<8x8xf32> to vector<8xf32>
    %20 = vector.shape_cast %19 : vector<8xf32> to vector<8x1xf32>
    %21 = vector.broadcast %20 : vector<8x1xf32> to vector<8x8xf32>
    %22 = arith.subf %18, %21 : vector<8x8xf32>
    %23 = math.exp %22 : vector<8x8xf32>
    %cst_10 = arith.constant dense<0.000000e+00> : vector<8xf32>
    %24 = vector.multi_reduction <add>, %23, %cst_10 [1] : vector<8x8xf32> to vector<8xf32>
    %25 = vector.shape_cast %24 : vector<8xf32> to vector<8x1xf32>
    %26 = tpu.reciprocal %25 {approx = true} : vector<8x1xf32> -> vector<8x1xf32>
    %27 = vector.broadcast %26 : vector<8x1xf32> to vector<8x8xf32>
    %28 = arith.mulf %23, %27 : vector<8x8xf32>
    %29 = arith.truncf %28 : vector<8x8xf32> to vector<8x8xbf16>
    %cst_11 = arith.constant dense<0.000000e+00> : vector<8x8xf32>
    %30 = tpu.matmul %29, %14, %cst_11 {dimension_numbers = #tpu.dot_dimension_numbers<[1], [0], [0], [1], [0, 0, 1, 1], [], []>} : vector<8x8xbf16>, vector<8x8xbf16>, vector<8x8xf32> -> vector<8x8xf32>
    %c0_12 = arith.constant 0 : index
    %c0_13 = arith.constant 0 : index
    %c8 = arith.constant 8 : index
    %31 = vector.load %arg1[%c0_12, %c0_13, %c8] : memref<1x8x96xf32, #tpu.memory_space<vmem>>, vector<1x8x8xf32>
    %32 = vector.shape_cast %31 : vector<1x8x8xf32> to vector<8x8xf32>
    %33 = arith.truncf %32 : vector<8x8xf32> to vector<8x8xbf16>
    %c0_14 = arith.constant 0 : index
    %c0_15 = arith.constant 0 : index
    %c40 = arith.constant 40 : index
    %34 = vector.load %arg1[%c0_14, %c0_15, %c40] : memref<1x8x96xf32, #tpu.memory_space<vmem>>, vector<1x8x8xf32>
    %35 = vector.shape_cast %34 : vector<1x8x8xf32> to vector<8x8xf32>
    %36 = arith.truncf %35 : vector<8x8xf32> to vector<8x8xbf16>
    %c0_16 = arith.constant 0 : index
    %c0_17 = arith.constant 0 : index
    %c72 = arith.constant 72 : index
    %37 = vector.load %arg1[%c0_16, %c0_17, %c72] : memref<1x8x96xf32, #tpu.memory_space<vmem>>, vector<1x8x8xf32>
    %38 = vector.shape_cast %37 : vector<1x8x8xf32> to vector<8x8xf32>
    %39 = arith.truncf %38 : vector<8x8xf32> to vector<8x8xbf16>
    %cst_18 = arith.constant dense<0.000000e+00> : vector<8x8xf32>
    %40 = tpu.matmul %33, %36, %cst_18 {dimension_numbers = #tpu.dot_dimension_numbers<[1], [1], [0], [0], [0, 0, 1, 0], [], []>} : vector<8x8xbf16>, vector<8x8xbf16>, vector<8x8xf32> -> vector<8x8xf32>
    %cst_19 = arith.constant 0.353553385 : f32
    %41 = vector.broadcast %cst_19 : f32 to vector<8x8xf32>
    %42 = arith.mulf %40, %41 : vector<8x8xf32>
    %43 = arith.addf %42, %5 : vector<8x8xf32>
    %cst_20 = arith.constant dense<0xFF800000> : vector<8xf32>
    %44 = vector.multi_reduction <maximumf>, %43, %cst_20 [1] : vector<8x8xf32> to vector<8xf32>
    %45 = vector.shape_cast %44 : vector<8xf32> to vector<8x1xf32>
    %46 = vector.broadcast %45 : vector<8x1xf32> to vector<8x8xf32>
    %47 = arith.subf %43, %46 : vector<8x8xf32>
    %48 = math.exp %47 : vector<8x8xf32>
    %cst_21 = arith.constant dense<0.000000e+00> : vector<8xf32>
    %49 = vector.multi_reduction <add>, %48, %cst_21 [1] : vector<8x8xf32> to vector<8xf32>
    %50 = vector.shape_cast %49 : vector<8xf32> to vector<8x1xf32>
    %51 = tpu.reciprocal %50 {approx = true} : vector<8x1xf32> -> vector<8x1xf32>
    %52 = vector.broadcast %51 : vector<8x1xf32> to vector<8x8xf32>
    %53 = arith.mulf %48, %52 : vector<8x8xf32>
    %54 = arith.truncf %53 : vector<8x8xf32> to vector<8x8xbf16>
    %cst_22 = arith.constant dense<0.000000e+00> : vector<8x8xf32>
    %55 = tpu.matmul %54, %39, %cst_22 {dimension_numbers = #tpu.dot_dimension_numbers<[1], [0], [0], [1], [0, 0, 1, 1], [], []>} : vector<8x8xbf16>, vector<8x8xbf16>, vector<8x8xf32> -> vector<8x8xf32>
    %c0_23 = arith.constant 0 : index
    %c0_24 = arith.constant 0 : index
    %c16 = arith.constant 16 : index
    %56 = vector.load %arg1[%c0_23, %c0_24, %c16] : memref<1x8x96xf32, #tpu.memory_space<vmem>>, vector<1x8x8xf32>
    %57 = vector.shape_cast %56 : vector<1x8x8xf32> to vector<8x8xf32>
    %58 = arith.truncf %57 : vector<8x8xf32> to vector<8x8xbf16>
    %c0_25 = arith.constant 0 : index
    %c0_26 = arith.constant 0 : index
    %c48 = arith.constant 48 : index
    %59 = vector.load %arg1[%c0_25, %c0_26, %c48] : memref<1x8x96xf32, #tpu.memory_space<vmem>>, vector<1x8x8xf32>
    %60 = vector.shape_cast %59 : vector<1x8x8xf32> to vector<8x8xf32>
    %61 = arith.truncf %60 : vector<8x8xf32> to vector<8x8xbf16>
    %c0_27 = arith.constant 0 : index
    %c0_28 = arith.constant 0 : index
    %c80 = arith.constant 80 : index
    %62 = vector.load %arg1[%c0_27, %c0_28, %c80] : memref<1x8x96xf32, #tpu.memory_space<vmem>>, vector<1x8x8xf32>
    %63 = vector.shape_cast %62 : vector<1x8x8xf32> to vector<8x8xf32>
    %64 = arith.truncf %63 : vector<8x8xf32> to vector<8x8xbf16>
    %cst_29 = arith.constant dense<0.000000e+00> : vector<8x8xf32>
    %65 = tpu.matmul %58, %61, %cst_29 {dimension_numbers = #tpu.dot_dimension_numbers<[1], [1], [0], [0], [0, 0, 1, 0], [], []>} : vector<8x8xbf16>, vector<8x8xbf16>, vector<8x8xf32> -> vector<8x8xf32>
    %cst_30 = arith.constant 0.353553385 : f32
    %66 = vector.broadcast %cst_30 : f32 to vector<8x8xf32>
    %67 = arith.mulf %65, %66 : vector<8x8xf32>
    %68 = arith.addf %67, %5 : vector<8x8xf32>
    %cst_31 = arith.constant dense<0xFF800000> : vector<8xf32>
    %69 = vector.multi_reduction <maximumf>, %68, %cst_31 [1] : vector<8x8xf32> to vector<8xf32>
    %70 = vector.shape_cast %69 : vector<8xf32> to vector<8x1xf32>
    %71 = vector.broadcast %70 : vector<8x1xf32> to vector<8x8xf32>
    %72 = arith.subf %68, %71 : vector<8x8xf32>
    %73 = math.exp %72 : vector<8x8xf32>
    %cst_32 = arith.constant dense<0.000000e+00> : vector<8xf32>
    %74 = vector.multi_reduction <add>, %73, %cst_32 [1] : vector<8x8xf32> to vector<8xf32>
    %75 = vector.shape_cast %74 : vector<8xf32> to vector<8x1xf32>
    %76 = tpu.reciprocal %75 {approx = true} : vector<8x1xf32> -> vector<8x1xf32>
    %77 = vector.broadcast %76 : vector<8x1xf32> to vector<8x8xf32>
    %78 = arith.mulf %73, %77 : vector<8x8xf32>
    %79 = arith.truncf %78 : vector<8x8xf32> to vector<8x8xbf16>
    %cst_33 = arith.constant dense<0.000000e+00> : vector<8x8xf32>
    %80 = tpu.matmul %79, %64, %cst_33 {dimension_numbers = #tpu.dot_dimension_numbers<[1], [0], [0], [1], [0, 0, 1, 1], [], []>} : vector<8x8xbf16>, vector<8x8xbf16>, vector<8x8xf32> -> vector<8x8xf32>
    %c0_34 = arith.constant 0 : index
    %c0_35 = arith.constant 0 : index
    %c24 = arith.constant 24 : index
    %81 = vector.load %arg1[%c0_34, %c0_35, %c24] : memref<1x8x96xf32, #tpu.memory_space<vmem>>, vector<1x8x8xf32>
    %82 = vector.shape_cast %81 : vector<1x8x8xf32> to vector<8x8xf32>
    %83 = arith.truncf %82 : vector<8x8xf32> to vector<8x8xbf16>
    %c0_36 = arith.constant 0 : index
    %c0_37 = arith.constant 0 : index
    %c56 = arith.constant 56 : index
    %84 = vector.load %arg1[%c0_36, %c0_37, %c56] : memref<1x8x96xf32, #tpu.memory_space<vmem>>, vector<1x8x8xf32>
    %85 = vector.shape_cast %84 : vector<1x8x8xf32> to vector<8x8xf32>
    %86 = arith.truncf %85 : vector<8x8xf32> to vector<8x8xbf16>
    %c0_38 = arith.constant 0 : index
    %c0_39 = arith.constant 0 : index
    %c88 = arith.constant 88 : index
    %87 = vector.load %arg1[%c0_38, %c0_39, %c88] : memref<1x8x96xf32, #tpu.memory_space<vmem>>, vector<1x8x8xf32>
    %88 = vector.shape_cast %87 : vector<1x8x8xf32> to vector<8x8xf32>
    %89 = arith.truncf %88 : vector<8x8xf32> to vector<8x8xbf16>
    %cst_40 = arith.constant dense<0.000000e+00> : vector<8x8xf32>
    %90 = tpu.matmul %83, %86, %cst_40 {dimension_numbers = #tpu.dot_dimension_numbers<[1], [1], [0], [0], [0, 0, 1, 0], [], []>} : vector<8x8xbf16>, vector<8x8xbf16>, vector<8x8xf32> -> vector<8x8xf32>
    %cst_41 = arith.constant 0.353553385 : f32
    %91 = vector.broadcast %cst_41 : f32 to vector<8x8xf32>
    %92 = arith.mulf %90, %91 : vector<8x8xf32>
    %93 = arith.addf %92, %5 : vector<8x8xf32>
    %cst_42 = arith.constant dense<0xFF800000> : vector<8xf32>
    %94 = vector.multi_reduction <maximumf>, %93, %cst_42 [1] : vector<8x8xf32> to vector<8xf32>
    %95 = vector.shape_cast %94 : vector<8xf32> to vector<8x1xf32>
    %96 = vector.broadcast %95 : vector<8x1xf32> to vector<8x8xf32>
    %97 = arith.subf %93, %96 : vector<8x8xf32>
    %98 = math.exp %97 : vector<8x8xf32>
    %cst_43 = arith.constant dense<0.000000e+00> : vector<8xf32>
    %99 = vector.multi_reduction <add>, %98, %cst_43 [1] : vector<8x8xf32> to vector<8xf32>
    %100 = vector.shape_cast %99 : vector<8xf32> to vector<8x1xf32>
    %101 = tpu.reciprocal %100 {approx = true} : vector<8x1xf32> -> vector<8x1xf32>
    %102 = vector.broadcast %101 : vector<8x1xf32> to vector<8x8xf32>
    %103 = arith.mulf %98, %102 : vector<8x8xf32>
    %104 = arith.truncf %103 : vector<8x8xf32> to vector<8x8xbf16>
    %cst_44 = arith.constant dense<0.000000e+00> : vector<8x8xf32>
    %105 = tpu.matmul %104, %89, %cst_44 {dimension_numbers = #tpu.dot_dimension_numbers<[1], [0], [0], [1], [0, 0, 1, 1], [], []>} : vector<8x8xbf16>, vector<8x8xbf16>, vector<8x8xf32> -> vector<8x8xf32>
    %106 = tpu.concatenate %30, %55, %80, %105 in 1 : vector<8x8xf32>, vector<8x8xf32>, vector<8x8xf32>, vector<8x8xf32> -> vector<8x32xf32>
    %c0_45 = arith.constant 0 : index
    %c0_46 = arith.constant 0 : index
    %c0_47 = arith.constant 0 : index
    %107 = vector.load %arg2[%c0_45, %c0_46, %c0_47] : memref<1x8x32xf32, #tpu.memory_space<vmem>>, vector<1x8x32xf32>
    %108 = vector.shape_cast %107 : vector<1x8x32xf32> to vector<8x32xf32>
    %109 = vector.shape_cast %106 : vector<8x32xf32> to vector<1x8x32xf32>
    tpu.vector_store %arg2[%c0_45, %c0_46, %c0_47], %109 {strides = array<i32>} : memref<1x8x32xf32, #tpu.memory_space<vmem>>, vector<1x8x32xf32>,
    return
  }
  func.func @transform_0(%arg0: i32) -> (i32, i32, i32) {
    %c0_i32 = arith.constant 0 : i32
    %c0_i32_0 = arith.constant 0 : i32
    %c0_i32_1 = arith.constant 0 : i32
    return %arg0, %c0_i32, %c0_i32_0 : i32, i32, i32
  }
  func.func @transform_1(%arg0: i32) -> (i32, i32, i32) {
    %c0_i32 = arith.constant 0 : i32
    %c0_i32_0 = arith.constant 0 : i32
    %c0_i32_1 = arith.constant 0 : i32
    return %arg0, %c0_i32, %c0_i32_0 : i32, i32, i32
  }
}

module attributes {stable_mosaic.version = 11 : i64} {
  func.func @_linear_add_ln_kernel(%arg0: i32, %arg1: memref<16x32xf32, #tpu.memory_space<vmem>>, %arg2: memref<16x32xf32, #tpu.memory_space<vmem>>, %arg3: memref<32x32xf32, #tpu.memory_space<vmem>>, %arg4: memref<1x32xf32, #tpu.memory_space<vmem>>, %arg5: memref<1x32xf32, #tpu.memory_space<vmem>>, %arg6: memref<1x32xf32, #tpu.memory_space<vmem>>, %arg7: memref<16x32xf32, #tpu.memory_space<vmem>>) attributes {dimension_semantics = [#tpu.dimension_semantics<parallel>], iteration_bounds = array<i64: 1>, scalar_prefetch = 0 : i64, scratch_operands = 0 : i64, tpu.core_type = #tpu.core_type<tc>, window_params = [{transform_indices = @transform_0, window_bounds = array<i64: 16, 32>}, {transform_indices = @transform_1, window_bounds = array<i64: 16, 32>}, {pipeline_mode = #tpu.pipeline_mode<synchronous>, transform_indices = @transform_2, window_bounds = array<i64: 32, 32>}, {pipeline_mode = #tpu.pipeline_mode<synchronous>, transform_indices = @transform_3, window_bounds = array<i64: 1, 32>}, {pipeline_mode = #tpu.pipeline_mode<synchronous>, transform_indices = @transform_4, window_bounds = array<i64: 1, 32>}, {pipeline_mode = #tpu.pipeline_mode<synchronous>, transform_indices = @transform_5, window_bounds = array<i64: 1, 32>}, {transform_indices = @transform_6, window_bounds = array<i64: 16, 32>}]} {
    %c0 = arith.constant 0 : index
    %c0_0 = arith.constant 0 : index
    %0 = vector.load %arg1[%c0, %c0_0] : memref<16x32xf32, #tpu.memory_space<vmem>>, vector<16x32xf32>
    %1 = arith.truncf %0 : vector<16x32xf32> to vector<16x32xbf16>
    %c0_1 = arith.constant 0 : index
    %c0_2 = arith.constant 0 : index
    %2 = vector.load %arg3[%c0_1, %c0_2] : memref<32x32xf32, #tpu.memory_space<vmem>>, vector<32x32xf32>
    %3 = arith.truncf %2 : vector<32x32xf32> to vector<32x32xbf16>
    %cst = arith.constant dense<0.000000e+00> : vector<16x32xf32>
    %4 = tpu.matmul %1, %3, %cst {dimension_numbers = #tpu.dot_dimension_numbers<[1], [0], [0], [1], [0, 0, 1, 1], [], []>} : vector<16x32xbf16>, vector<32x32xbf16>, vector<16x32xf32> -> vector<16x32xf32>
    %c0_3 = arith.constant 0 : index
    %c0_4 = arith.constant 0 : index
    %5 = vector.load %arg4[%c0_3, %c0_4] : memref<1x32xf32, #tpu.memory_space<vmem>>, vector<1x32xf32>
    %6 = vector.broadcast %5 : vector<1x32xf32> to vector<16x32xf32>
    %7 = arith.addf %4, %6 : vector<16x32xf32>
    %c0_5 = arith.constant 0 : index
    %c0_6 = arith.constant 0 : index
    %8 = vector.load %arg2[%c0_5, %c0_6] : memref<16x32xf32, #tpu.memory_space<vmem>>, vector<16x32xf32>
    %9 = arith.addf %7, %8 : vector<16x32xf32>
    %c0_7 = arith.constant 0 : index
    %c0_8 = arith.constant 0 : index
    %10 = vector.load %arg5[%c0_7, %c0_8] : memref<1x32xf32, #tpu.memory_space<vmem>>, vector<1x32xf32>
    %c0_9 = arith.constant 0 : index
    %c0_10 = arith.constant 0 : index
    %11 = vector.load %arg6[%c0_9, %c0_10] : memref<1x32xf32, #tpu.memory_space<vmem>>, vector<1x32xf32>
    %cst_11 = arith.constant dense<0.000000e+00> : vector<16xf32>
    %12 = vector.multi_reduction <add>, %9, %cst_11 [1] : vector<16x32xf32> to vector<16xf32>
    %13 = vector.shape_cast %12 : vector<16xf32> to vector<16x1xf32>
    %cst_12 = arith.constant 3.200000e+01 : f32
    %14 = vector.broadcast %cst_12 : f32 to vector<16x1xf32>
    %15 = arith.divf %13, %14 : vector<16x1xf32>
    %16 = vector.broadcast %15 : vector<16x1xf32> to vector<16x32xf32>
    %17 = arith.subf %9, %16 : vector<16x32xf32>
    %18 = arith.mulf %17, %17 : vector<16x32xf32>
    %cst_13 = arith.constant dense<0.000000e+00> : vector<16xf32>
    %19 = vector.multi_reduction <add>, %18, %cst_13 [1] : vector<16x32xf32> to vector<16xf32>
    %20 = vector.shape_cast %19 : vector<16xf32> to vector<16x1xf32>
    %cst_14 = arith.constant 3.200000e+01 : f32
    %21 = vector.broadcast %cst_14 : f32 to vector<16x1xf32>
    %22 = arith.divf %20, %21 : vector<16x1xf32>
    %23 = vector.broadcast %15 : vector<16x1xf32> to vector<16x32xf32>
    %24 = arith.subf %9, %23 : vector<16x32xf32>
    %cst_15 = arith.constant 9.99999996E-13 : f32
    %25 = vector.broadcast %cst_15 : f32 to vector<16x1xf32>
    %26 = arith.addf %22, %25 : vector<16x1xf32>
    %27 = math.rsqrt %26 : vector<16x1xf32>
    %28 = vector.broadcast %27 : vector<16x1xf32> to vector<16x32xf32>
    %29 = arith.mulf %24, %28 : vector<16x32xf32>
    %30 = vector.broadcast %10 : vector<1x32xf32> to vector<16x32xf32>
    %31 = arith.mulf %29, %30 : vector<16x32xf32>
    %32 = vector.broadcast %11 : vector<1x32xf32> to vector<16x32xf32>
    %33 = arith.addf %31, %32 : vector<16x32xf32>
    %c0_16 = arith.constant 0 : index
    %c0_17 = arith.constant 0 : index
    %34 = vector.load %arg7[%c0_16, %c0_17] : memref<16x32xf32, #tpu.memory_space<vmem>>, vector<16x32xf32>
    tpu.vector_store %arg7[%c0_16, %c0_17], %33 {strides = array<i32>} : memref<16x32xf32, #tpu.memory_space<vmem>>, vector<16x32xf32>,
    return
  }
  func.func @transform_0(%arg0: i32) -> (i32, i32) {
    %c0_i32 = arith.constant 0 : i32
    %c0_i32_0 = arith.constant 0 : i32
    return %arg0, %c0_i32 : i32, i32
  }
  func.func @transform_1(%arg0: i32) -> (i32, i32) {
    %c0_i32 = arith.constant 0 : i32
    %c0_i32_0 = arith.constant 0 : i32
    return %arg0, %c0_i32 : i32, i32
  }
  func.func @transform_2(%arg0: i32) -> (i32, i32) {
    %c0_i32 = arith.constant 0 : i32
    %c0_i32_0 = arith.constant 0 : i32
    %c0_i32_1 = arith.constant 0 : i32
    return %c0_i32, %c0_i32_0 : i32, i32
  }
  func.func @transform_3(%arg0: i32) -> (i32, i32) {
    %c0_i32 = arith.constant 0 : i32
    %c0_i32_0 = arith.constant 0 : i32
    %c0_i32_1 = arith.constant 0 : i32
    return %c0_i32, %c0_i32_0 : i32, i32
  }
  func.func @transform_4(%arg0: i32) -> (i32, i32) {
    %c0_i32 = arith.constant 0 : i32
    %c0_i32_0 = arith.constant 0 : i32
    %c0_i32_1 = arith.constant 0 : i32
    return %c0_i32, %c0_i32_0 : i32, i32
  }
  func.func @transform_5(%arg0: i32) -> (i32, i32) {
    %c0_i32 = arith.constant 0 : i32
    %c0_i32_0 = arith.constant 0 : i32
    %c0_i32_1 = arith.constant 0 : i32
    return %c0_i32, %c0_i32_0 : i32, i32
  }
  func.func @transform_6(%arg0: i32) -> (i32, i32) {
    %c0_i32 = arith.constant 0 : i32
    %c0_i32_0 = arith.constant 0 : i32
    return %arg0, %c0_i32 : i32, i32
  }
}

module attributes {stable_mosaic.version = 11 : i64} {
  func.func @_matmul_bias_kernel(%arg0: i32, %arg1: i32, %arg2: i32, %arg3: memref<16x32xf32, #tpu.memory_space<vmem>>, %arg4: memref<32x32xf32, #tpu.memory_space<vmem>>, %arg5: memref<1x32xf32, #tpu.memory_space<vmem>>, %arg6: memref<16x32xf32, #tpu.memory_space<vmem>>, %arg7: memref<16x32xf32, #tpu.memory_space<vmem>>) attributes {dimension_semantics = [#tpu.dimension_semantics<parallel>, #tpu.dimension_semantics<parallel>, #tpu.dimension_semantics<arbitrary>], iteration_bounds = array<i64: 1, 1, 1>, scalar_prefetch = 0 : i64, scratch_operands = 1 : i64, tpu.core_type = #tpu.core_type<tc>, window_params = [{transform_indices = @transform_0, window_bounds = array<i64: 16, 32>}, {transform_indices = @transform_1, window_bounds = array<i64: 32, 32>}, {transform_indices = @transform_2, window_bounds = array<i64: 1, 32>}, {transform_indices = @transform_3, window_bounds = array<i64: 16, 32>}]} {
    %c0_i32 = arith.constant 0 : i32
    %0 = arith.cmpi eq, %arg2, %c0_i32 : i32
    %1 = arith.extui %0 : i1 to i32
    %c0_i32_0 = arith.constant 0 : i32
    %2 = arith.cmpi ne, %1, %c0_i32_0 : i32
    scf.if %2 {
      %cst_10 = arith.constant 0.000000e+00 : f32
      %14 = vector.broadcast %cst_10 : f32 to vector<16x32xf32>
      %c0_11 = arith.constant 0 : index
      %c0_12 = arith.constant 0 : index
      %15 = vector.load %arg7[%c0_11, %c0_12] : memref<16x32xf32, #tpu.memory_space<vmem>>, vector<16x32xf32>
      tpu.vector_store %arg7[%c0_11, %c0_12], %14 {strides = array<i32>} : memref<16x32xf32, #tpu.memory_space<vmem>>, vector<16x32xf32>,
    } else {
    }
    %c0 = arith.constant 0 : index
    %c0_1 = arith.constant 0 : index
    %3 = vector.load %arg7[%c0, %c0_1] : memref<16x32xf32, #tpu.memory_space<vmem>>, vector<16x32xf32>
    %c0_2 = arith.constant 0 : index
    %c0_3 = arith.constant 0 : index
    %4 = vector.load %arg3[%c0_2, %c0_3] : memref<16x32xf32, #tpu.memory_space<vmem>>, vector<16x32xf32>
    %5 = arith.truncf %4 : vector<16x32xf32> to vector<16x32xbf16>
    %c0_4 = arith.constant 0 : index
    %c0_5 = arith.constant 0 : index
    %6 = vector.load %arg4[%c0_4, %c0_5] : memref<32x32xf32, #tpu.memory_space<vmem>>, vector<32x32xf32>
    %7 = arith.truncf %6 : vector<32x32xf32> to vector<32x32xbf16>
    %cst = arith.constant dense<0.000000e+00> : vector<16x32xf32>
    %8 = tpu.matmul %5, %7, %cst {dimension_numbers = #tpu.dot_dimension_numbers<[1], [0], [0], [1], [0, 0, 1, 1], [], []>} : vector<16x32xbf16>, vector<32x32xbf16>, vector<16x32xf32> -> vector<16x32xf32>
    %9 = arith.addf %3, %8 : vector<16x32xf32>
    %c0_6 = arith.constant 0 : index
    %c0_7 = arith.constant 0 : index
    %10 = vector.load %arg7[%c0_6, %c0_7] : memref<16x32xf32, #tpu.memory_space<vmem>>, vector<16x32xf32>
    tpu.vector_store %arg7[%c0_6, %c0_7], %9 {strides = array<i32>} : memref<16x32xf32, #tpu.memory_space<vmem>>, vector<16x32xf32>,
    %c0_i32_8 = arith.constant 0 : i32
    %11 = arith.cmpi eq, %arg2, %c0_i32_8 : i32
    %12 = arith.extui %11 : i1 to i32
    %c0_i32_9 = arith.constant 0 : i32
    %13 = arith.cmpi ne, %12, %c0_i32_9 : i32
    scf.if %13 {
      %c0_10 = arith.constant 0 : index
      %c0_11 = arith.constant 0 : index
      %14 = vector.load %arg7[%c0_10, %c0_11] : memref<16x32xf32, #tpu.memory_space<vmem>>, vector<16x32xf32>
      %c0_12 = arith.constant 0 : index
      %c0_13 = arith.constant 0 : index
      %15 = vector.load %arg5[%c0_12, %c0_13] : memref<1x32xf32, #tpu.memory_space<vmem>>, vector<1x32xf32>
      %16 = vector.broadcast %15 : vector<1x32xf32> to vector<16x32xf32>
      %17 = arith.addf %14, %16 : vector<16x32xf32>
      %c0_14 = arith.constant 0 : index
      %c0_15 = arith.constant 0 : index
      %18 = vector.load %arg6[%c0_14, %c0_15] : memref<16x32xf32, #tpu.memory_space<vmem>>, vector<16x32xf32>
      tpu.vector_store %arg6[%c0_14, %c0_15], %17 {strides = array<i32>} : memref<16x32xf32, #tpu.memory_space<vmem>>, vector<16x32xf32>,
    } else {
    }
    return
  }
  func.func @transform_0(%arg0: i32, %arg1: i32, %arg2: i32) -> (i32, i32) {
    %c0_i32 = arith.constant 0 : i32
    return %arg0, %arg2 : i32, i32
  }
  func.func @transform_1(%arg0: i32, %arg1: i32, %arg2: i32) -> (i32, i32) {
    %c0_i32 = arith.constant 0 : i32
    return %arg2, %arg1 : i32, i32
  }
  func.func @transform_2(%arg0: i32, %arg1: i32, %arg2: i32) -> (i32, i32) {
    %c0_i32 = arith.constant 0 : i32
    %c0_i32_0 = arith.constant 0 : i32
    return %c0_i32, %arg1 : i32, i32
  }
  func.func @transform_3(%arg0: i32, %arg1: i32, %arg2: i32) -> (i32, i32) {
    %c0_i32 = arith.constant 0 : i32
    return %arg0, %arg1 : i32, i32
  }
}

module attributes {stable_mosaic.version = 11 : i64} {
  func.func @_cross_attn_kernel(%arg0: i32, %arg1: memref<1x8x32xf32, #tpu.memory_space<vmem>>, %arg2: memref<1x8x64xf32, #tpu.memory_space<vmem>>, %arg3: memref<1x8x32xf32, #tpu.memory_space<vmem>>) attributes {dimension_semantics = [#tpu.dimension_semantics<parallel>], iteration_bounds = array<i64: 2>, scalar_prefetch = 0 : i64, scratch_operands = 0 : i64, tpu.core_type = #tpu.core_type<tc>, window_params = [{transform_indices = @transform_0, window_bounds = array<i64: 1, 8, 32>}, {transform_indices = @transform_1, window_bounds = array<i64: 1, 8, 64>}, {transform_indices = @transform_2, window_bounds = array<i64: 1, 8, 32>}]} {
    %c0 = arith.constant 0 : index
    %c0_0 = arith.constant 0 : index
    %c0_1 = arith.constant 0 : index
    %0 = vector.load %arg1[%c0, %c0_0, %c0_1] : memref<1x8x32xf32, #tpu.memory_space<vmem>>, vector<1x8x8xf32>
    %1 = vector.shape_cast %0 : vector<1x8x8xf32> to vector<8x8xf32>
    %2 = arith.truncf %1 : vector<8x8xf32> to vector<8x8xbf16>
    %c0_2 = arith.constant 0 : index
    %c0_3 = arith.constant 0 : index
    %c0_4 = arith.constant 0 : index
    %3 = vector.load %arg2[%c0_2, %c0_3, %c0_4] : memref<1x8x64xf32, #tpu.memory_space<vmem>>, vector<1x8x8xf32>
    %4 = vector.shape_cast %3 : vector<1x8x8xf32> to vector<8x8xf32>
    %5 = arith.truncf %4 : vector<8x8xf32> to vector<8x8xbf16>
    %c0_5 = arith.constant 0 : index
    %c0_6 = arith.constant 0 : index
    %c32 = arith.constant 32 : index
    %6 = vector.load %arg2[%c0_5, %c0_6, %c32] : memref<1x8x64xf32, #tpu.memory_space<vmem>>, vector<1x8x8xf32>
    %7 = vector.shape_cast %6 : vector<1x8x8xf32> to vector<8x8xf32>
    %8 = arith.truncf %7 : vector<8x8xf32> to vector<8x8xbf16>
    %cst = arith.constant dense<0.000000e+00> : vector<8x8xf32>
    %9 = tpu.matmul %2, %5, %cst {dimension_numbers = #tpu.dot_dimension_numbers<[1], [1], [0], [0], [0, 0, 1, 0], [], []>} : vector<8x8xbf16>, vector<8x8xbf16>, vector<8x8xf32> -> vector<8x8xf32>
    %cst_7 = arith.constant 0.353553385 : f32
    %10 = vector.broadcast %cst_7 : f32 to vector<8x8xf32>
    %11 = arith.mulf %9, %10 : vector<8x8xf32>
    %cst_8 = arith.constant dense<0xFF800000> : vector<8xf32>
    %12 = vector.multi_reduction <maximumf>, %11, %cst_8 [1] : vector<8x8xf32> to vector<8xf32>
    %13 = vector.shape_cast %12 : vector<8xf32> to vector<8x1xf32>
    %14 = vector.broadcast %13 : vector<8x1xf32> to vector<8x8xf32>
    %15 = arith.subf %11, %14 : vector<8x8xf32>
    %16 = math.exp %15 : vector<8x8xf32>
    %cst_9 = arith.constant dense<0.000000e+00> : vector<8xf32>
    %17 = vector.multi_reduction <add>, %16, %cst_9 [1] : vector<8x8xf32> to vector<8xf32>
    %18 = vector.shape_cast %17 : vector<8xf32> to vector<8x1xf32>
    %19 = tpu.reciprocal %18 {approx = true} : vector<8x1xf32> -> vector<8x1xf32>
    %20 = vector.broadcast %19 : vector<8x1xf32> to vector<8x8xf32>
    %21 = arith.mulf %16, %20 : vector<8x8xf32>
    %22 = arith.truncf %21 : vector<8x8xf32> to vector<8x8xbf16>
    %cst_10 = arith.constant dense<0.000000e+00> : vector<8x8xf32>
    %23 = tpu.matmul %22, %8, %cst_10 {dimension_numbers = #tpu.dot_dimension_numbers<[1], [0], [0], [1], [0, 0, 1, 1], [], []>} : vector<8x8xbf16>, vector<8x8xbf16>, vector<8x8xf32> -> vector<8x8xf32>
    %c0_11 = arith.constant 0 : index
    %c0_12 = arith.constant 0 : index
    %c8 = arith.constant 8 : index
    %24 = vector.load %arg1[%c0_11, %c0_12, %c8] : memref<1x8x32xf32, #tpu.memory_space<vmem>>, vector<1x8x8xf32>
    %25 = vector.shape_cast %24 : vector<1x8x8xf32> to vector<8x8xf32>
    %26 = arith.truncf %25 : vector<8x8xf32> to vector<8x8xbf16>
    %c0_13 = arith.constant 0 : index
    %c0_14 = arith.constant 0 : index
    %c8_15 = arith.constant 8 : index
    %27 = vector.load %arg2[%c0_13, %c0_14, %c8_15] : memref<1x8x64xf32, #tpu.memory_space<vmem>>, vector<1x8x8xf32>
    %28 = vector.shape_cast %27 : vector<1x8x8xf32> to vector<8x8xf32>
    %29 = arith.truncf %28 : vector<8x8xf32> to vector<8x8xbf16>
    %c0_16 = arith.constant 0 : index
    %c0_17 = arith.constant 0 : index
    %c40 = arith.constant 40 : index
    %30 = vector.load %arg2[%c0_16, %c0_17, %c40] : memref<1x8x64xf32, #tpu.memory_space<vmem>>, vector<1x8x8xf32>
    %31 = vector.shape_cast %30 : vector<1x8x8xf32> to vector<8x8xf32>
    %32 = arith.truncf %31 : vector<8x8xf32> to vector<8x8xbf16>
    %cst_18 = arith.constant dense<0.000000e+00> : vector<8x8xf32>
    %33 = tpu.matmul %26, %29, %cst_18 {dimension_numbers = #tpu.dot_dimension_numbers<[1], [1], [0], [0], [0, 0, 1, 0], [], []>} : vector<8x8xbf16>, vector<8x8xbf16>, vector<8x8xf32> -> vector<8x8xf32>
    %cst_19 = arith.constant 0.353553385 : f32
    %34 = vector.broadcast %cst_19 : f32 to vector<8x8xf32>
    %35 = arith.mulf %33, %34 : vector<8x8xf32>
    %cst_20 = arith.constant dense<0xFF800000> : vector<8xf32>
    %36 = vector.multi_reduction <maximumf>, %35, %cst_20 [1] : vector<8x8xf32> to vector<8xf32>
    %37 = vector.shape_cast %36 : vector<8xf32> to vector<8x1xf32>
    %38 = vector.broadcast %37 : vector<8x1xf32> to vector<8x8xf32>
    %39 = arith.subf %35, %38 : vector<8x8xf32>
    %40 = math.exp %39 : vector<8x8xf32>
    %cst_21 = arith.constant dense<0.000000e+00> : vector<8xf32>
    %41 = vector.multi_reduction <add>, %40, %cst_21 [1] : vector<8x8xf32> to vector<8xf32>
    %42 = vector.shape_cast %41 : vector<8xf32> to vector<8x1xf32>
    %43 = tpu.reciprocal %42 {approx = true} : vector<8x1xf32> -> vector<8x1xf32>
    %44 = vector.broadcast %43 : vector<8x1xf32> to vector<8x8xf32>
    %45 = arith.mulf %40, %44 : vector<8x8xf32>
    %46 = arith.truncf %45 : vector<8x8xf32> to vector<8x8xbf16>
    %cst_22 = arith.constant dense<0.000000e+00> : vector<8x8xf32>
    %47 = tpu.matmul %46, %32, %cst_22 {dimension_numbers = #tpu.dot_dimension_numbers<[1], [0], [0], [1], [0, 0, 1, 1], [], []>} : vector<8x8xbf16>, vector<8x8xbf16>, vector<8x8xf32> -> vector<8x8xf32>
    %c0_23 = arith.constant 0 : index
    %c0_24 = arith.constant 0 : index
    %c16 = arith.constant 16 : index
    %48 = vector.load %arg1[%c0_23, %c0_24, %c16] : memref<1x8x32xf32, #tpu.memory_space<vmem>>, vector<1x8x8xf32>
    %49 = vector.shape_cast %48 : vector<1x8x8xf32> to vector<8x8xf32>
    %50 = arith.truncf %49 : vector<8x8xf32> to vector<8x8xbf16>
    %c0_25 = arith.constant 0 : index
    %c0_26 = arith.constant 0 : index
    %c16_27 = arith.constant 16 : index
    %51 = vector.load %arg2[%c0_25, %c0_26, %c16_27] : memref<1x8x64xf32, #tpu.memory_space<vmem>>, vector<1x8x8xf32>
    %52 = vector.shape_cast %51 : vector<1x8x8xf32> to vector<8x8xf32>
    %53 = arith.truncf %52 : vector<8x8xf32> to vector<8x8xbf16>
    %c0_28 = arith.constant 0 : index
    %c0_29 = arith.constant 0 : index
    %c48 = arith.constant 48 : index
    %54 = vector.load %arg2[%c0_28, %c0_29, %c48] : memref<1x8x64xf32, #tpu.memory_space<vmem>>, vector<1x8x8xf32>
    %55 = vector.shape_cast %54 : vector<1x8x8xf32> to vector<8x8xf32>
    %56 = arith.truncf %55 : vector<8x8xf32> to vector<8x8xbf16>
    %cst_30 = arith.constant dense<0.000000e+00> : vector<8x8xf32>
    %57 = tpu.matmul %50, %53, %cst_30 {dimension_numbers = #tpu.dot_dimension_numbers<[1], [1], [0], [0], [0, 0, 1, 0], [], []>} : vector<8x8xbf16>, vector<8x8xbf16>, vector<8x8xf32> -> vector<8x8xf32>
    %cst_31 = arith.constant 0.353553385 : f32
    %58 = vector.broadcast %cst_31 : f32 to vector<8x8xf32>
    %59 = arith.mulf %57, %58 : vector<8x8xf32>
    %cst_32 = arith.constant dense<0xFF800000> : vector<8xf32>
    %60 = vector.multi_reduction <maximumf>, %59, %cst_32 [1] : vector<8x8xf32> to vector<8xf32>
    %61 = vector.shape_cast %60 : vector<8xf32> to vector<8x1xf32>
    %62 = vector.broadcast %61 : vector<8x1xf32> to vector<8x8xf32>
    %63 = arith.subf %59, %62 : vector<8x8xf32>
    %64 = math.exp %63 : vector<8x8xf32>
    %cst_33 = arith.constant dense<0.000000e+00> : vector<8xf32>
    %65 = vector.multi_reduction <add>, %64, %cst_33 [1] : vector<8x8xf32> to vector<8xf32>
    %66 = vector.shape_cast %65 : vector<8xf32> to vector<8x1xf32>
    %67 = tpu.reciprocal %66 {approx = true} : vector<8x1xf32> -> vector<8x1xf32>
    %68 = vector.broadcast %67 : vector<8x1xf32> to vector<8x8xf32>
    %69 = arith.mulf %64, %68 : vector<8x8xf32>
    %70 = arith.truncf %69 : vector<8x8xf32> to vector<8x8xbf16>
    %cst_34 = arith.constant dense<0.000000e+00> : vector<8x8xf32>
    %71 = tpu.matmul %70, %56, %cst_34 {dimension_numbers = #tpu.dot_dimension_numbers<[1], [0], [0], [1], [0, 0, 1, 1], [], []>} : vector<8x8xbf16>, vector<8x8xbf16>, vector<8x8xf32> -> vector<8x8xf32>
    %c0_35 = arith.constant 0 : index
    %c0_36 = arith.constant 0 : index
    %c24 = arith.constant 24 : index
    %72 = vector.load %arg1[%c0_35, %c0_36, %c24] : memref<1x8x32xf32, #tpu.memory_space<vmem>>, vector<1x8x8xf32>
    %73 = vector.shape_cast %72 : vector<1x8x8xf32> to vector<8x8xf32>
    %74 = arith.truncf %73 : vector<8x8xf32> to vector<8x8xbf16>
    %c0_37 = arith.constant 0 : index
    %c0_38 = arith.constant 0 : index
    %c24_39 = arith.constant 24 : index
    %75 = vector.load %arg2[%c0_37, %c0_38, %c24_39] : memref<1x8x64xf32, #tpu.memory_space<vmem>>, vector<1x8x8xf32>
    %76 = vector.shape_cast %75 : vector<1x8x8xf32> to vector<8x8xf32>
    %77 = arith.truncf %76 : vector<8x8xf32> to vector<8x8xbf16>
    %c0_40 = arith.constant 0 : index
    %c0_41 = arith.constant 0 : index
    %c56 = arith.constant 56 : index
    %78 = vector.load %arg2[%c0_40, %c0_41, %c56] : memref<1x8x64xf32, #tpu.memory_space<vmem>>, vector<1x8x8xf32>
    %79 = vector.shape_cast %78 : vector<1x8x8xf32> to vector<8x8xf32>
    %80 = arith.truncf %79 : vector<8x8xf32> to vector<8x8xbf16>
    %cst_42 = arith.constant dense<0.000000e+00> : vector<8x8xf32>
    %81 = tpu.matmul %74, %77, %cst_42 {dimension_numbers = #tpu.dot_dimension_numbers<[1], [1], [0], [0], [0, 0, 1, 0], [], []>} : vector<8x8xbf16>, vector<8x8xbf16>, vector<8x8xf32> -> vector<8x8xf32>
    %cst_43 = arith.constant 0.353553385 : f32
    %82 = vector.broadcast %cst_43 : f32 to vector<8x8xf32>
    %83 = arith.mulf %81, %82 : vector<8x8xf32>
    %cst_44 = arith.constant dense<0xFF800000> : vector<8xf32>
    %84 = vector.multi_reduction <maximumf>, %83, %cst_44 [1] : vector<8x8xf32> to vector<8xf32>
    %85 = vector.shape_cast %84 : vector<8xf32> to vector<8x1xf32>
    %86 = vector.broadcast %85 : vector<8x1xf32> to vector<8x8xf32>
    %87 = arith.subf %83, %86 : vector<8x8xf32>
    %88 = math.exp %87 : vector<8x8xf32>
    %cst_45 = arith.constant dense<0.000000e+00> : vector<8xf32>
    %89 = vector.multi_reduction <add>, %88, %cst_45 [1] : vector<8x8xf32> to vector<8xf32>
    %90 = vector.shape_cast %89 : vector<8xf32> to vector<8x1xf32>
    %91 = tpu.reciprocal %90 {approx = true} : vector<8x1xf32> -> vector<8x1xf32>
    %92 = vector.broadcast %91 : vector<8x1xf32> to vector<8x8xf32>
    %93 = arith.mulf %88, %92 : vector<8x8xf32>
    %94 = arith.truncf %93 : vector<8x8xf32> to vector<8x8xbf16>
    %cst_46 = arith.constant dense<0.000000e+00> : vector<8x8xf32>
    %95 = tpu.matmul %94, %80, %cst_46 {dimension_numbers = #tpu.dot_dimension_numbers<[1], [0], [0], [1], [0, 0, 1, 1], [], []>} : vector<8x8xbf16>, vector<8x8xbf16>, vector<8x8xf32> -> vector<8x8xf32>
    %96 = tpu.concatenate %23, %47, %71, %95 in 1 : vector<8x8xf32>, vector<8x8xf32>, vector<8x8xf32>, vector<8x8xf32> -> vector<8x32xf32>
    %c0_47 = arith.constant 0 : index
    %c0_48 = arith.constant 0 : index
    %c0_49 = arith.constant 0 : index
    %97 = vector.load %arg3[%c0_47, %c0_48, %c0_49] : memref<1x8x32xf32, #tpu.memory_space<vmem>>, vector<1x8x32xf32>
    %98 = vector.shape_cast %97 : vector<1x8x32xf32> to vector<8x32xf32>
    %99 = vector.shape_cast %96 : vector<8x32xf32> to vector<1x8x32xf32>
    tpu.vector_store %arg3[%c0_47, %c0_48, %c0_49], %99 {strides = array<i32>} : memref<1x8x32xf32, #tpu.memory_space<vmem>>, vector<1x8x32xf32>,
    return
  }
  func.func @transform_0(%arg0: i32) -> (i32, i32, i32) {
    %c0_i32 = arith.constant 0 : i32
    %c0_i32_0 = arith.constant 0 : i32
    %c0_i32_1 = arith.constant 0 : i32
    return %arg0, %c0_i32, %c0_i32_0 : i32, i32, i32
  }
  func.func @transform_1(%arg0: i32) -> (i32, i32, i32) {
    %c0_i32 = arith.constant 0 : i32
    %c0_i32_0 = arith.constant 0 : i32
    %c0_i32_1 = arith.constant 0 : i32
    return %arg0, %c0_i32, %c0_i32_0 : i32, i32, i32
  }
  func.func @transform_2(%arg0: i32) -> (i32, i32, i32) {
    %c0_i32 = arith.constant 0 : i32
    %c0_i32_0 = arith.constant 0 : i32
    %c0_i32_1 = arith.constant 0 : i32
    return %arg0, %c0_i32, %c0_i32_0 : i32, i32, i32
  }
}

module attributes {stable_mosaic.version = 11 : i64} {
  func.func @_ffn_ln_kernel(%arg0: i32, %arg1: memref<16x32xf32, #tpu.memory_space<vmem>>, %arg2: memref<32x64xf32, #tpu.memory_space<vmem>>, %arg3: memref<1x64xf32, #tpu.memory_space<vmem>>, %arg4: memref<64x32xf32, #tpu.memory_space<vmem>>, %arg5: memref<1x32xf32, #tpu.memory_space<vmem>>, %arg6: memref<1x32xf32, #tpu.memory_space<vmem>>, %arg7: memref<1x32xf32, #tpu.memory_space<vmem>>, %arg8: memref<16x32xf32, #tpu.memory_space<vmem>>) attributes {dimension_semantics = [#tpu.dimension_semantics<parallel>], iteration_bounds = array<i64: 1>, scalar_prefetch = 0 : i64, scratch_operands = 0 : i64, tpu.core_type = #tpu.core_type<tc>, window_params = [{transform_indices = @transform_0, window_bounds = array<i64: 16, 32>}, {pipeline_mode = #tpu.pipeline_mode<synchronous>, transform_indices = @transform_1, window_bounds = array<i64: 32, 64>}, {pipeline_mode = #tpu.pipeline_mode<synchronous>, transform_indices = @transform_2, window_bounds = array<i64: 1, 64>}, {pipeline_mode = #tpu.pipeline_mode<synchronous>, transform_indices = @transform_3, window_bounds = array<i64: 64, 32>}, {pipeline_mode = #tpu.pipeline_mode<synchronous>, transform_indices = @transform_4, window_bounds = array<i64: 1, 32>}, {pipeline_mode = #tpu.pipeline_mode<synchronous>, transform_indices = @transform_5, window_bounds = array<i64: 1, 32>}, {pipeline_mode = #tpu.pipeline_mode<synchronous>, transform_indices = @transform_6, window_bounds = array<i64: 1, 32>}, {transform_indices = @transform_7, window_bounds = array<i64: 16, 32>}]} {
    %c0 = arith.constant 0 : index
    %c0_0 = arith.constant 0 : index
    %0 = vector.load %arg1[%c0, %c0_0] : memref<16x32xf32, #tpu.memory_space<vmem>>, vector<16x32xf32>
    %1 = arith.truncf %0 : vector<16x32xf32> to vector<16x32xbf16>
    %c0_1 = arith.constant 0 : index
    %c0_2 = arith.constant 0 : index
    %2 = vector.load %arg2[%c0_1, %c0_2] : memref<32x64xf32, #tpu.memory_space<vmem>>, vector<32x64xf32>
    %3 = arith.truncf %2 : vector<32x64xf32> to vector<32x64xbf16>
    %cst = arith.constant dense<0.000000e+00> : vector<16x64xf32>
    %4 = tpu.matmul %1, %3, %cst {dimension_numbers = #tpu.dot_dimension_numbers<[1], [0], [0], [1], [0, 0, 1, 1], [], []>} : vector<16x32xbf16>, vector<32x64xbf16>, vector<16x64xf32> -> vector<16x64xf32>
    %c0_3 = arith.constant 0 : index
    %c0_4 = arith.constant 0 : index
    %5 = vector.load %arg3[%c0_3, %c0_4] : memref<1x64xf32, #tpu.memory_space<vmem>>, vector<1x64xf32>
    %6 = vector.broadcast %5 : vector<1x64xf32> to vector<16x64xf32>
    %7 = arith.addf %4, %6 : vector<16x64xf32>
    %8 = arith.mulf %7, %7 : vector<16x64xf32>
    %9 = arith.mulf %7, %8 : vector<16x64xf32>
    %cst_5 = arith.constant 4.471500e-02 : f32
    %10 = vector.broadcast %cst_5 : f32 to vector<16x64xf32>
    %11 = arith.mulf %10, %9 : vector<16x64xf32>
    %12 = arith.addf %7, %11 : vector<16x64xf32>
    %cst_6 = arith.constant 0.797884583 : f32
    %13 = vector.broadcast %cst_6 : f32 to vector<16x64xf32>
    %14 = arith.mulf %13, %12 : vector<16x64xf32>
    %15 = math.tanh %14 : vector<16x64xf32>
    %cst_7 = arith.constant 1.000000e+00 : f32
    %16 = vector.broadcast %cst_7 : f32 to vector<16x64xf32>
    %17 = arith.addf %16, %15 : vector<16x64xf32>
    %cst_8 = arith.constant 5.000000e-01 : f32
    %18 = vector.broadcast %cst_8 : f32 to vector<16x64xf32>
    %19 = arith.mulf %18, %17 : vector<16x64xf32>
    %20 = arith.mulf %7, %19 : vector<16x64xf32>
    %21 = arith.truncf %20 : vector<16x64xf32> to vector<16x64xbf16>
    %c0_9 = arith.constant 0 : index
    %c0_10 = arith.constant 0 : index
    %22 = vector.load %arg4[%c0_9, %c0_10] : memref<64x32xf32, #tpu.memory_space<vmem>>, vector<64x32xf32>
    %23 = arith.truncf %22 : vector<64x32xf32> to vector<64x32xbf16>
    %cst_11 = arith.constant dense<0.000000e+00> : vector<16x32xf32>
    %24 = tpu.matmul %21, %23, %cst_11 {dimension_numbers = #tpu.dot_dimension_numbers<[1], [0], [0], [1], [0, 0, 1, 1], [], []>} : vector<16x64xbf16>, vector<64x32xbf16>, vector<16x32xf32> -> vector<16x32xf32>
    %c0_12 = arith.constant 0 : index
    %c0_13 = arith.constant 0 : index
    %25 = vector.load %arg5[%c0_12, %c0_13] : memref<1x32xf32, #tpu.memory_space<vmem>>, vector<1x32xf32>
    %26 = vector.broadcast %25 : vector<1x32xf32> to vector<16x32xf32>
    %27 = arith.addf %24, %26 : vector<16x32xf32>
    %28 = arith.addf %27, %0 : vector<16x32xf32>
    %c0_14 = arith.constant 0 : index
    %c0_15 = arith.constant 0 : index
    %29 = vector.load %arg6[%c0_14, %c0_15] : memref<1x32xf32, #tpu.memory_space<vmem>>, vector<1x32xf32>
    %c0_16 = arith.constant 0 : index
    %c0_17 = arith.constant 0 : index
    %30 = vector.load %arg7[%c0_16, %c0_17] : memref<1x32xf32, #tpu.memory_space<vmem>>, vector<1x32xf32>
    %cst_18 = arith.constant dense<0.000000e+00> : vector<16xf32>
    %31 = vector.multi_reduction <add>, %28, %cst_18 [1] : vector<16x32xf32> to vector<16xf32>
    %32 = vector.shape_cast %31 : vector<16xf32> to vector<16x1xf32>
    %cst_19 = arith.constant 3.200000e+01 : f32
    %33 = vector.broadcast %cst_19 : f32 to vector<16x1xf32>
    %34 = arith.divf %32, %33 : vector<16x1xf32>
    %35 = vector.broadcast %34 : vector<16x1xf32> to vector<16x32xf32>
    %36 = arith.subf %28, %35 : vector<16x32xf32>
    %37 = arith.mulf %36, %36 : vector<16x32xf32>
    %cst_20 = arith.constant dense<0.000000e+00> : vector<16xf32>
    %38 = vector.multi_reduction <add>, %37, %cst_20 [1] : vector<16x32xf32> to vector<16xf32>
    %39 = vector.shape_cast %38 : vector<16xf32> to vector<16x1xf32>
    %cst_21 = arith.constant 3.200000e+01 : f32
    %40 = vector.broadcast %cst_21 : f32 to vector<16x1xf32>
    %41 = arith.divf %39, %40 : vector<16x1xf32>
    %42 = vector.broadcast %34 : vector<16x1xf32> to vector<16x32xf32>
    %43 = arith.subf %28, %42 : vector<16x32xf32>
    %cst_22 = arith.constant 9.99999996E-13 : f32
    %44 = vector.broadcast %cst_22 : f32 to vector<16x1xf32>
    %45 = arith.addf %41, %44 : vector<16x1xf32>
    %46 = math.rsqrt %45 : vector<16x1xf32>
    %47 = vector.broadcast %46 : vector<16x1xf32> to vector<16x32xf32>
    %48 = arith.mulf %43, %47 : vector<16x32xf32>
    %49 = vector.broadcast %29 : vector<1x32xf32> to vector<16x32xf32>
    %50 = arith.mulf %48, %49 : vector<16x32xf32>
    %51 = vector.broadcast %30 : vector<1x32xf32> to vector<16x32xf32>
    %52 = arith.addf %50, %51 : vector<16x32xf32>
    %c0_23 = arith.constant 0 : index
    %c0_24 = arith.constant 0 : index
    %53 = vector.load %arg8[%c0_23, %c0_24] : memref<16x32xf32, #tpu.memory_space<vmem>>, vector<16x32xf32>
    tpu.vector_store %arg8[%c0_23, %c0_24], %52 {strides = array<i32>} : memref<16x32xf32, #tpu.memory_space<vmem>>, vector<16x32xf32>,
    return
  }
  func.func @transform_0(%arg0: i32) -> (i32, i32) {
    %c0_i32 = arith.constant 0 : i32
    %c0_i32_0 = arith.constant 0 : i32
    return %arg0, %c0_i32 : i32, i32
  }
  func.func @transform_1(%arg0: i32) -> (i32, i32) {
    %c0_i32 = arith.constant 0 : i32
    %c0_i32_0 = arith.constant 0 : i32
    %c0_i32_1 = arith.constant 0 : i32
    return %c0_i32, %c0_i32_0 : i32, i32
  }
  func.func @transform_2(%arg0: i32) -> (i32, i32) {
    %c0_i32 = arith.constant 0 : i32
    %c0_i32_0 = arith.constant 0 : i32
    %c0_i32_1 = arith.constant 0 : i32
    return %c0_i32, %c0_i32_0 : i32, i32
  }
  func.func @transform_3(%arg0: i32) -> (i32, i32) {
    %c0_i32 = arith.constant 0 : i32
    %c0_i32_0 = arith.constant 0 : i32
    %c0_i32_1 = arith.constant 0 : i32
    return %c0_i32, %c0_i32_0 : i32, i32
  }
  func.func @transform_4(%arg0: i32) -> (i32, i32) {
    %c0_i32 = arith.constant 0 : i32
    %c0_i32_0 = arith.constant 0 : i32
    %c0_i32_1 = arith.constant 0 : i32
    return %c0_i32, %c0_i32_0 : i32, i32
  }
  func.func @transform_5(%arg0: i32) -> (i32, i32) {
    %c0_i32 = arith.constant 0 : i32
    %c0_i32_0 = arith.constant 0 : i32
    %c0_i32_1 = arith.constant 0 : i32
    return %c0_i32, %c0_i32_0 : i32, i32
  }
  func.func @transform_6(%arg0: i32) -> (i32, i32) {
    %c0_i32 = arith.constant 0 : i32
    %c0_i32_0 = arith.constant 0 : i32
    %c0_i32_1 = arith.constant 0 : i32
    return %c0_i32, %c0_i32_0 : i32, i32
  }
  func.func @transform_7(%arg0: i32) -> (i32, i32) {
    %c0_i32 = arith.constant 0 : i32
    %c0_i32_0 = arith.constant 0 : i32
    return %arg0, %c0_i32 : i32, i32
  }
}

</mosaic_0001>

<llo_original>
// kernel: encoder_decoder_forward.49
$region0: #{encoder_decoder_forward.49}
  #allocation0 [shape = 'u32[]', space=smem, size = 0x4, offset = 0x4, fixed_abs, tag = 'smem constant byte address 0x4 - core index']
  #allocation1 [shape = 'u32[144,128]{1,0:T(1,128)}', space=vmem, size = 0x12000, scoped, tag = 'internal scratch']
  #allocation2 [shape = 'f32[16,64]{1,0:T(8,128)}', space=vmem, size = 0x2000, scoped, tag = 'scratch operand']
  %s0 = inlined_call_operand.hbm [shape: f32[16,32], index: 0, kind: input, shape index: {}]
  %s1 = inlined_call_operand.hbm [shape: f32[32,64], index: 1, kind: input, shape index: {}]
  %s2 = inlined_call_operand.hbm [shape: f32[1,64], index: 2, kind: input, shape index: {}]
  %s3 = inlined_call_operand.hbm [shape: f32[16,64], index: 3, kind: output, shape index: {}]
  %s4 = sld [smem:[#allocation0]]
  $region42: #{encoder_decoder_forward.49} parent=0
    _
  %s6 = ssub.s32 1, %s4
  %s7 = scalar_select 0, %s6, %s4
  $region1: #{encoder_decoder_forward.49} parent=0
    #allocation3 [shape = 'u8[8192]{0}', space=vmem, size = 0x2000, scoped, tag = 'input window, operand 0, single buffered']
    #allocation4 [shape = 's32[1]{0}', space=sflag, size = 0x4, scoped, tag = 'scoped memory for encoder_decoder_forward.49']
    #allocation5 [shape = 's32[1]{0}', space=sflag, size = 0x4, scoped, tag = 'scoped memory for encoder_decoder_forward.49']
    #allocation6 [shape = 'u8[16384]{0}', space=vmem, size = 0x4000, scoped, tag = 'input window, operand 1, single buffered']
    #allocation7 [shape = 's32[1]{0}', space=sflag, size = 0x4, scoped, tag = 'scoped memory for encoder_decoder_forward.49']
    #allocation8 [shape = 'u8[512]{0}', space=vmem, size = 0x400, scoped, tag = 'input window, operand 2, single buffered']
    #allocation9 [shape = 'u8[8192]{0}', space=vmem, size = 0x2000, scoped, tag = 'output window, operand 0, single buffered']
    %8 = vsyncpa [#allocation4], 0
    %9 = vsyncpa [#allocation7], 0
    %10 = vsyncpa [#allocation5], 0
    // Predicated region
    $region2: #{encoder_decoder_forward.49} parent=1 // pred_check
      _
    $region3: #{encoder_decoder_forward.49} parent=1 // pred_check_branch
      %12 = sbr.rel (0) target = $region5
    $region4: #{encoder_decoder_forward.49} parent=1 // pred_region
      %s14 = ssub.s32 256, 256
      %15 = vsyncadd [#allocation4], %s14
      %s16 = sshll.u32 [#allocation3], 4
      %s17 = int_to_ptr.vmem [resolvable:$true] %s16
      %22 = dma.hbm_to_vmem [thread:$0]  %s0, 256, %s17, [#allocation4], 128, 128, 8
    $region5: #{encoder_decoder_forward.49} parent=1 // pred_fallthru
      _
    // Predicated region
    $region6: #{encoder_decoder_forward.49} parent=1 // pred_check
      _
    $region7: #{encoder_decoder_forward.49} parent=1 // pred_check_branch
      %24 = sbr.rel (0) target = $region9
    $region8: #{encoder_decoder_forward.49} parent=1 // pred_region
      %s26 = ssub.s32 512, 512
      %27 = vsyncadd [#allocation7], %s26
      %s28 = sshll.u32 [#allocation6], 4
      %s29 = int_to_ptr.vmem [resolvable:$true] %s28
      %34 = dma.hbm_to_vmem [thread:$0]  %s1, 512, %s29, [#allocation7], 128, 128, 8
    $region9: #{encoder_decoder_forward.49} parent=1 // pred_fallthru
      _
    // Predicated region
    $region10: #{encoder_decoder_forward.49} parent=1 // pred_check
      _
    $region11: #{encoder_decoder_forward.49} parent=1 // pred_check_branch
      %36 = sbr.rel (0) target = $region13
    $region12: #{encoder_decoder_forward.49} parent=1 // pred_region
      %s38 = ssub.s32 16, 16
      %39 = vsyncadd [#allocation7], %s38
      %s41 = sshll.u32 [#allocation8], 4
      %s42 = int_to_ptr.vmem [resolvable:$true] %s41
      %44 = dma.hbm_to_vmem [thread:$0]  %s2, 16, %s42, [#allocation7]
    $region13: #{encoder_decoder_forward.49} parent=1 // pred_fallthru
      _
    // Predicated region
    $region14: #{encoder_decoder_forward.49} parent=1 // pred_check
      _
    $region15: #{encoder_decoder_forward.49} parent=1 // pred_check_branch
      %46 = sbr.rel (0) target = $region17
    $region16: #{encoder_decoder_forward.49} parent=1 // pred_region
      %47 = dma.done [#allocation4], 256
    $region17: #{encoder_decoder_forward.49} parent=1 // pred_fallthru
      _
    // Predicated region
    $region18: #{encoder_decoder_forward.49} parent=1 // pred_check
      _
    $region19: #{encoder_decoder_forward.49} parent=1 // pred_check_branch
      %49 = sbr.rel (0) target = $region21
    $region20: #{encoder_decoder_forward.49} parent=1 // pred_region
      %50 = dma.done [#allocation7], 512
    $region21: #{encoder_decoder_forward.49} parent=1 // pred_fallthru
      _
    // Predicated region
    $region22: #{encoder_decoder_forward.49} parent=1 // pred_check
      _
    $region23: #{encoder_decoder_forward.49} parent=1 // pred_check_branch
      %52 = sbr.rel (0) target = $region25
    $region24: #{encoder_decoder_forward.49} parent=1 // pred_region
      %53 = dma.done [#allocation7], 16
    $region25: #{encoder_decoder_forward.49} parent=1 // pred_fallthru
      _
    %p55 = scmp.eq.s32.totalorder 0, 0
    // Predicated region
    $region26: #{encoder_decoder_forward.49} parent=1 // pred_check
      %p56 = pneg %p55
    $region27: #{encoder_decoder_forward.49} parent=1 // pred_check_branch
      %58 = sbr.rel (%p56) target = $region29
    $region28: #{encoder_decoder_forward.49} parent=1 // pred_region
      %vm59 = vcmask 523264
      %60 = vst.msk [vmem:[#allocation2] sm:$0xff] %vm59, 0.0
      %61 = vst.msk [vmem:[#allocation2 + $0x8] sm:$0xff] %vm59, 0.0
    $region29: #{encoder_decoder_forward.49} parent=1 // pred_fallthru
      _
    %v62 = vld [vmem:[#allocation2] sm:$0xff]
    %v63 = vld [vmem:[#allocation2 + $0x8] sm:$0xff]
    %v64 = vld [vmem:[#allocation3] sm:$0xff]
    %v65 = vld [vmem:[#allocation3 + $0x8] sm:$0xff]
    %v66 = vpack.c.bf16 %v65, %v64
    %v67 = vld [vmem:[#allocation6] sm:$0xff]
    %v68 = vld [vmem:[#allocation6 + $0x8] sm:$0xff]
    %v69 = vld [vmem:[#allocation6 + $0x10] sm:$0xff]
    %v70 = vld [vmem:[#allocation6 + $0x18] sm:$0xff]
    %v71 = vpack.c.bf16 %v68, %v67
    %v72 = vpack.c.bf16 %v70, %v69
    %vm73 = vcmask 261120
    %v75 = vsel %vm73, %v66, 0
    %77 = vmatprep.subr.bf16.mxu0 0
    %78 = vmatpush1.bf16.msra.mxu0 %v71
    %79 = vmatprep.subr.bf16.mxu0 0
    %80 = vmatpush1.bf16.msra.mxu0 %v72
    %81 = vmatprep.subr.bf16.mxu0 0
    %82 = vmatpush1.bf16.msra.mxu0 0
    %83 = vmatprep.subr.bf16.mxu0 0
    %84 = vmatpush1.bf16.msra.mxu0 0
    %85 = vmatprep.subr.bf16.mxu0 0
    %86 = vmatpush1.bf16.msra.mxu0 0
    %87 = vmatprep.subr.bf16.mxu0 0
    %88 = vmatpush1.bf16.msra.mxu0 0
    %89 = vmatprep.subr.bf16.mxu0 0
    %90 = vmatpush1.bf16.msra.mxu0 0
    %91 = vmatprep.subr.bf16.mxu0 0
    %92 = vmatpush1.bf16.msra.mxu0 0
    %93 = vmatprep.subr.bf16.mxu0 0
    %94 = vmatpush1.bf16.msra.mxu0 0
    %95 = vmatprep.subr.bf16.mxu0 0
    %96 = vmatpush1.bf16.msra.mxu0 0
    %97 = vmatprep.subr.bf16.mxu0 0
    %98 = vmatpush1.bf16.msra.mxu0 0
    %99 = vmatprep.subr.bf16.mxu0 0
    %100 = vmatpush1.bf16.msra.mxu0 0
    %101 = vmatprep.subr.bf16.mxu0 0
    %102 = vmatpush1.bf16.msra.mxu0 0
    %103 = vmatprep.subr.bf16.mxu0 0
    %104 = vmatpush1.bf16.msra.mxu0 0
    %105 = vmatprep.subr.bf16.mxu0 0
    %106 = vmatpush1.bf16.msra.mxu0 0
    %107 = vmatprep.subr.bf16.mxu0 0
    %108 = vmatpush1.bf16.msra.mxu0 0
    %109 = vmatprep.mubr.bf16.mxu0 0
    %110 = vmatmul.mubr.bf16.gmra.mrb[0].mxu0 %v75
    %v111 = vpop.f32.mrb[0].mxu0
    %v112 = vadd.f32 0.0, %v111
    %v113 = vpop.f32.mrb[0].mxu0
    %v114 = vpop.f32.mrb[0].mxu0
    %v115 = vadd.f32 0.0, %v114
    %v116 = vpop.f32.mrb[0].mxu0
    %117 = vdwg.mxu0
    %v118 = vadd.f32 %v62, %v112
    %v119 = vadd.f32 %v63, %v115
    %vm120 = vcmask 523264
    %121 = vst.msk [vmem:[#allocation2] sm:$0xff] %vm120, %v118
    %122 = vst.msk [vmem:[#allocation2 + $0x8] sm:$0xff] %vm120, %v119
    // Predicated region
    $region30: #{encoder_decoder_forward.49} parent=1 // pred_check
      %p123 = pneg %p55
    $region31: #{encoder_decoder_forward.49} parent=1 // pred_check_branch
      %125 = sbr.rel (%p123) target = $region33
    $region32: #{encoder_decoder_forward.49} parent=1 // pred_region
      %v126 = vld [vmem:[#allocation2] sm:$0xff]
      %v127 = vld [vmem:[#allocation2 + $0x8] sm:$0xff]
      %v128 = vld [vmem:[#allocation8] sm:$0x1]
      %v130 = vlaneseq
      %v131 = vshrl.u32 %v130, 7
      %v132 = vsub.s32 0, %v131
      %v133 = vrot.slane %v128, %v132
      %v135 = vadd.f32 %v126, %v133
      %v136 = vadd.f32 %v127, %v133
      %137 = vst.msk [vmem:[#allocation9] sm:$0xff] %vm120, %v135
      %138 = vst.msk [vmem:[#allocation9 + $0x8] sm:$0xff] %vm120, %v136
    $region33: #{encoder_decoder_forward.49} parent=1 // pred_fallthru
      _
    // Predicated region
    $region34: #{encoder_decoder_forward.49} parent=1 // pred_check
      _
    $region35: #{encoder_decoder_forward.49} parent=1 // pred_check_branch
      %140 = sbr.rel (0) target = $region37
    $region36: #{encoder_decoder_forward.49} parent=1 // pred_region
      %s142 = ssub.s32 256, 256
      %143 = vsyncadd [#allocation5], %s142
      %s144 = sshll.u32 [#allocation9], 4
      %s145 = int_to_ptr.vmem [resolvable:$true] %s144
      %150 = dma.vmem_to_hbm [thread:$0]  %s145, 256, %s3, [#allocation5], 128, 128, 8
    $region37: #{encoder_decoder_forward.49} parent=1 // pred_fallthru
      _
    // Predicated region
    $region38: #{encoder_decoder_forward.49} parent=1 // pred_check
      _
    $region39: #{encoder_decoder_forward.49} parent=1 // pred_check_branch
      %152 = sbr.rel (0) target = $region41
    $region40: #{encoder_decoder_forward.49} parent=1 // pred_region
      %153 = dma.done [#allocation5], 256
    $region41: #{encoder_decoder_forward.49} parent=1 // pred_fallthru
      _
    %154 = vsyncpa [#allocation4], 1
    %155 = vsyncpa [#allocation7], 1
    %156 = vsyncpa [#allocation5], 1

// kernel: encoder_decoder_forward.43
$region0: #{encoder_decoder_forward.43}
  #allocation0 [shape = 'u32[]', space=smem, size = 0x4, offset = 0x4, fixed_abs, tag = 'smem constant byte address 0x4 - core index']
  #allocation1 [shape = 'u32[144,128]{1,0:T(1,128)}', space=vmem, size = 0x12000, scoped, tag = 'internal scratch']
  #allocation2 [shape = 'f32[32,32]{1,0:T(8,128)}', space=vmem, size = 0x4000, scoped, tag = 'scratch operand']
  %s0 = inlined_call_operand.vmem [shape: f32[2,34,4], index: 0, kind: input, shape index: {}]
  %s1 = inlined_call_operand.vmem [shape: f32[3,4,32], index: 1, kind: input, shape index: {}]
  %s2 = inlined_call_operand.vmem [shape: f32[1,32], index: 2, kind: input, shape index: {}]
  %s3 = inlined_call_operand.hbm [shape: f32[2,8,32], index: 3, kind: output, shape index: {}]
  %s4 = sld [smem:[#allocation0]]
  $region45: #{encoder_decoder_forward.43} parent=0
    _
  %s6 = ssub.s32 1, %s4
  %s7 = scalar_select 0, %s6, %s4
  $region1: #{encoder_decoder_forward.43} parent=0
    #allocation3 [shape = 'u8[8192]{0}', space=vmem, size = 0x2000, scoped, tag = 'output window, operand 0']
    #allocation4 [shape = 's32[2]{0}', space=sflag, size = 0x8, scoped, tag = 'scoped memory for encoder_decoder_forward.43']
    %8 = vsyncpa [#allocation4], 0
    %s9 = scalar_lea.sflag [#allocation4], 1
    %10 = vsyncpa %s9, 0
    loop: start=0, step=1, limit=4
    $region2: #{encoder_decoder_forward.43} parent=1 // loop_pre_header
      _
    $region3: #{encoder_decoder_forward.43} parent=1 // loop_header
      %s12 = sphi 0, %s16
      %p13 = scmp.ge.s32.totalorder %s12, 4
      %s22 = sphi 0, %s24
      %s25 = sphi 0, %s22
      %s26 = sphi 0, %s25
      %s42 = sphi 0, %s26
      %s46 = sphi 0, %s46
      %s48 = sphi 0, %s46
      %s49 = sphi 0, %s48
      %s63 = sphi 0, %s49
      %s67 = sphi 0, %s67
      %s69 = sphi 0, %s67
      %s70 = sphi 0, %s69
      %s84 = sphi 0, %s70
      %s90 = sphi 0, %s92
      %s93 = sphi 0, %s90
      %s94 = sphi 0, %s93
      %s110 = sphi 0, %s94
    $region4: #{encoder_decoder_forward.43} parent=1 // loop_header_branch
      %15 = sbr.rel (%p13) target = $region8
    $region5: #{encoder_decoder_forward.43} parent=1 // loop_body
      %s17 = ssub.s32 %s12, 1
      %s18 = ssub.s32 %s12, 2
      %s19 = sadd.s32 %s12, 1
      %s20 = ssub.s32 %s12, %s19
      %p21 = scmp.eq.s32.totalorder %s20, 0
      %s23 = sadd.s32 %s22, 1
      %s24 = scalar_select %p21, %s22, %s23
      %p27 = pneg %p21
      %p28 = scmp.eq.s32.totalorder %s12, 1
      %p29 = por %p27, %p28
      %p30 = scmp.ne.s32.totalorder %s22, %s25
      %p31 = scmp.eq.s32.totalorder %s12, 0
      %p32 = por %p30, %p31
      %p33 = scmp.ne.s32.totalorder %s22, %s25
      %p34 = scmp.eq.s32.totalorder %s17, 1
      %p35 = por %p33, %p34
      %p36 = scmp.ne.s32.totalorder %s25, %s26
      %p37 = scmp.eq.s32.totalorder %s17, 0
      %p38 = por %p36, %p37
      %p39 = scmp.ne.s32.totalorder %s25, %s26
      %p40 = scmp.eq.s32.totalorder %s18, 1
      %p41 = por %p39, %p40
      %p43 = scmp.ne.s32.totalorder %s26, %s42
      %p44 = scmp.eq.s32.totalorder %s18, 0
      %p45 = por %p43, %p44
      %s47 = sadd.s32 %s46, 1
      %p50 = scmp.eq.s32.totalorder %s12, 1
      %p51 = scmp.ne.s32.totalorder %s46, %s48
      %p52 = scmp.eq.s32.totalorder %s12, 0
      %p53 = por %p51, %p52
      %p54 = scmp.ne.s32.totalorder %s46, %s48
      %p55 = scmp.eq.s32.totalorder %s17, 1
      %p56 = por %p54, %p55
      %p57 = scmp.ne.s32.totalorder %s48, %s49
      %p58 = scmp.eq.s32.totalorder %s17, 0
      %p59 = por %p57, %p58
      %p60 = scmp.ne.s32.totalorder %s48, %s49
      %p61 = scmp.eq.s32.totalorder %s18, 1
      %p62 = por %p60, %p61
      %p64 = scmp.ne.s32.totalorder %s49, %s63
      %p65 = scmp.eq.s32.totalorder %s18, 0
      %p66 = por %p64, %p65
      %s68 = sadd.s32 %s67, 1
      %p71 = scmp.eq.s32.totalorder %s12, 1
      %p72 = scmp.ne.s32.totalorder %s67, %s69
      %p73 = scmp.eq.s32.totalorder %s12, 0
      %p74 = por %p72, %p73
      %p75 = scmp.ne.s32.totalorder %s67, %s69
      %p76 = scmp.eq.s32.totalorder %s17, 1
      %p77 = por %p75, %p76
      %p78 = scmp.ne.s32.totalorder %s69, %s70
      %p79 = scmp.eq.s32.totalorder %s17, 0
      %p80 = por %p78, %p79
      %p81 = scmp.ne.s32.totalorder %s69, %s70
      %p82 = scmp.eq.s32.totalorder %s18, 1
      %p83 = por %p81, %p82
      %p85 = scmp.ne.s32.totalorder %s70, %s84
      %p86 = scmp.eq.s32.totalorder %s18, 0
      %p87 = por %p85, %p86
      %s88 = ssub.s32 %s12, %s19
      %p89 = scmp.eq.s32.totalorder %s88, 0
      %s91 = sadd.s32 %s90, 1
      %s92 = scalar_select %p89, %s90, %s91
      %p95 = pneg %p89
      %p96 = scmp.eq.s32.totalorder %s12, 1
      %p97 = por %p95, %p96
      %p98 = scmp.ne.s32.totalorder %s90, %s93
      %p99 = scmp.eq.s32.totalorder %s12, 0
      %p100 = por %p98, %p99
      %p101 = scmp.ne.s32.totalorder %s90, %s93
      %p102 = scmp.eq.s32.totalorder %s17, 1
      %p103 = por %p101, %p102
      %p104 = scmp.ne.s32.totalorder %s93, %s94
      %p105 = scmp.eq.s32.totalorder %s17, 0
      %p106 = por %p104, %p105
      %p107 = scmp.ne.s32.totalorder %s93, %s94
      %p108 = scmp.eq.s32.totalorder %s18, 1
      %p109 = por %p107, %p108
      %p111 = scmp.ne.s32.totalorder %s94, %s110
      %p112 = scmp.eq.s32.totalorder %s18, 0
      %p113 = por %p111, %p112
      %p114 = scmp.le.s32.totalorder 1, %s12
      %p115 = scmp.lt.s32.totalorder %s12, 3
      %p116 = pnand %p114, %p115
      %p117 = pneg %p116
      // Predicated region
      $region9: #{encoder_decoder_forward.43} parent=5 // pred_check
        _
      $region10: #{encoder_decoder_forward.43} parent=5 // pred_check_branch
        %119 = sbr.rel (%p116) target = $region12
      $region11: #{encoder_decoder_forward.43} parent=5 // pred_region
        %s120 = ssub.s32 %s12, 1
        // Predicated region
        $region13: #{encoder_decoder_forward.43} parent=11 // pred_check
          %p121 = pneg %p59
        $region14: #{encoder_decoder_forward.43} parent=11 // pred_check_branch
          %123 = sbr.rel (%p121) target = $region16
        $region15: #{encoder_decoder_forward.43} parent=11 // pred_region
          _
        $region16: #{encoder_decoder_forward.43} parent=11 // pred_fallthru
          _
        // Predicated region
        $region17: #{encoder_decoder_forward.43} parent=11 // pred_check
          %p124 = pneg %p80
        $region18: #{encoder_decoder_forward.43} parent=11 // pred_check_branch
          %126 = sbr.rel (%p124) target = $region20
        $region19: #{encoder_decoder_forward.43} parent=11 // pred_region
          _
        $region20: #{encoder_decoder_forward.43} parent=11 // pred_fallthru
          _
      $region12: #{encoder_decoder_forward.43} parent=5 // pred_fallthru
        _
      %p127 = scmp.lt.s32.totalorder %s12, 2
      // Predicated region
      $region21: #{encoder_decoder_forward.43} parent=5 // pred_check
        %p128 = pneg %p127
      $region22: #{encoder_decoder_forward.43} parent=5 // pred_check_branch
        %130 = sbr.rel (%p128) target = $region24
      $region23: #{encoder_decoder_forward.43} parent=5 // pred_region
        // Predicated region
        $region25: #{encoder_decoder_forward.43} parent=23 // pred_check
          %p131 = pneg %p32
        $region26: #{encoder_decoder_forward.43} parent=23 // pred_check_branch
          %133 = sbr.rel (%p131) target = $region28
        $region27: #{encoder_decoder_forward.43} parent=23 // pred_region
          %p134 = scmp.lt.s32.totalorder %s12, 1
          %s135 = scalar_select %p134, %s12, 1
          %s136 = smul.addr %s135, 5
          %s137 = smul.addr %s136, 8
          %s138 = scalar_lea.vmem %s0, %s137
        $region28: #{encoder_decoder_forward.43} parent=23 // pred_fallthru
          _
      $region24: #{encoder_decoder_forward.43} parent=5 // pred_fallthru
        _
      %p139 = scmp.le.s32.totalorder 1, %s12
      %p140 = scmp.lt.s32.totalorder %s12, 3
      %p141 = pnand %p139, %p140
      %p142 = pneg %p141
      // Predicated region
      $region29: #{encoder_decoder_forward.43} parent=5 // pred_check
        _
      $region30: #{encoder_decoder_forward.43} parent=5 // pred_check_branch
        %144 = sbr.rel (%p141) target = $region32
      $region31: #{encoder_decoder_forward.43} parent=5 // pred_region
        %s145 = ssub.s32 %s12, 1
        %p146 = scmp.lt.s32.totalorder %s17, 1
        %s147 = scalar_select %p146, %s17, 1
        %s148 = smul.addr %s147, 5
        %s149 = smul.addr %s148, 8
        %s150 = scalar_lea.vmem %s0, %s149
        %p151 = pneg %p38
        %p152 = pneg %p35
        %p153 = pneg %p59
        %p154 = pneg %p56
        %p155 = pneg %p80
        %p156 = pneg %p77
        %p157 = pneg %p106
        %p158 = pneg %p103
        %s159 = sand.u32 %s93, 1
        %s160 = scalar_lea.sflag [#allocation4], %s159
        %s161 = sand.u32 %s93, 1
        %s162 = smul.addr %s161, 8
        %s163 = scalar_lea.vmem [#allocation3], %s162
        %p164 = scmp.lt.s32.totalorder %s17, 1
        %s165 = scalar_select %p164, %s17, 1
        %s166 = smul.addr %s165, 5
        %s167 = smul.addr %s166, 8
        %s168 = scalar_lea.vmem %s0, %s167
        %v169 = vld [vmem:[%s168] sm:$0xff]
        %v170 = vld [vmem:[%s168 + $0x8] sm:$0xff]
        %v171 = vld [vmem:[%s168 + $0x10] sm:$0xff]
        %v172 = vld [vmem:[%s168 + $0x18] sm:$0xff]
        %v173 = vld [vmem:[%s1] sm:$0xf]
        %v174 = vld [vmem:[%s168 + $0x1] sm:$0xff]
        %v175 = vld [vmem:[%s168 + $0x9] sm:$0xff]
        %v176 = vld [vmem:[%s168 + $0x11] sm:$0xff]
        %v177 = vld [vmem:[%s168 + $0x19] sm:$0xff]
        %s178 = scalar_lea.vmem %s1, 4
        %v179 = vld [vmem:[%s178] sm:$0xf]
        %vm180 = vcmask 31744
        %v182 = vsel %vm180, %v174, 0
        %v185 = vsel %vm180, %v175, 0
        %v188 = vsel %vm180, %v176, 0
        %v191 = vsel %vm180, %v177, 0
        %vm193 = vcmask 1043456
        %v195 = vsel %vm193, %v179, 0
        %197 = vmatprep.subr.mxu0 0.0
        %198 = vmatpush1.msra.mxu0 %v195
        %199 = vmatprep.subr.mxu0 0.0
        %200 = vmatpush1.msra.mxu0 0.0
        %201 = vmatprep.subr.mxu0 0.0
        %202 = vmatpush1.msra.mxu0 0.0
        %203 = vmatprep.subr.mxu0 0.0
        %204 = vmatpush1.msra.mxu0 0.0
        %205 = vmatprep.subr.mxu0 0.0
        %206 = vmatpush1.msra.mxu0 0.0
        %207 = vmatprep.subr.mxu0 0.0
        %208 = vmatpush1.msra.mxu0 0.0
        %209 = vmatprep.subr.mxu0 0.0
        %210 = vmatpush1.msra.mxu0 0.0
        %211 = vmatprep.subr.mxu0 0.0
        %212 = vmatpush1.msra.mxu0 0.0
        %213 = vmatprep.subr.mxu0 0.0
        %214 = vmatpush1.msra.mxu0 0.0
        %215 = vmatprep.subr.mxu0 0.0
        %216 = vmatpush1.msra.mxu0 0.0
        %217 = vmatprep.subr.mxu0 0.0
        %218 = vmatpush1.msra.mxu0 0.0
        %219 = vmatprep.subr.mxu0 0.0
        %220 = vmatpush1.msra.mxu0 0.0
        %221 = vmatprep.subr.mxu0 0.0
        %222 = vmatpush1.msra.mxu0 0.0
        %223 = vmatprep.subr.mxu0 0.0
        %224 = vmatpush1.msra.mxu0 0.0
        %225 = vmatprep.subr.mxu0 0.0
        %226 = vmatpush1.msra.mxu0 0.0
        %227 = vmatprep.subr.mxu0 0.0
        %228 = vmatpush1.msra.mxu0 0.0
        %229 = vmatprep.subr.mxu0 0.0
        %230 = vmatpush1.msra.mxu0 0.0
        %231 = vmatprep.subr.mxu0 0.0
        %232 = vmatpush1.msra.mxu0 0.0
        %233 = vmatprep.subr.mxu0 0.0
        %234 = vmatpush1.msra.mxu0 0.0
        %235 = vmatprep.subr.mxu0 0.0
        %236 = vmatpush1.msra.mxu0 0.0
        %237 = vmatprep.subr.mxu0 0.0
        %238 = vmatpush1.msra.mxu0 0.0
        %239 = vmatprep.subr.mxu0 0.0
        %240 = vmatpush1.msra.mxu0 0.0
        %241 = vmatprep.subr.mxu0 0.0
        %242 = vmatpush1.msra.mxu0 0.0
        %243 = vmatprep.subr.mxu0 0.0
        %244 = vmatpush1.msra.mxu0 0.0
        %245 = vmatprep.subr.mxu0 0.0
        %246 = vmatpush1.msra.mxu0 0.0
        %247 = vmatprep.subr.mxu0 0.0
        %248 = vmatpush1.msra.mxu0 0.0
        %249 = vmatprep.subr.mxu0 0.0
        %250 = vmatpush1.msra.mxu0 0.0
        %251 = vmatprep.subr.mxu0 0.0
        %252 = vmatpush1.msra.mxu0 0.0
        %253 = vmatprep.subr.mxu0 0.0
        %254 = vmatpush1.msra.mxu0 0.0
        %255 = vmatprep.subr.mxu0 0.0
        %256 = vmatpush1.msra.mxu0 0.0
        %257 = vmatprep.subr.mxu0 0.0
        %258 = vmatpush1.msra.mxu0 0.0
        %259 = vmatprep.subr.mxu0 0.0
        %260 = vmatpush1.msra.mxu0 0.0
        %261 = vmatprep.mubr.f32.mxu0 0.0
        %262 = vmatmul.mubr.f32.gmra.mrb[0].mxu0 %v182
        %v263 = vpop.f32.mrb[0].mxu0
        %v264 = vadd.f32 0.0, %v263
        %v265 = vpop.f32.mrb[0].mxu0
        %266 = vmatprep.mubr.f32.mxu0 0.0
        %267 = vmatmul.mubr.f32.gmra.mrb[0].mxu0 %v185
        %v268 = vpop.f32.mrb[0].mxu0
        %v269 = vadd.f32 0.0, %v268
        %v270 = vpop.f32.mrb[0].mxu0
        %271 = vmatprep.mubr.f32.mxu0 0.0
        %272 = vmatmul.mubr.f32.gmra.mrb[0].mxu0 %v188
        %v273 = vpop.f32.mrb[0].mxu0
        %v274 = vadd.f32 0.0, %v273
        %v275 = vpop.f32.mrb[0].mxu0
        %276 = vmatprep.mubr.f32.mxu0 0.0
        %277 = vmatmul.mubr.f32.gmra.mrb[0].mxu0 %v191
        %v278 = vpop.f32.mrb[0].mxu0
        %v279 = vadd.f32 0.0, %v278
        %v280 = vpop.f32.mrb[0].mxu0
        %281 = vdwg.mxu0
        %v283 = vsel %vm180, %v169, 0
        %v286 = vsel %vm180, %v170, 0
        %v289 = vsel %vm180, %v171, 0
        %v292 = vsel %vm180, %v172, 0
        %v295 = vsel %vm193, %v173, 0
        %297 = vmatprep.subr.mxu0 0.0
        %298 = vmatpush1.msra.mxu0 %v295
        %299 = vmatprep.subr.mxu0 0.0
        %300 = vmatpush1.msra.mxu0 0.0
        %301 = vmatprep.subr.mxu0 0.0
        %302 = vmatpush1.msra.mxu0 0.0
        %303 = vmatprep.subr.mxu0 0.0
        %304 = vmatpush1.msra.mxu0 0.0
        %305 = vmatprep.subr.mxu0 0.0
        %306 = vmatpush1.msra.mxu0 0.0
        %307 = vmatprep.subr.mxu0 0.0
        %308 = vmatpush1.msra.mxu0 0.0
        %309 = vmatprep.subr.mxu0 0.0
        %310 = vmatpush1.msra.mxu0 0.0
        %311 = vmatprep.subr.mxu0 0.0
        %312 = vmatpush1.msra.mxu0 0.0
        %313 = vmatprep.subr.mxu0 0.0
        %314 = vmatpush1.msra.mxu0 0.0
        %315 = vmatprep.subr.mxu0 0.0
        %316 = vmatpush1.msra.mxu0 0.0
        %317 = vmatprep.subr.mxu0 0.0
        %318 = vmatpush1.msra.mxu0 0.0
        %319 = vmatprep.subr.mxu0 0.0
        %320 = vmatpush1.msra.mxu0 0.0
        %321 = vmatprep.subr.mxu0 0.0
        %322 = vmatpush1.msra.mxu0 0.0
        %323 = vmatprep.subr.mxu0 0.0
        %324 = vmatpush1.msra.mxu0 0.0
        %325 = vmatprep.subr.mxu0 0.0
        %326 = vmatpush1.msra.mxu0 0.0
        %327 = vmatprep.subr.mxu0 0.0
        %328 = vmatpush1.msra.mxu0 0.0
        %329 = vmatprep.subr.mxu0 0.0
        %330 = vmatpush1.msra.mxu0 0.0
        %331 = vmatprep.subr.mxu0 0.0
        %332 = vmatpush1.msra.mxu0 0.0
        %333 = vmatprep.subr.mxu0 0.0
        %334 = vmatpush1.msra.mxu0 0.0
        %335 = vmatprep.subr.mxu0 0.0
        %336 = vmatpush1.msra.mxu0 0.0
        %337 = vmatprep.subr.mxu0 0.0
        %338 = vmatpush1.msra.mxu0 0.0
        %339 = vmatprep.subr.mxu0 0.0
        %340 = vmatpush1.msra.mxu0 0.0
        %341 = vmatprep.subr.mxu0 0.0
        %342 = vmatpush1.msra.mxu0 0.0
        %343 = vmatprep.subr.mxu0 0.0
        %344 = vmatpush1.msra.mxu0 0.0
        %345 = vmatprep.subr.mxu0 0.0
        %346 = vmatpush1.msra.mxu0 0.0
        %347 = vmatprep.subr.mxu0 0.0
        %348 = vmatpush1.msra.mxu0 0.0
        %349 = vmatprep.subr.mxu0 0.0
        %350 = vmatpush1.msra.mxu0 0.0
        %351 = vmatprep.subr.mxu0 0.0
        %352 = vmatpush1.msra.mxu0 0.0
        %353 = vmatprep.subr.mxu0 0.0
        %354 = vmatpush1.msra.mxu0 0.0
        %355 = vmatprep.subr.mxu0 0.0
        %356 = vmatpush1.msra.mxu0 0.0
        %357 = vmatprep.subr.mxu0 0.0
        %358 = vmatpush1.msra.mxu0 0.0
        %359 = vmatprep.subr.mxu0 0.0
        %360 = vmatpush1.msra.mxu0 0.0
        %361 = vmatprep.mubr.f32.mxu0 0.0
        %362 = vmatmul.mubr.f32.gmra.mrb[0].mxu0 %v283
        %v363 = vpop.f32.mrb[0].mxu0
        %v364 = vadd.f32 %v264, %v363
        %v365 = vpop.f32.mrb[0].mxu0
        %366 = vmatprep.mubr.f32.mxu0 0.0
        %367 = vmatmul.mubr.f32.gmra.mrb[0].mxu0 %v286
        %v368 = vpop.f32.mrb[0].mxu0
        %v369 = vadd.f32 %v269, %v368
        %v370 = vpop.f32.mrb[0].mxu0
        %371 = vmatprep.mubr.f32.mxu0 0.0
        %372 = vmatmul.mubr.f32.gmra.mrb[0].mxu0 %v289
        %v373 = vpop.f32.mrb[0].mxu0
        %v374 = vadd.f32 %v274, %v373
        %v375 = vpop.f32.mrb[0].mxu0
        %376 = vmatprep.mubr.f32.mxu0 0.0
        %377 = vmatmul.mubr.f32.gmra.mrb[0].mxu0 %v292
        %v378 = vpop.f32.mrb[0].mxu0
        %v379 = vadd.f32 %v279, %v378
        %v380 = vpop.f32.mrb[0].mxu0
        %381 = vdwg.mxu0
        %v382 = vld [vmem:[%s168 + $0x2] sm:$0xff]
        %v383 = vld [vmem:[%s168 + $0xa] sm:$0xff]
        %v384 = vld [vmem:[%s168 + $0x12] sm:$0xff]
        %v385 = vld [vmem:[%s168 + $0x1a] sm:$0xff]
        %s386 = scalar_lea.vmem %s1, 8
        %v387 = vld [vmem:[%s386] sm:$0xf]
        %v389 = vsel %vm180, %v382, 0
        %v392 = vsel %vm180, %v383, 0
        %v395 = vsel %vm180, %v384, 0
        %v398 = vsel %vm180, %v385, 0
        %v401 = vsel %vm193, %v387, 0
        %403 = vmatprep.subr.mxu0 0.0
        %404 = vmatpush1.msra.mxu0 %v401
        %405 = vmatprep.subr.mxu0 0.0
        %406 = vmatpush1.msra.mxu0 0.0
        %407 = vmatprep.subr.mxu0 0.0
        %408 = vmatpush1.msra.mxu0 0.0
        %409 = vmatprep.subr.mxu0 0.0
        %410 = vmatpush1.msra.mxu0 0.0
        %411 = vmatprep.subr.mxu0 0.0
        %412 = vmatpush1.msra.mxu0 0.0
        %413 = vmatprep.subr.mxu0 0.0
        %414 = vmatpush1.msra.mxu0 0.0
        %415 = vmatprep.subr.mxu0 0.0
        %416 = vmatpush1.msra.mxu0 0.0
        %417 = vmatprep.subr.mxu0 0.0
        %418 = vmatpush1.msra.mxu0 0.0
        %419 = vmatprep.subr.mxu0 0.0
        %420 = vmatpush1.msra.mxu0 0.0
        %421 = vmatprep.subr.mxu0 0.0
        %422 = vmatpush1.msra.mxu0 0.0
        %423 = vmatprep.subr.mxu0 0.0
        %424 = vmatpush1.msra.mxu0 0.0
        %425 = vmatprep.subr.mxu0 0.0
        %426 = vmatpush1.msra.mxu0 0.0
        %427 = vmatprep.subr.mxu0 0.0
        %428 = vmatpush1.msra.mxu0 0.0
        %429 = vmatprep.subr.mxu0 0.0
        %430 = vmatpush1.msra.mxu0 0.0
        %431 = vmatprep.subr.mxu0 0.0
        %432 = vmatpush1.msra.mxu0 0.0
        %433 = vmatprep.subr.mxu0 0.0
        %434 = vmatpush1.msra.mxu0 0.0
        %435 = vmatprep.subr.mxu0 0.0
        %436 = vmatpush1.msra.mxu0 0.0
        %437 = vmatprep.subr.mxu0 0.0
        %438 = vmatpush1.msra.mxu0 0.0
        %439 = vmatprep.subr.mxu0 0.0
        %440 = vmatpush1.msra.mxu0 0.0
        %441 = vmatprep.subr.mxu0 0.0
        %442 = vmatpush1.msra.mxu0 0.0
        %443 = vmatprep.subr.mxu0 0.0
        %444 = vmatpush1.msra.mxu0 0.0
        %445 = vmatprep.subr.mxu0 0.0
        %446 = vmatpush1.msra.mxu0 0.0
        %447 = vmatprep.subr.mxu0 0.0
        %448 = vmatpush1.msra.mxu0 0.0
        %449 = vmatprep.subr.mxu0 0.0
        %450 = vmatpush1.msra.mxu0 0.0
        %451 = vmatprep.subr.mxu0 0.0
        %452 = vmatpush1.msra.mxu0 0.0
        %453 = vmatprep.subr.mxu0 0.0
        %454 = vmatpush1.msra.mxu0 0.0
        %455 = vmatprep.subr.mxu0 0.0
        %456 = vmatpush1.msra.mxu0 0.0
        %457 = vmatprep.subr.mxu0 0.0
        %458 = vmatpush1.msra.mxu0 0.0
        %459 = vmatprep.subr.mxu0 0.0
        %460 = vmatpush1.msra.mxu0 0.0
        %461 = vmatprep.subr.mxu0 0.0
        %462 = vmatpush1.msra.mxu0 0.0
        %463 = vmatprep.subr.mxu0 0.0
        %464 = vmatpush1.msra.mxu0 0.0
        %465 = vmatprep.subr.mxu0 0.0
        %466 = vmatpush1.msra.mxu0 0.0
        %467 = vmatprep.mubr.f32.mxu0 0.0
        %468 = vmatmul.mubr.f32.gmra.mrb[0].mxu0 %v389
        %v469 = vpop.f32.mrb[0].mxu0
        %v470 = vadd.f32 0.0, %v469
        %v471 = vpop.f32.mrb[0].mxu0
        %472 = vmatprep.mubr.f32.mxu0 0.0
        %473 = vmatmul.mubr.f32.gmra.mrb[0].mxu0 %v392
        %v474 = vpop.f32.mrb[0].mxu0
        %v475 = vadd.f32 0.0, %v474
        %v476 = vpop.f32.mrb[0].mxu0
        %477 = vmatprep.mubr.f32.mxu0 0.0
        %478 = vmatmul.mubr.f32.gmra.mrb[0].mxu0 %v395
        %v479 = vpop.f32.mrb[0].mxu0
        %v480 = vadd.f32 0.0, %v479
        %v481 = vpop.f32.mrb[0].mxu0
        %482 = vmatprep.mubr.f32.mxu0 0.0
        %483 = vmatmul.mubr.f32.gmra.mrb[0].mxu0 %v398
        %v484 = vpop.f32.mrb[0].mxu0
        %v485 = vadd.f32 0.0, %v484
        %v486 = vpop.f32.mrb[0].mxu0
        %487 = vdwg.mxu0
        %v488 = vadd.f32 %v364, %v470
        %v489 = vadd.f32 %v369, %v475
        %v490 = vadd.f32 %v374, %v480
        %v491 = vadd.f32 %v379, %v485
        %v492 = vld [vmem:[%s2] sm:$0x1]
        %v494 = vlaneseq
        %v495 = vshrl.u32 %v494, 7
        %v496 = vsub.s32 0, %v495
        %v497 = vrot.slane %v492, %v496
        %v499 = vadd.f32 %v488, %v497
        %v500 = vadd.f32 %v489, %v497
        %v501 = vadd.f32 %v490, %v497
        %v502 = vadd.f32 %v491, %v497
        %v503 = vmax.f32 %v499, 0.0
        %v504 = vmax.f32 %v500, 0.0
        %v505 = vmax.f32 %v501, 0.0
        %v506 = vmax.f32 %v502, 0.0
        %vm507 = vcmask 261120
        %508 = vst.msk [vmem:[#allocation2] sm:$0xff] %vm507, %v503
        %509 = vst.msk [vmem:[#allocation2 + $0x8] sm:$0xff] %vm507, %v504
        %510 = vst.msk [vmem:[#allocation2 + $0x10] sm:$0xff] %vm507, %v505
        %511 = vst.msk [vmem:[#allocation2 + $0x18] sm:$0xff] %vm507, %v506
        %v512 = vld [vmem:[#allocation2] ss:$4 sm:$0xff]
        %s513 = scalar_lea.vmem [#allocation2], 1
        %v514 = vld [vmem:[%s513] ss:$4 sm:$0xff]
        %v515 = vadd.f32 %v512, %v514
        %s516 = scalar_lea.vmem [#allocation2], 2
        %v517 = vld [vmem:[%s516] ss:$4 sm:$0xff]
        %v518 = vadd.f32 %v515, %v517
        %s519 = scalar_lea.vmem [#allocation2], 3
        %v520 = vld [vmem:[%s519] ss:$4 sm:$0xff]
        %v521 = vadd.f32 %v518, %v520
        %v522 = vmul.f32 %v521, 0.25
        %523 = vst.msk [vmem:[%s163] sm:$0xff] %vm507, %v522
        %s524 = sand.u32 %s93, 1
        %s525 = scalar_lea.sflag [#allocation4], %s524
        %s526 = sand.u32 %s93, 1
        %s527 = smul.addr %s526, 8
        %s528 = scalar_lea.vmem [#allocation3], %s527
        // Predicated region
        $region33: #{encoder_decoder_forward.43} parent=31 // pred_check
          %p529 = pneg %p103
        $region34: #{encoder_decoder_forward.43} parent=31 // pred_check_branch
          %531 = sbr.rel (%p529) target = $region36
        $region35: #{encoder_decoder_forward.43} parent=31 // pred_region
          %s533 = ssub.s32 128, 128
          %534 = vsyncadd %s525, %s533
          %s535 = smul.addr %s17, 128
          %s536 = scalar_lea.hbm %s3, %s535
          %s538 = sshll.u32 %s528, 4
          %s539 = int_to_ptr.vmem [resolvable:$true] %s538
          %541 = dma.vmem_to_hbm [thread:$0]  %s539, 128, %s536, %s525
        $region36: #{encoder_decoder_forward.43} parent=31 // pred_fallthru
          _
      $region32: #{encoder_decoder_forward.43} parent=5 // pred_fallthru
        _
      %p542 = scmp.le.s32.totalorder 2, %s12
      // Predicated region
      $region37: #{encoder_decoder_forward.43} parent=5 // pred_check
        %p543 = pneg %p542
      $region38: #{encoder_decoder_forward.43} parent=5 // pred_check_branch
        %545 = sbr.rel (%p543) target = $region40
      $region39: #{encoder_decoder_forward.43} parent=5 // pred_region
        %s546 = ssub.s32 %s12, 2
        // Predicated region
        $region41: #{encoder_decoder_forward.43} parent=39 // pred_check
          %p547 = pneg %p109
        $region42: #{encoder_decoder_forward.43} parent=39 // pred_check_branch
          %549 = sbr.rel (%p547) target = $region44
        $region43: #{encoder_decoder_forward.43} parent=39 // pred_region
          %s550 = sand.u32 %s94, 1
          %s551 = scalar_lea.sflag [#allocation4], %s550
          %s552 = sand.u32 %s94, 1
          %s553 = smul.addr %s552, 8
          %s554 = scalar_lea.vmem [#allocation3], %s553
          %555 = dma.done %s551, 128
        $region44: #{encoder_decoder_forward.43} parent=39 // pred_fallthru
          _
      $region40: #{encoder_decoder_forward.43} parent=5 // pred_fallthru
        _
    $region6: #{encoder_decoder_forward.43} parent=1 // loop_footer
      %s16 = sadd.s32 1, %s12
    $region7: #{encoder_decoder_forward.43} parent=1 // loop_footer_branch
      %11 = sbr.rel target = $region3
    $region8: #{encoder_decoder_forward.43} parent=1 // loop_exit
      _
    %556 = vsyncpa [#allocation4], 1
    %s557 = scalar_lea.sflag [#allocation4], 1
    %558 = vsyncpa %s557, 1

// kernel: encoder_decoder_forward.45
$region0: #{encoder_decoder_forward.45}
  #allocation0 [shape = 'u32[]', space=smem, size = 0x4, offset = 0x4, fixed_abs, tag = 'smem constant byte address 0x4 - core index']
  #allocation1 [shape = 'u32[144,128]{1,0:T(1,128)}', space=vmem, size = 0x12000, scoped, tag = 'internal scratch']
  #allocation2 [shape = 'f32[16,96]{1,0:T(8,128)}', space=vmem, size = 0x2000, scoped, tag = 'scratch operand']
  %s0 = inlined_call_operand.hbm [shape: f32[16,32], index: 0, kind: input, shape index: {}]
  %s1 = inlined_call_operand.hbm [shape: f32[32,96], index: 1, kind: input, shape index: {}]
  %s2 = inlined_call_operand.hbm [shape: f32[1,96], index: 2, kind: input, shape index: {}]
  %s3 = inlined_call_operand.hbm [shape: f32[16,96], index: 3, kind: output, shape index: {}]
  %s4 = sld [smem:[#allocation0]]
  $region42: #{encoder_decoder_forward.45} parent=0
    _
  %s6 = ssub.s32 1, %s4
  %s7 = scalar_select 0, %s6, %s4
  $region1: #{encoder_decoder_forward.45} parent=0
    #allocation3 [shape = 'u8[8192]{0}', space=vmem, size = 0x2000, scoped, tag = 'input window, operand 0, single buffered']
    #allocation4 [shape = 's32[1]{0}', space=sflag, size = 0x4, scoped, tag = 'scoped memory for encoder_decoder_forward.45']
    #allocation5 [shape = 's32[1]{0}', space=sflag, size = 0x4, scoped, tag = 'scoped memory for encoder_decoder_forward.45']
    #allocation6 [shape = 'u8[16384]{0}', space=vmem, size = 0x4000, scoped, tag = 'input window, operand 1, single buffered']
    #allocation7 [shape = 's32[1]{0}', space=sflag, size = 0x4, scoped, tag = 'scoped memory for encoder_decoder_forward.45']
    #allocation8 [shape = 'u8[512]{0}', space=vmem, size = 0x400, scoped, tag = 'input window, operand 2, single buffered']
    #allocation9 [shape = 'u8[8192]{0}', space=vmem, size = 0x2000, scoped, tag = 'output window, operand 0, single buffered']
    %8 = vsyncpa [#allocation4], 0
    %9 = vsyncpa [#allocation7], 0
    %10 = vsyncpa [#allocation5], 0
    // Predicated region
    $region2: #{encoder_decoder_forward.45} parent=1 // pred_check
      _
    $region3: #{encoder_decoder_forward.45} parent=1 // pred_check_branch
      %12 = sbr.rel (0) target = $region5
    $region4: #{encoder_decoder_forward.45} parent=1 // pred_region
      %s14 = ssub.s32 256, 256
      %15 = vsyncadd [#allocation4], %s14
      %s16 = sshll.u32 [#allocation3], 4
      %s17 = int_to_ptr.vmem [resolvable:$true] %s16
      %22 = dma.hbm_to_vmem [thread:$0]  %s0, 256, %s17, [#allocation4], 128, 128, 8
    $region5: #{encoder_decoder_forward.45} parent=1 // pred_fallthru
      _
    // Predicated region
    $region6: #{encoder_decoder_forward.45} parent=1 // pred_check
      _
    $region7: #{encoder_decoder_forward.45} parent=1 // pred_check_branch
      %24 = sbr.rel (0) target = $region9
    $region8: #{encoder_decoder_forward.45} parent=1 // pred_region
      %s26 = ssub.s32 512, 512
      %27 = vsyncadd [#allocation7], %s26
      %s28 = sshll.u32 [#allocation6], 4
      %s29 = int_to_ptr.vmem [resolvable:$true] %s28
      %34 = dma.hbm_to_vmem [thread:$0]  %s1, 512, %s29, [#allocation7], 128, 128, 8
    $region9: #{encoder_decoder_forward.45} parent=1 // pred_fallthru
      _
    // Predicated region
    $region10: #{encoder_decoder_forward.45} parent=1 // pred_check
      _
    $region11: #{encoder_decoder_forward.45} parent=1 // pred_check_branch
      %36 = sbr.rel (0) target = $region13
    $region12: #{encoder_decoder_forward.45} parent=1 // pred_region
      %s38 = ssub.s32 16, 16
      %39 = vsyncadd [#allocation7], %s38
      %s41 = sshll.u32 [#allocation8], 4
      %s42 = int_to_ptr.vmem [resolvable:$true] %s41
      %44 = dma.hbm_to_vmem [thread:$0]  %s2, 16, %s42, [#allocation7]
    $region13: #{encoder_decoder_forward.45} parent=1 // pred_fallthru
      _
    // Predicated region
    $region14: #{encoder_decoder_forward.45} parent=1 // pred_check
      _
    $region15: #{encoder_decoder_forward.45} parent=1 // pred_check_branch
      %46 = sbr.rel (0) target = $region17
    $region16: #{encoder_decoder_forward.45} parent=1 // pred_region
      %47 = dma.done [#allocation4], 256
    $region17: #{encoder_decoder_forward.45} parent=1 // pred_fallthru
      _
    // Predicated region
    $region18: #{encoder_decoder_forward.45} parent=1 // pred_check
      _
    $region19: #{encoder_decoder_forward.45} parent=1 // pred_check_branch
      %49 = sbr.rel (0) target = $region21
    $region20: #{encoder_decoder_forward.45} parent=1 // pred_region
      %50 = dma.done [#allocation7], 512
    $region21: #{encoder_decoder_forward.45} parent=1 // pred_fallthru
      _
    // Predicated region
    $region22: #{encoder_decoder_forward.45} parent=1 // pred_check
      _
    $region23: #{encoder_decoder_forward.45} parent=1 // pred_check_branch
      %52 = sbr.rel (0) target = $region25
    $region24: #{encoder_decoder_forward.45} parent=1 // pred_region
      %53 = dma.done [#allocation7], 16
    $region25: #{encoder_decoder_forward.45} parent=1 // pred_fallthru
      _
    %p55 = scmp.eq.s32.totalorder 0, 0
    // Predicated region
    $region26: #{encoder_decoder_forward.45} parent=1 // pred_check
      %p56 = pneg %p55
    $region27: #{encoder_decoder_forward.45} parent=1 // pred_check_branch
      %58 = sbr.rel (%p56) target = $region29
    $region28: #{encoder_decoder_forward.45} parent=1 // pred_region
      %vm59 = vcmask 785408
      %60 = vst.msk [vmem:[#allocation2] sm:$0xff] %vm59, 0.0
      %61 = vst.msk [vmem:[#allocation2 + $0x8] sm:$0xff] %vm59, 0.0
    $region29: #{encoder_decoder_forward.45} parent=1 // pred_fallthru
      _
    %v62 = vld [vmem:[#allocation2] sm:$0xff]
    %v63 = vld [vmem:[#allocation2 + $0x8] sm:$0xff]
    %v64 = vld [vmem:[#allocation3] sm:$0xff]
    %v65 = vld [vmem:[#allocation3 + $0x8] sm:$0xff]
    %v66 = vpack.c.bf16 %v65, %v64
    %v67 = vld [vmem:[#allocation6] sm:$0xff]
    %v68 = vld [vmem:[#allocation6 + $0x8] sm:$0xff]
    %v69 = vld [vmem:[#allocation6 + $0x10] sm:$0xff]
    %v70 = vld [vmem:[#allocation6 + $0x18] sm:$0xff]
    %v71 = vpack.c.bf16 %v68, %v67
    %v72 = vpack.c.bf16 %v70, %v69
    %vm73 = vcmask 261120
    %v75 = vsel %vm73, %v66, 0
    %77 = vmatprep.subr.bf16.mxu0 0
    %78 = vmatpush1.bf16.msra.mxu0 %v71
    %79 = vmatprep.subr.bf16.mxu0 0
    %80 = vmatpush1.bf16.msra.mxu0 %v72
    %81 = vmatprep.subr.bf16.mxu0 0
    %82 = vmatpush1.bf16.msra.mxu0 0
    %83 = vmatprep.subr.bf16.mxu0 0
    %84 = vmatpush1.bf16.msra.mxu0 0
    %85 = vmatprep.subr.bf16.mxu0 0
    %86 = vmatpush1.bf16.msra.mxu0 0
    %87 = vmatprep.subr.bf16.mxu0 0
    %88 = vmatpush1.bf16.msra.mxu0 0
    %89 = vmatprep.subr.bf16.mxu0 0
    %90 = vmatpush1.bf16.msra.mxu0 0
    %91 = vmatprep.subr.bf16.mxu0 0
    %92 = vmatpush1.bf16.msra.mxu0 0
    %93 = vmatprep.subr.bf16.mxu0 0
    %94 = vmatpush1.bf16.msra.mxu0 0
    %95 = vmatprep.subr.bf16.mxu0 0
    %96 = vmatpush1.bf16.msra.mxu0 0
    %97 = vmatprep.subr.bf16.mxu0 0
    %98 = vmatpush1.bf16.msra.mxu0 0
    %99 = vmatprep.subr.bf16.mxu0 0
    %100 = vmatpush1.bf16.msra.mxu0 0
    %101 = vmatprep.subr.bf16.mxu0 0
    %102 = vmatpush1.bf16.msra.mxu0 0
    %103 = vmatprep.subr.bf16.mxu0 0
    %104 = vmatpush1.bf16.msra.mxu0 0
    %105 = vmatprep.subr.bf16.mxu0 0
    %106 = vmatpush1.bf16.msra.mxu0 0
    %107 = vmatprep.subr.bf16.mxu0 0
    %108 = vmatpush1.bf16.msra.mxu0 0
    %109 = vmatprep.mubr.bf16.mxu0 0
    %110 = vmatmul.mubr.bf16.gmra.mrb[0].mxu0 %v75
    %v111 = vpop.f32.mrb[0].mxu0
    %v112 = vadd.f32 0.0, %v111
    %v113 = vpop.f32.mrb[0].mxu0
    %v114 = vpop.f32.mrb[0].mxu0
    %v115 = vadd.f32 0.0, %v114
    %v116 = vpop.f32.mrb[0].mxu0
    %117 = vdwg.mxu0
    %v118 = vadd.f32 %v62, %v112
    %v119 = vadd.f32 %v63, %v115
    %vm120 = vcmask 785408
    %121 = vst.msk [vmem:[#allocation2] sm:$0xff] %vm120, %v118
    %122 = vst.msk [vmem:[#allocation2 + $0x8] sm:$0xff] %vm120, %v119
    // Predicated region
    $region30: #{encoder_decoder_forward.45} parent=1 // pred_check
      %p123 = pneg %p55
    $region31: #{encoder_decoder_forward.45} parent=1 // pred_check_branch
      %125 = sbr.rel (%p123) target = $region33
    $region32: #{encoder_decoder_forward.45} parent=1 // pred_region
      %v126 = vld [vmem:[#allocation2] sm:$0xff]
      %v127 = vld [vmem:[#allocation2 + $0x8] sm:$0xff]
      %v128 = vld [vmem:[#allocation8] sm:$0x1]
      %v130 = vlaneseq
      %v131 = vshrl.u32 %v130, 7
      %v132 = vsub.s32 0, %v131
      %v133 = vrot.slane %v128, %v132
      %v135 = vadd.f32 %v126, %v133
      %v136 = vadd.f32 %v127, %v133
      %137 = vst.msk [vmem:[#allocation9] sm:$0xff] %vm120, %v135
      %138 = vst.msk [vmem:[#allocation9 + $0x8] sm:$0xff] %vm120, %v136
    $region33: #{encoder_decoder_forward.45} parent=1 // pred_fallthru
      _
    // Predicated region
    $region34: #{encoder_decoder_forward.45} parent=1 // pred_check
      _
    $region35: #{encoder_decoder_forward.45} parent=1 // pred_check_branch
      %140 = sbr.rel (0) target = $region37
    $region36: #{encoder_decoder_forward.45} parent=1 // pred_region
      %s142 = ssub.s32 256, 256
      %143 = vsyncadd [#allocation5], %s142
      %s144 = sshll.u32 [#allocation9], 4
      %s145 = int_to_ptr.vmem [resolvable:$true] %s144
      %150 = dma.vmem_to_hbm [thread:$0]  %s145, 256, %s3, [#allocation5], 128, 128, 8
    $region37: #{encoder_decoder_forward.45} parent=1 // pred_fallthru
      _
    // Predicated region
    $region38: #{encoder_decoder_forward.45} parent=1 // pred_check
      _
    $region39: #{encoder_decoder_forward.45} parent=1 // pred_check_branch
      %152 = sbr.rel (0) target = $region41
    $region40: #{encoder_decoder_forward.45} parent=1 // pred_region
      %153 = dma.done [#allocation5], 256
    $region41: #{encoder_decoder_forward.45} parent=1 // pred_fallthru
      _
    %154 = vsyncpa [#allocation4], 1
    %155 = vsyncpa [#allocation7], 1
    %156 = vsyncpa [#allocation5], 1

// kernel: encoder_decoder_forward.44
$region0: #{encoder_decoder_forward.44}
  #allocation0 [shape = 'u32[]', space=smem, size = 0x4, offset = 0x4, fixed_abs, tag = 'smem constant byte address 0x4 - core index']
  #allocation1 [shape = 'u32[144,128]{1,0:T(1,128)}', space=vmem, size = 0x12000, scoped, tag = 'internal scratch']
  %s0 = inlined_call_operand.vmem [shape: f32[16,32], index: 0, kind: input, shape index: {}]
  %s1 = inlined_call_operand.vmem [shape: f32[1,32], index: 1, kind: input, shape index: {}]
  %s2 = inlined_call_operand.vmem [shape: f32[1,32], index: 2, kind: input, shape index: {}]
  %s3 = inlined_call_operand.hbm [shape: f32[16,32], index: 3, kind: output, shape index: {}]
  %s4 = sld [smem:[#allocation0]]
  $region22: #{encoder_decoder_forward.44} parent=0
    _
  %s6 = ssub.s32 1, %s4
  %s7 = scalar_select 0, %s6, %s4
  $region1: #{encoder_decoder_forward.44} parent=0
    #allocation2 [shape = 'u8[8192]{0}', space=vmem, size = 0x2000, scoped, tag = 'output window, operand 0, single buffered']
    #allocation3 [shape = 's32[1]{0}', space=sflag, size = 0x4, scoped, tag = 'scoped memory for encoder_decoder_forward.44']
    %8 = vsyncpa [#allocation3], 0
    // Predicated region
    $region2: #{encoder_decoder_forward.44} parent=1 // pred_check
      _
    $region3: #{encoder_decoder_forward.44} parent=1 // pred_check_branch
      %10 = sbr.rel (0) target = $region5
    $region4: #{encoder_decoder_forward.44} parent=1 // pred_region
      _
    $region5: #{encoder_decoder_forward.44} parent=1 // pred_fallthru
      _
    // Predicated region
    $region6: #{encoder_decoder_forward.44} parent=1 // pred_check
      _
    $region7: #{encoder_decoder_forward.44} parent=1 // pred_check_branch
      %12 = sbr.rel (0) target = $region9
    $region8: #{encoder_decoder_forward.44} parent=1 // pred_region
      _
    $region9: #{encoder_decoder_forward.44} parent=1 // pred_fallthru
      _
    // Predicated region
    $region10: #{encoder_decoder_forward.44} parent=1 // pred_check
      _
    $region11: #{encoder_decoder_forward.44} parent=1 // pred_check_branch
      %14 = sbr.rel (0) target = $region13
    $region12: #{encoder_decoder_forward.44} parent=1 // pred_region
      _
    $region13: #{encoder_decoder_forward.44} parent=1 // pred_fallthru
      _
    %v15 = vld [vmem:[%s0] sm:$0xff]
    %v16 = vld [vmem:[%s0 + $0x8] sm:$0xff]
    %v17 = vld [vmem:[%s1] sm:$0x1]
    %v18 = vld [vmem:[%s2] sm:$0x1]
    %vm19 = vcmask 261120
    %v20 = vsel %vm19, %v15, 0.0
    %21 = vadd.xlane.f32.xlu0 %v20
    %v22 = vpop.xlane.xlu0 %21
    %v23 = vsel %vm19, %v16, 0.0
    %24 = vadd.xlane.f32.xlu0 %v23
    %v25 = vpop.xlane.xlu0 %24
    %v26 = vrcp.pop 32.0
    %v27 = vmul.f32 %v22, %v26
    %v28 = vmul.f32 %v25, %v26
    %v29 = vsub.f32 %v15, %v27
    %v30 = vsub.f32 %v16, %v28
    %v31 = vmul.f32 %v29, %v29
    %v32 = vmul.f32 %v30, %v30
    %v33 = vsel %vm19, %v31, 0.0
    %34 = vadd.xlane.f32.xlu0 %v33
    %v35 = vpop.xlane.xlu0 %34
    %v36 = vsel %vm19, %v32, 0.0
    %37 = vadd.xlane.f32.xlu0 %v36
    %v38 = vpop.xlane.xlu0 %37
    %v39 = vmul.f32 %v35, %v26
    %v40 = vmul.f32 %v38, %v26
    %v41 = vadd.f32 %v39, 1e-12
    %v42 = vadd.f32 %v40, 1e-12
    %v43 = vrsqrt.pop %v41
    %v44 = vrsqrt.pop %v42
    %v45 = vmul.f32 %v29, %v43
    %v46 = vmul.f32 %v30, %v44
    %v48 = vlaneseq
    %v49 = vshrl.u32 %v48, 7
    %v50 = vsub.s32 0, %v49
    %v51 = vrot.slane %v17, %v50
    %v53 = vmul.f32 %v45, %v51
    %v54 = vmul.f32 %v46, %v51
    %v56 = vlaneseq
    %v57 = vshrl.u32 %v56, 7
    %v58 = vsub.s32 0, %v57
    %v59 = vrot.slane %v18, %v58
    %v61 = vadd.f32 %v53, %v59
    %v62 = vadd.f32 %v54, %v59
    %63 = vst.msk [vmem:[#allocation2] sm:$0xff] %vm19, %v61
    %64 = vst.msk [vmem:[#allocation2 + $0x8] sm:$0xff] %vm19, %v62
    // Predicated region
    $region14: #{encoder_decoder_forward.44} parent=1 // pred_check
      _
    $region15: #{encoder_decoder_forward.44} parent=1 // pred_check_branch
      %66 = sbr.rel (0) target = $region17
    $region16: #{encoder_decoder_forward.44} parent=1 // pred_region
      %s68 = ssub.s32 256, 256
      %69 = vsyncadd [#allocation3], %s68
      %s70 = sshll.u32 [#allocation2], 4
      %s71 = int_to_ptr.vmem [resolvable:$true] %s70
      %76 = dma.vmem_to_hbm [thread:$0]  %s71, 256, %s3, [#allocation3], 128, 128, 8
    $region17: #{encoder_decoder_forward.44} parent=1 // pred_fallthru
      _
    // Predicated region
    $region18: #{encoder_decoder_forward.44} parent=1 // pred_check
      _
    $region19: #{encoder_decoder_forward.44} parent=1 // pred_check_branch
      %78 = sbr.rel (0) target = $region21
    $region20: #{encoder_decoder_forward.44} parent=1 // pred_region
      %79 = dma.done [#allocation3], 256
    $region21: #{encoder_decoder_forward.44} parent=1 // pred_fallthru
      _
    %80 = vsyncpa [#allocation3], 1

// kernel: encoder_decoder_forward.47
$region0: #{encoder_decoder_forward.47}
  #allocation0 [shape = 'u32[]', space=smem, size = 0x4, offset = 0x4, fixed_abs, tag = 'smem constant byte address 0x4 - core index']
  #allocation1 [shape = 'u32[144,128]{1,0:T(1,128)}', space=vmem, size = 0x12000, scoped, tag = 'internal scratch']
  %s0 = inlined_call_operand.hbm [shape: f32[16,32], index: 0, kind: input, shape index: {}]
  %s1 = inlined_call_operand.hbm [shape: f32[16,32], index: 1, kind: input, shape index: {}]
  %s2 = inlined_call_operand.hbm [shape: f32[32,32], index: 2, kind: input, shape index: {}]
  %s3 = inlined_call_operand.hbm [shape: f32[1,32], index: 3, kind: input, shape index: {}]
  %s4 = inlined_call_operand.hbm [shape: f32[1,32], index: 4, kind: input, shape index: {}]
  %s5 = inlined_call_operand.hbm [shape: f32[1,32], index: 5, kind: input, shape index: {}]
  %s6 = inlined_call_operand.hbm [shape: f32[16,32], index: 6, kind: output, shape index: {}]
  %s7 = sld [smem:[#allocation0]]
  $region58: #{encoder_decoder_forward.47} parent=0
    _
  %s9 = ssub.s32 1, %s7
  %s10 = scalar_select 0, %s9, %s7
  $region1: #{encoder_decoder_forward.47} parent=0
    #allocation2 [shape = 'u8[8192]{0}', space=vmem, size = 0x2000, scoped, tag = 'input window, operand 0, single buffered']
    #allocation3 [shape = 's32[1]{0}', space=sflag, size = 0x4, scoped, tag = 'scoped memory for encoder_decoder_forward.47']
    #allocation4 [shape = 's32[1]{0}', space=sflag, size = 0x4, scoped, tag = 'scoped memory for encoder_decoder_forward.47']
    #allocation5 [shape = 'u8[8192]{0}', space=vmem, size = 0x2000, scoped, tag = 'input window, operand 1, single buffered']
    #allocation6 [shape = 's32[1]{0}', space=sflag, size = 0x4, scoped, tag = 'scoped memory for encoder_decoder_forward.47']
    #allocation7 [shape = 'u8[16384]{0}', space=vmem, size = 0x4000, scoped, tag = 'input window, operand 2, single buffered']
    #allocation8 [shape = 'u8[512]{0}', space=vmem, size = 0x400, scoped, tag = 'input window, operand 3, single buffered']
    #allocation9 [shape = 's32[1]{0}', space=sflag, size = 0x4, scoped, tag = 'scoped memory for encoder_decoder_forward.47']
    #allocation10 [shape = 'u8[512]{0}', space=vmem, size = 0x400, scoped, tag = 'input window, operand 4, single buffered']
    #allocation11 [shape = 'u8[512]{0}', space=vmem, size = 0x400, scoped, tag = 'input window, operand 5, single buffered']
    #allocation12 [shape = 's32[1]{0}', space=sflag, size = 0x4, scoped, tag = 'scoped memory for encoder_decoder_forward.47']
    #allocation13 [shape = 'u8[8192]{0}', space=vmem, size = 0x2000, scoped, tag = 'output window, operand 0, single buffered']
    %11 = vsyncpa [#allocation3], 0
    %12 = vsyncpa [#allocation6], 0
    %13 = vsyncpa [#allocation9], 0
    %14 = vsyncpa [#allocation12], 0
    %15 = vsyncpa [#allocation4], 0
    // Predicated region
    $region2: #{encoder_decoder_forward.47} parent=1 // pred_check
      _
    $region3: #{encoder_decoder_forward.47} parent=1 // pred_check_branch
      %17 = sbr.rel (0) target = $region5
    $region4: #{encoder_decoder_forward.47} parent=1 // pred_region
      %s19 = ssub.s32 256, 256
      %20 = vsyncadd [#allocation3], %s19
      %s21 = sshll.u32 [#allocation2], 4
      %s22 = int_to_ptr.vmem [resolvable:$true] %s21
      %27 = dma.hbm_to_vmem [thread:$0]  %s0, 256, %s22, [#allocation3], 128, 128, 8
    $region5: #{encoder_decoder_forward.47} parent=1 // pred_fallthru
      _
    // Predicated region
    $region6: #{encoder_decoder_forward.47} parent=1 // pred_check
      _
    $region7: #{encoder_decoder_forward.47} parent=1 // pred_check_branch
      %29 = sbr.rel (0) target = $region9
    $region8: #{encoder_decoder_forward.47} parent=1 // pred_region
      %s31 = ssub.s32 256, 256
      %32 = vsyncadd [#allocation6], %s31
      %s33 = sshll.u32 [#allocation5], 4
      %s34 = int_to_ptr.vmem [resolvable:$true] %s33
      %39 = dma.hbm_to_vmem [thread:$0]  %s1, 256, %s34, [#allocation6], 128, 128, 8
    $region9: #{encoder_decoder_forward.47} parent=1 // pred_fallthru
      _
    // Predicated region
    $region10: #{encoder_decoder_forward.47} parent=1 // pred_check
      _
    $region11: #{encoder_decoder_forward.47} parent=1 // pred_check_branch
      %41 = sbr.rel (0) target = $region13
    $region12: #{encoder_decoder_forward.47} parent=1 // pred_region
      %s43 = ssub.s32 512, 512
      %44 = vsyncadd [#allocation6], %s43
      %s45 = sshll.u32 [#allocation7], 4
      %s46 = int_to_ptr.vmem [resolvable:$true] %s45
      %51 = dma.hbm_to_vmem [thread:$0]  %s2, 512, %s46, [#allocation6], 128, 128, 8
    $region13: #{encoder_decoder_forward.47} parent=1 // pred_fallthru
      _
    // Predicated region
    $region14: #{encoder_decoder_forward.47} parent=1 // pred_check
      _
    $region15: #{encoder_decoder_forward.47} parent=1 // pred_check_branch
      %53 = sbr.rel (0) target = $region17
    $region16: #{encoder_decoder_forward.47} parent=1 // pred_region
      %s55 = ssub.s32 16, 16
      %56 = vsyncadd [#allocation9], %s55
      %s58 = sshll.u32 [#allocation8], 4
      %s59 = int_to_ptr.vmem [resolvable:$true] %s58
      %61 = dma.hbm_to_vmem [thread:$0]  %s3, 16, %s59, [#allocation9]
    $region17: #{encoder_decoder_forward.47} parent=1 // pred_fallthru
      _
    // Predicated region
    $region18: #{encoder_decoder_forward.47} parent=1 // pred_check
      _
    $region19: #{encoder_decoder_forward.47} parent=1 // pred_check_branch
      %63 = sbr.rel (0) target = $region21
    $region20: #{encoder_decoder_forward.47} parent=1 // pred_region
      %s65 = ssub.s32 16, 16
      %66 = vsyncadd [#allocation9], %s65
      %s68 = sshll.u32 [#allocation10], 4
      %s69 = int_to_ptr.vmem [resolvable:$true] %s68
      %71 = dma.hbm_to_vmem [thread:$0]  %s4, 16, %s69, [#allocation9]
    $region21: #{encoder_decoder_forward.47} parent=1 // pred_fallthru
      _
    // Predicated region
    $region22: #{encoder_decoder_forward.47} parent=1 // pred_check
      _
    $region23: #{encoder_decoder_forward.47} parent=1 // pred_check_branch
      %73 = sbr.rel (0) target = $region25
    $region24: #{encoder_decoder_forward.47} parent=1 // pred_region
      %s75 = ssub.s32 16, 16
      %76 = vsyncadd [#allocation12], %s75
      %s78 = sshll.u32 [#allocation11], 4
      %s79 = int_to_ptr.vmem [resolvable:$true] %s78
      %81 = dma.hbm_to_vmem [thread:$0]  %s5, 16, %s79, [#allocation12]
    $region25: #{encoder_decoder_forward.47} parent=1 // pred_fallthru
      _
    // Predicated region
    $region26: #{encoder_decoder_forward.47} parent=1 // pred_check
      _
    $region27: #{encoder_decoder_forward.47} parent=1 // pred_check_branch
      %83 = sbr.rel (0) target = $region29
    $region28: #{encoder_decoder_forward.47} parent=1 // pred_region
      %84 = dma.done [#allocation3], 256
    $region29: #{encoder_decoder_forward.47} parent=1 // pred_fallthru
      _
    // Predicated region
    $region30: #{encoder_decoder_forward.47} parent=1 // pred_check
      _
    $region31: #{encoder_decoder_forward.47} parent=1 // pred_check_branch
      %86 = sbr.rel (0) target = $region33
    $region32: #{encoder_decoder_forward.47} parent=1 // pred_region
      %87 = dma.done [#allocation6], 256
    $region33: #{encoder_decoder_forward.47} parent=1 // pred_fallthru
      _
    // Predicated region
    $region34: #{encoder_decoder_forward.47} parent=1 // pred_check
      _
    $region35: #{encoder_decoder_forward.47} parent=1 // pred_check_branch
      %89 = sbr.rel (0) target = $region37
    $region36: #{encoder_decoder_forward.47} parent=1 // pred_region
      %90 = dma.done [#allocation6], 512
    $region37: #{encoder_decoder_forward.47} parent=1 // pred_fallthru
      _
    // Predicated region
    $region38: #{encoder_decoder_forward.47} parent=1 // pred_check
      _
    $region39: #{encoder_decoder_forward.47} parent=1 // pred_check_branch
      %92 = sbr.rel (0) target = $region41
    $region40: #{encoder_decoder_forward.47} parent=1 // pred_region
      %93 = dma.done [#allocation9], 16
    $region41: #{encoder_decoder_forward.47} parent=1 // pred_fallthru
      _
    // Predicated region
    $region42: #{encoder_decoder_forward.47} parent=1 // pred_check
      _
    $region43: #{encoder_decoder_forward.47} parent=1 // pred_check_branch
      %95 = sbr.rel (0) target = $region45
    $region44: #{encoder_decoder_forward.47} parent=1 // pred_region
      %96 = dma.done [#allocation9], 16
    $region45: #{encoder_decoder_forward.47} parent=1 // pred_fallthru
      _
    // Predicated region
    $region46: #{encoder_decoder_forward.47} parent=1 // pred_check
      _
    $region47: #{encoder_decoder_forward.47} parent=1 // pred_check_branch
      %98 = sbr.rel (0) target = $region49
    $region48: #{encoder_decoder_forward.47} parent=1 // pred_region
      %99 = dma.done [#allocation12], 16
    $region49: #{encoder_decoder_forward.47} parent=1 // pred_fallthru
      _
    %v101 = vld [vmem:[#allocation2] sm:$0xff]
    %v102 = vld [vmem:[#allocation2 + $0x8] sm:$0xff]
    %v103 = vpack.c.bf16 %v102, %v101
    %v104 = vld [vmem:[#allocation7] sm:$0xff]
    %v105 = vld [vmem:[#allocation7 + $0x8] sm:$0xff]
    %v106 = vld [vmem:[#allocation7 + $0x10] sm:$0xff]
    %v107 = vld [vmem:[#allocation7 + $0x18] sm:$0xff]
    %v108 = vpack.c.bf16 %v105, %v104
    %v109 = vpack.c.bf16 %v107, %v106
    %v110 = vld [vmem:[#allocation8] sm:$0x1]
    %v112 = vlaneseq
    %v113 = vshrl.u32 %v112, 7
    %v114 = vsub.s32 0, %v113
    %v115 = vrot.slane %v110, %v114
    %vm117 = vcmask 261120
    %v119 = vsel %vm117, %v103, 0
    %121 = vmatprep.subr.bf16.mxu0 0
    %122 = vmatpush1.bf16.msra.mxu0 %v108
    %123 = vmatprep.subr.bf16.mxu0 0
    %124 = vmatpush1.bf16.msra.mxu0 %v109
    %125 = vmatprep.subr.bf16.mxu0 0
    %126 = vmatpush1.bf16.msra.mxu0 0
    %127 = vmatprep.subr.bf16.mxu0 0
    %128 = vmatpush1.bf16.msra.mxu0 0
    %129 = vmatprep.subr.bf16.mxu0 0
    %130 = vmatpush1.bf16.msra.mxu0 0
    %131 = vmatprep.subr.bf16.mxu0 0
    %132 = vmatpush1.bf16.msra.mxu0 0
    %133 = vmatprep.subr.bf16.mxu0 0
    %134 = vmatpush1.bf16.msra.mxu0 0
    %135 = vmatprep.subr.bf16.mxu0 0
    %136 = vmatpush1.bf16.msra.mxu0 0
    %137 = vmatprep.subr.bf16.mxu0 0
    %138 = vmatpush1.bf16.msra.mxu0 0
    %139 = vmatprep.subr.bf16.mxu0 0
    %140 = vmatpush1.bf16.msra.mxu0 0
    %141 = vmatprep.subr.bf16.mxu0 0
    %142 = vmatpush1.bf16.msra.mxu0 0
    %143 = vmatprep.subr.bf16.mxu0 0
    %144 = vmatpush1.bf16.msra.mxu0 0
    %145 = vmatprep.subr.bf16.mxu0 0
    %146 = vmatpush1.bf16.msra.mxu0 0
    %147 = vmatprep.subr.bf16.mxu0 0
    %148 = vmatpush1.bf16.msra.mxu0 0
    %149 = vmatprep.subr.bf16.mxu0 0
    %150 = vmatpush1.bf16.msra.mxu0 0
    %151 = vmatprep.subr.bf16.mxu0 0
    %152 = vmatpush1.bf16.msra.mxu0 0
    %153 = vmatprep.mubr.bf16.mxu0 0
    %154 = vmatmul.mubr.bf16.gmra.mrb[0].mxu0 %v119
    %v155 = vpop.f32.mrb[0].mxu0
    %v156 = vadd.f32 %v115, %v155
    %v157 = vpop.f32.mrb[0].mxu0
    %v158 = vpop.f32.mrb[0].mxu0
    %v159 = vadd.f32 %v115, %v158
    %v160 = vpop.f32.mrb[0].mxu0
    %161 = vdwg.mxu0
    %v162 = vld [vmem:[#allocation5] sm:$0xff]
    %v163 = vld [vmem:[#allocation5 + $0x8] sm:$0xff]
    %v164 = vadd.f32 %v156, %v162
    %v165 = vadd.f32 %v159, %v163
    %v166 = vld [vmem:[#allocation10] sm:$0x1]
    %v167 = vld [vmem:[#allocation11] sm:$0x1]
    %v168 = vsel %vm117, %v164, 0.0
    %169 = vadd.xlane.f32.xlu0 %v168
    %v170 = vpop.xlane.xlu0 %169
    %v171 = vsel %vm117, %v165, 0.0
    %172 = vadd.xlane.f32.xlu0 %v171
    %v173 = vpop.xlane.xlu0 %172
    %v174 = vrcp.pop 32.0
    %v175 = vmul.f32 %v170, %v174
    %v176 = vmul.f32 %v173, %v174
    %v177 = vsub.f32 %v164, %v175
    %v178 = vsub.f32 %v165, %v176
    %v179 = vmul.f32 %v177, %v177
    %v180 = vmul.f32 %v178, %v178
    %v181 = vsel %vm117, %v179, 0.0
    %182 = vadd.xlane.f32.xlu0 %v181
    %v183 = vpop.xlane.xlu0 %182
    %v184 = vsel %vm117, %v180, 0.0
    %185 = vadd.xlane.f32.xlu0 %v184
    %v186 = vpop.xlane.xlu0 %185
    %v187 = vmul.f32 %v183, %v174
    %v188 = vmul.f32 %v186, %v174
    %v189 = vadd.f32 %v187, 1e-12
    %v190 = vadd.f32 %v188, 1e-12
    %v191 = vrsqrt.pop %v189
    %v192 = vrsqrt.pop %v190
    %v193 = vmul.f32 %v177, %v191
    %v194 = vmul.f32 %v178, %v192
    %v196 = vlaneseq
    %v197 = vshrl.u32 %v196, 7
    %v198 = vsub.s32 0, %v197
    %v199 = vrot.slane %v166, %v198
    %v201 = vmul.f32 %v193, %v199
    %v202 = vmul.f32 %v194, %v199
    %v204 = vlaneseq
    %v205 = vshrl.u32 %v204, 7
    %v206 = vsub.s32 0, %v205
    %v207 = vrot.slane %v167, %v206
    %v209 = vadd.f32 %v201, %v207
    %v210 = vadd.f32 %v202, %v207
    %211 = vst.msk [vmem:[#allocation13] sm:$0xff] %vm117, %v209
    %212 = vst.msk [vmem:[#allocation13 + $0x8] sm:$0xff] %vm117, %v210
    // Predicated region
    $region50: #{encoder_decoder_forward.47} parent=1 // pred_check
      _
    $region51: #{encoder_decoder_forward.47} parent=1 // pred_check_branch
      %214 = sbr.rel (0) target = $region53
    $region52: #{encoder_decoder_forward.47} parent=1 // pred_region
      %s216 = ssub.s32 256, 256
      %217 = vsyncadd [#allocation4], %s216
      %s218 = sshll.u32 [#allocation13], 4
      %s219 = int_to_ptr.vmem [resolvable:$true] %s218
      %224 = dma.vmem_to_hbm [thread:$0]  %s219, 256, %s6, [#allocation4], 128, 128, 8
    $region53: #{encoder_decoder_forward.47} parent=1 // pred_fallthru
      _
    // Predicated region
    $region54: #{encoder_decoder_forward.47} parent=1 // pred_check
      _
    $region55: #{encoder_decoder_forward.47} parent=1 // pred_check_branch
      %226 = sbr.rel (0) target = $region57
    $region56: #{encoder_decoder_forward.47} parent=1 // pred_region
      %227 = dma.done [#allocation4], 256
    $region57: #{encoder_decoder_forward.47} parent=1 // pred_fallthru
      _
    %228 = vsyncpa [#allocation3], 1
    %229 = vsyncpa [#allocation6], 1
    %230 = vsyncpa [#allocation9], 1
    %231 = vsyncpa [#allocation12], 1
    %232 = vsyncpa [#allocation4], 1

// kernel: encoder_decoder_forward.46
$region0: #{encoder_decoder_forward.46}
  #allocation0 [shape = 'u32[]', space=smem, size = 0x4, offset = 0x4, fixed_abs, tag = 'smem constant byte address 0x4 - core index']
  #allocation1 [shape = 'u32[144,128]{1,0:T(1,128)}', space=vmem, size = 0x12000, scoped, tag = 'internal scratch']
  %s0 = inlined_call_operand.hbm [shape: f32[2,8,96], index: 0, kind: input, shape index: {}]
  %s1 = inlined_call_operand.hbm [shape: f32[2,8,32], index: 1, kind: output, shape index: {}]
  %s2 = sld [smem:[#allocation0]]
  $region41: #{encoder_decoder_forward.46} parent=0
    _
  %s4 = ssub.s32 1, %s2
  %s5 = scalar_select 0, %s4, %s2
  $region1: #{encoder_decoder_forward.46} parent=0
    #allocation2 [shape = 'u8[8192]{0}', space=vmem, size = 0x2000, scoped, tag = 'input window, operand 0']
    #allocation3 [shape = 's32[2]{0}', space=sflag, size = 0x8, scoped, tag = 'scoped memory for encoder_decoder_forward.46']
    #allocation4 [shape = 's32[2]{0}', space=sflag, size = 0x8, scoped, tag = 'scoped memory for encoder_decoder_forward.46']
    #allocation5 [shape = 'u8[8192]{0}', space=vmem, size = 0x2000, scoped, tag = 'output window, operand 0']
    %6 = vsyncpa [#allocation3], 0
    %s7 = scalar_lea.sflag [#allocation3], 1
    %8 = vsyncpa %s7, 0
    %9 = vsyncpa [#allocation4], 0
    %s10 = scalar_lea.sflag [#allocation4], 1
    %11 = vsyncpa %s10, 0
    loop: start=0, step=1, limit=4
    $region2: #{encoder_decoder_forward.46} parent=1 // loop_pre_header
      _
    $region3: #{encoder_decoder_forward.46} parent=1 // loop_header
      %s13 = sphi 0, %s17
      %p14 = scmp.ge.s32.totalorder %s13, 4
      %s23 = sphi 0, %s25
      %s26 = sphi 0, %s23
      %s27 = sphi 0, %s26
      %s43 = sphi 0, %s27
      %s49 = sphi 0, %s51
      %s52 = sphi 0, %s49
      %s53 = sphi 0, %s52
      %s69 = sphi 0, %s53
    $region4: #{encoder_decoder_forward.46} parent=1 // loop_header_branch
      %16 = sbr.rel (%p14) target = $region8
    $region5: #{encoder_decoder_forward.46} parent=1 // loop_body
      %s18 = ssub.s32 %s13, 1
      %s19 = ssub.s32 %s13, 2
      %s20 = sadd.s32 %s13, 1
      %s21 = ssub.s32 %s13, %s20
      %p22 = scmp.eq.s32.totalorder %s21, 0
      %s24 = sadd.s32 %s23, 1
      %s25 = scalar_select %p22, %s23, %s24
      %p28 = pneg %p22
      %p29 = scmp.eq.s32.totalorder %s13, 1
      %p30 = por %p28, %p29
      %p31 = scmp.ne.s32.totalorder %s23, %s26
      %p32 = scmp.eq.s32.totalorder %s13, 0
      %p33 = por %p31, %p32
      %p34 = scmp.ne.s32.totalorder %s23, %s26
      %p35 = scmp.eq.s32.totalorder %s18, 1
      %p36 = por %p34, %p35
      %p37 = scmp.ne.s32.totalorder %s26, %s27
      %p38 = scmp.eq.s32.totalorder %s18, 0
      %p39 = por %p37, %p38
      %p40 = scmp.ne.s32.totalorder %s26, %s27
      %p41 = scmp.eq.s32.totalorder %s19, 1
      %p42 = por %p40, %p41
      %p44 = scmp.ne.s32.totalorder %s27, %s43
      %p45 = scmp.eq.s32.totalorder %s19, 0
      %p46 = por %p44, %p45
      %s47 = ssub.s32 %s13, %s20
      %p48 = scmp.eq.s32.totalorder %s47, 0
      %s50 = sadd.s32 %s49, 1
      %s51 = scalar_select %p48, %s49, %s50
      %p54 = pneg %p48
      %p55 = scmp.eq.s32.totalorder %s13, 1
      %p56 = por %p54, %p55
      %p57 = scmp.ne.s32.totalorder %s49, %s52
      %p58 = scmp.eq.s32.totalorder %s13, 0
      %p59 = por %p57, %p58
      %p60 = scmp.ne.s32.totalorder %s49, %s52
      %p61 = scmp.eq.s32.totalorder %s18, 1
      %p62 = por %p60, %p61
      %p63 = scmp.ne.s32.totalorder %s52, %s53
      %p64 = scmp.eq.s32.totalorder %s18, 0
      %p65 = por %p63, %p64
      %p66 = scmp.ne.s32.totalorder %s52, %s53
      %p67 = scmp.eq.s32.totalorder %s19, 1
      %p68 = por %p66, %p67
      %p70 = scmp.ne.s32.totalorder %s53, %s69
      %p71 = scmp.eq.s32.totalorder %s19, 0
      %p72 = por %p70, %p71
      %p73 = scmp.le.s32.totalorder 1, %s13
      %p74 = scmp.lt.s32.totalorder %s13, 3
      %p75 = pnand %p73, %p74
      %p76 = pneg %p75
      // Predicated region
      $region9: #{encoder_decoder_forward.46} parent=5 // pred_check
        _
      $region10: #{encoder_decoder_forward.46} parent=5 // pred_check_branch
        %78 = sbr.rel (%p75) target = $region12
      $region11: #{encoder_decoder_forward.46} parent=5 // pred_region
        %s79 = ssub.s32 %s13, 1
      $region12: #{encoder_decoder_forward.46} parent=5 // pred_fallthru
        _
      %p80 = scmp.lt.s32.totalorder %s13, 2
      // Predicated region
      $region13: #{encoder_decoder_forward.46} parent=5 // pred_check
        %p81 = pneg %p80
      $region14: #{encoder_decoder_forward.46} parent=5 // pred_check_branch
        %83 = sbr.rel (%p81) target = $region16
      $region15: #{encoder_decoder_forward.46} parent=5 // pred_region
        // Predicated region
        $region17: #{encoder_decoder_forward.46} parent=15 // pred_check
          %p84 = pneg %p33
        $region18: #{encoder_decoder_forward.46} parent=15 // pred_check_branch
          %86 = sbr.rel (%p84) target = $region20
        $region19: #{encoder_decoder_forward.46} parent=15 // pred_region
          %s87 = sand.u32 %s23, 1
          %s88 = scalar_lea.sflag [#allocation3], %s87
          %s89 = sand.u32 %s23, 1
          %s90 = smul.addr %s89, 8
          %s91 = scalar_lea.vmem [#allocation2], %s90
          %s93 = ssub.s32 128, 128
          %94 = vsyncadd %s88, %s93
          %s95 = smul.addr %s13, 128
          %s96 = scalar_lea.hbm %s0, %s95
          %s98 = sshll.u32 %s91, 4
          %s99 = int_to_ptr.vmem [resolvable:$true] %s98
          %101 = dma.hbm_to_vmem [thread:$0]  %s96, 128, %s99, %s88
        $region20: #{encoder_decoder_forward.46} parent=15 // pred_fallthru
          _
      $region16: #{encoder_decoder_forward.46} parent=5 // pred_fallthru
        _
      %p102 = scmp.le.s32.totalorder 1, %s13
      %p103 = scmp.lt.s32.totalorder %s13, 3
      %p104 = pnand %p102, %p103
      %p105 = pneg %p104
      // Predicated region
      $region21: #{encoder_decoder_forward.46} parent=5 // pred_check
        _
      $region22: #{encoder_decoder_forward.46} parent=5 // pred_check_branch
        %107 = sbr.rel (%p104) target = $region24
      $region23: #{encoder_decoder_forward.46} parent=5 // pred_region
        %s108 = ssub.s32 %s13, 1
        %s109 = sand.u32 %s26, 1
        %s110 = scalar_lea.sflag [#allocation3], %s109
        %s111 = sand.u32 %s26, 1
        %s112 = smul.addr %s111, 8
        %s113 = scalar_lea.vmem [#allocation2], %s112
        // Predicated region
        $region25: #{encoder_decoder_forward.46} parent=23 // pred_check
          %p114 = pneg %p39
        $region26: #{encoder_decoder_forward.46} parent=23 // pred_check_branch
          %116 = sbr.rel (%p114) target = $region28
        $region27: #{encoder_decoder_forward.46} parent=23 // pred_region
          %117 = dma.done %s110, 128
        $region28: #{encoder_decoder_forward.46} parent=23 // pred_fallthru
          _
        %s118 = sand.u32 %s26, 1
        %s119 = scalar_lea.sflag [#allocation3], %s118
        %s120 = sand.u32 %s26, 1
        %s121 = smul.addr %s120, 8
        %s122 = scalar_lea.vmem [#allocation2], %s121
        %p123 = pneg %p39
        %p124 = pneg %p36
        %p125 = pneg %p65
        %p126 = pneg %p62
        %s127 = sand.u32 %s52, 1
        %s128 = scalar_lea.sflag [#allocation4], %s127
        %s129 = sand.u32 %s52, 1
        %s130 = smul.addr %s129, 8
        %s131 = scalar_lea.vmem [#allocation5], %s130
        %v133 = vlaneseq
        %v134 = vshrl.u32 %v133, 7
        %v135 = vlaneseq
        %v136 = vand.u32 %v135, 127
        %vm137 = vcmp.le.s32.totalorder %v136, %v134
        %v138 = vsel %vm137, 0.0, -1e+09
        %v139 = vld [vmem:[%s113] sm:$0xff]
        %v140 = vpack.c.bf16 %v139, %v139
        %142 = vrot.lane.b32.xlu0 %v140, 96
        %v143 = vpop.permute.xlu0 %142
        %vm144 = vcmask 64512
        %v146 = vsel %vm144, %v140, 0
        %v149 = vsel %vm144, %v143, 0
        %151 = vmatprep.subr.bf16.mxu0 0
        %152 = vmatpush1.bf16.xpose.msra.mxu0 %v149
        %153 = vmatprep.subr.bf16.mxu0 0
        %154 = vmatpush1.bf16.xpose.msra.mxu0 0
        %155 = vmatprep.subr.bf16.mxu0 0
        %156 = vmatpush1.bf16.xpose.msra.mxu0 0
        %157 = vmatprep.subr.bf16.mxu0 0
        %158 = vmatpush1.bf16.xpose.msra.mxu0 0
        %159 = vmatprep.subr.bf16.mxu0 0
        %160 = vmatpush1.bf16.xpose.msra.mxu0 0
        %161 = vmatprep.subr.bf16.mxu0 0
        %162 = vmatpush1.bf16.xpose.msra.mxu0 0
        %163 = vmatprep.subr.bf16.mxu0 0
        %164 = vmatpush1.bf16.xpose.msra.mxu0 0
        %165 = vmatprep.subr.bf16.mxu0 0
        %166 = vmatpush1.bf16.xpose.msra.mxu0 0
        %167 = vmatprep.subr.bf16.mxu0 0
        %168 = vmatpush1.bf16.xpose.msra.mxu0 0
        %169 = vmatprep.subr.bf16.mxu0 0
        %170 = vmatpush1.bf16.xpose.msra.mxu0 0
        %171 = vmatprep.subr.bf16.mxu0 0
        %172 = vmatpush1.bf16.xpose.msra.mxu0 0
        %173 = vmatprep.subr.bf16.mxu0 0
        %174 = vmatpush1.bf16.xpose.msra.mxu0 0
        %175 = vmatprep.subr.bf16.mxu0 0
        %176 = vmatpush1.bf16.xpose.msra.mxu0 0
        %177 = vmatprep.subr.bf16.mxu0 0
        %178 = vmatpush1.bf16.xpose.msra.mxu0 0
        %179 = vmatprep.subr.bf16.mxu0 0
        %180 = vmatpush1.bf16.xpose.msra.mxu0 0
        %181 = vmatprep.subr.bf16.mxu0 0
        %182 = vmatpush1.bf16.xpose.msra.mxu0 0
        %183 = vmatprep.mubr.bf16.mxu0 0
        %184 = vmatmul.mubr.bf16.gmra.mrb[0].mxu0 %v146
        %v185 = vpop.f32.mrb[0].mxu0
        %v186 = vadd.f32 0.0, %v185
        %v187 = vpop.f32.mrb[0].mxu0
        %v188 = vpop.f32.mrb[0].mxu0
        %v189 = vpop.f32.mrb[0].mxu0
        %190 = vdwg.mxu0
        %v191 = vmul.f32 %v186, 0.35355338
        %v192 = vadd.f32 %v191, %v138
        %v193 = vsel %vm144, %v192, -inf
        %194 = vmax.xlane.f32.xlu0 %v193
        %v195 = vpop.xlane.xlu0 %194
        %v196 = vsub.f32 %v192, %v195
        %v197 = vmul.f32 %v196, 1.442695
        %v198 = vpow.pop %v197
        %v199 = vsel %vm144, %v198, 0.0
        %200 = vadd.xlane.f32.xlu0 %v199
        %v201 = vpop.xlane.xlu0 %200
        %v202 = vrcp.pop %v201
        %v203 = vmul.f32 %v198, %v202
        %v204 = vpack.c.bf16 %v203, %v203
        %205 = vrot.lane.b32.xlu0 %v140, 64
        %v206 = vpop.permute.xlu0 %205
        %v208 = vsel %vm144, %v204, 0
        %vm210 = vcmask 1043456
        %v212 = vsel %vm210, %v206, 0
        %214 = vmatprep.subr.bf16.mxu0 0
        %215 = vmatpush1.bf16.msra.mxu0 %v212
        %216 = vmatprep.subr.bf16.mxu0 0
        %217 = vmatpush1.bf16.msra.mxu0 0
        %218 = vmatprep.subr.bf16.mxu0 0
        %219 = vmatpush1.bf16.msra.mxu0 0
        %220 = vmatprep.subr.bf16.mxu0 0
        %221 = vmatpush1.bf16.msra.mxu0 0
        %222 = vmatprep.subr.bf16.mxu0 0
        %223 = vmatpush1.bf16.msra.mxu0 0
        %224 = vmatprep.subr.bf16.mxu0 0
        %225 = vmatpush1.bf16.msra.mxu0 0
        %226 = vmatprep.subr.bf16.mxu0 0
        %227 = vmatpush1.bf16.msra.mxu0 0
        %228 = vmatprep.subr.bf16.mxu0 0
        %229 = vmatpush1.bf16.msra.mxu0 0
        %230 = vmatprep.subr.bf16.mxu0 0
        %231 = vmatpush1.bf16.msra.mxu0 0
        %232 = vmatprep.subr.bf16.mxu0 0
        %233 = vmatpush1.bf16.msra.mxu0 0
        %234 = vmatprep.subr.bf16.mxu0 0
        %235 = vmatpush1.bf16.msra.mxu0 0
        %236 = vmatprep.subr.bf16.mxu0 0
        %237 = vmatpush1.bf16.msra.mxu0 0
        %238 = vmatprep.subr.bf16.mxu0 0
        %239 = vmatpush1.bf16.msra.mxu0 0
        %240 = vmatprep.subr.bf16.mxu0 0
        %241 = vmatpush1.bf16.msra.mxu0 0
        %242 = vmatprep.subr.bf16.mxu0 0
        %243 = vmatpush1.bf16.msra.mxu0 0
        %244 = vmatprep.subr.bf16.mxu0 0
        %245 = vmatpush1.bf16.msra.mxu0 0
        %246 = vmatprep.mubr.bf16.mxu0 0
        %247 = vmatmul.mubr.bf16.gmra.mrb[0].mxu0 %v208
        %v248 = vpop.f32.mrb[0].mxu0
        %v249 = vadd.f32 0.0, %v248
        %v250 = vpop.f32.mrb[0].mxu0
        %v251 = vpop.f32.mrb[0].mxu0
        %v252 = vpop.f32.mrb[0].mxu0
        %253 = vdwg.mxu0
        %254 = vrot.lane.b32.xlu0 %v140, 120
        %v255 = vpop.permute.xlu0 %254
        %256 = vrot.lane.b32.xlu0 %v140, 88
        %v257 = vpop.permute.xlu0 %256
        %v259 = vsel %vm144, %v255, 0
        %v262 = vsel %vm144, %v257, 0
        %264 = vmatprep.subr.bf16.mxu0 0
        %265 = vmatpush1.bf16.xpose.msra.mxu0 %v262
        %266 = vmatprep.subr.bf16.mxu0 0
        %267 = vmatpush1.bf16.xpose.msra.mxu0 0
        %268 = vmatprep.subr.bf16.mxu0 0
        %269 = vmatpush1.bf16.xpose.msra.mxu0 0
        %270 = vmatprep.subr.bf16.mxu0 0
        %271 = vmatpush1.bf16.xpose.msra.mxu0 0
        %272 = vmatprep.subr.bf16.mxu0 0
        %273 = vmatpush1.bf16.xpose.msra.mxu0 0
        %274 = vmatprep.subr.bf16.mxu0 0
        %275 = vmatpush1.bf16.xpose.msra.mxu0 0
        %276 = vmatprep.subr.bf16.mxu0 0
        %277 = vmatpush1.bf16.xpose.msra.mxu0 0
        %278 = vmatprep.subr.bf16.mxu0 0
        %279 = vmatpush1.bf16.xpose.msra.mxu0 0
        %280 = vmatprep.subr.bf16.mxu0 0
        %281 = vmatpush1.bf16.xpose.msra.mxu0 0
        %282 = vmatprep.subr.bf16.mxu0 0
        %283 = vmatpush1.bf16.xpose.msra.mxu0 0
        %284 = vmatprep.subr.bf16.mxu0 0
        %285 = vmatpush1.bf16.xpose.msra.mxu0 0
        %286 = vmatprep.subr.bf16.mxu0 0
        %287 = vmatpush1.bf16.xpose.msra.mxu0 0
        %288 = vmatprep.subr.bf16.mxu0 0
        %289 = vmatpush1.bf16.xpose.msra.mxu0 0
        %290 = vmatprep.subr.bf16.mxu0 0
        %291 = vmatpush1.bf16.xpose.msra.mxu0 0
        %292 = vmatprep.subr.bf16.mxu0 0
        %293 = vmatpush1.bf16.xpose.msra.mxu0 0
        %294 = vmatprep.subr.bf16.mxu0 0
        %295 = vmatpush1.bf16.xpose.msra.mxu0 0
        %296 = vmatprep.mubr.bf16.mxu0 0
        %297 = vmatmul.mubr.bf16.gmra.mrb[0].mxu0 %v259
        %v298 = vpop.f32.mrb[0].mxu0
        %v299 = vadd.f32 0.0, %v298
        %v300 = vpop.f32.mrb[0].mxu0
        %v301 = vpop.f32.mrb[0].mxu0
        %v302 = vpop.f32.mrb[0].mxu0
        %303 = vdwg.mxu0
        %v304 = vmul.f32 %v299, 0.35355338
        %v305 = vadd.f32 %v304, %v138
        %v306 = vsel %vm144, %v305, -inf
        %307 = vmax.xlane.f32.xlu0 %v306
        %v308 = vpop.xlane.xlu0 %307
        %v309 = vsub.f32 %v305, %v308
        %v310 = vmul.f32 %v309, 1.442695
        %v311 = vpow.pop %v310
        %v312 = vsel %vm144, %v311, 0.0
        %313 = vadd.xlane.f32.xlu0 %v312
        %v314 = vpop.xlane.xlu0 %313
        %v315 = vrcp.pop %v314
        %v316 = vmul.f32 %v311, %v315
        %v317 = vpack.c.bf16 %v316, %v316
        %318 = vrot.lane.b32.xlu0 %v140, 56
        %v319 = vpop.permute.xlu0 %318
        %v321 = vsel %vm144, %v317, 0
        %v324 = vsel %vm210, %v319, 0
        %326 = vmatprep.subr.bf16.mxu0 0
        %327 = vmatpush1.bf16.msra.mxu0 %v324
        %328 = vmatprep.subr.bf16.mxu0 0
        %329 = vmatpush1.bf16.msra.mxu0 0
        %330 = vmatprep.subr.bf16.mxu0 0
        %331 = vmatpush1.bf16.msra.mxu0 0
        %332 = vmatprep.subr.bf16.mxu0 0
        %333 = vmatpush1.bf16.msra.mxu0 0
        %334 = vmatprep.subr.bf16.mxu0 0
        %335 = vmatpush1.bf16.msra.mxu0 0
        %336 = vmatprep.subr.bf16.mxu0 0
        %337 = vmatpush1.bf16.msra.mxu0 0
        %338 = vmatprep.subr.bf16.mxu0 0
        %339 = vmatpush1.bf16.msra.mxu0 0
        %340 = vmatprep.subr.bf16.mxu0 0
        %341 = vmatpush1.bf16.msra.mxu0 0
        %342 = vmatprep.subr.bf16.mxu0 0
        %343 = vmatpush1.bf16.msra.mxu0 0
        %344 = vmatprep.subr.bf16.mxu0 0
        %345 = vmatpush1.bf16.msra.mxu0 0
        %346 = vmatprep.subr.bf16.mxu0 0
        %347 = vmatpush1.bf16.msra.mxu0 0
        %348 = vmatprep.subr.bf16.mxu0 0
        %349 = vmatpush1.bf16.msra.mxu0 0
        %350 = vmatprep.subr.bf16.mxu0 0
        %351 = vmatpush1.bf16.msra.mxu0 0
        %352 = vmatprep.subr.bf16.mxu0 0
        %353 = vmatpush1.bf16.msra.mxu0 0
        %354 = vmatprep.subr.bf16.mxu0 0
        %355 = vmatpush1.bf16.msra.mxu0 0
        %356 = vmatprep.subr.bf16.mxu0 0
        %357 = vmatpush1.bf16.msra.mxu0 0
        %358 = vmatprep.mubr.bf16.mxu0 0
        %359 = vmatmul.mubr.bf16.gmra.mrb[0].mxu0 %v321
        %v360 = vpop.f32.mrb[0].mxu0
        %v361 = vadd.f32 0.0, %v360
        %v362 = vpop.f32.mrb[0].mxu0
        %v363 = vpop.f32.mrb[0].mxu0
        %v364 = vpop.f32.mrb[0].mxu0
        %365 = vdwg.mxu0
        %366 = vrot.lane.b32.xlu0 %v140, 112
        %v367 = vpop.permute.xlu0 %366
        %368 = vrot.lane.b32.xlu0 %v140, 80
        %v369 = vpop.permute.xlu0 %368
        %v371 = vsel %vm144, %v367, 0
        %v374 = vsel %vm144, %v369, 0
        %376 = vmatprep.subr.bf16.mxu0 0
        %377 = vmatpush1.bf16.xpose.msra.mxu0 %v374
        %378 = vmatprep.subr.bf16.mxu0 0
        %379 = vmatpush1.bf16.xpose.msra.mxu0 0
        %380 = vmatprep.subr.bf16.mxu0 0
        %381 = vmatpush1.bf16.xpose.msra.mxu0 0
        %382 = vmatprep.subr.bf16.mxu0 0
        %383 = vmatpush1.bf16.xpose.msra.mxu0 0
        %384 = vmatprep.subr.bf16.mxu0 0
        %385 = vmatpush1.bf16.xpose.msra.mxu0 0
        %386 = vmatprep.subr.bf16.mxu0 0
        %387 = vmatpush1.bf16.xpose.msra.mxu0 0
        %388 = vmatprep.subr.bf16.mxu0 0
        %389 = vmatpush1.bf16.xpose.msra.mxu0 0
        %390 = vmatprep.subr.bf16.mxu0 0
        %391 = vmatpush1.bf16.xpose.msra.mxu0 0
        %392 = vmatprep.subr.bf16.mxu0 0
        %393 = vmatpush1.bf16.xpose.msra.mxu0 0
        %394 = vmatprep.subr.bf16.mxu0 0
        %395 = vmatpush1.bf16.xpose.msra.mxu0 0
        %396 = vmatprep.subr.bf16.mxu0 0
        %397 = vmatpush1.bf16.xpose.msra.mxu0 0
        %398 = vmatprep.subr.bf16.mxu0 0
        %399 = vmatpush1.bf16.xpose.msra.mxu0 0
        %400 = vmatprep.subr.bf16.mxu0 0
        %401 = vmatpush1.bf16.xpose.msra.mxu0 0
        %402 = vmatprep.subr.bf16.mxu0 0
        %403 = vmatpush1.bf16.xpose.msra.mxu0 0
        %404 = vmatprep.subr.bf16.mxu0 0
        %405 = vmatpush1.bf16.xpose.msra.mxu0 0
        %406 = vmatprep.subr.bf16.mxu0 0
        %407 = vmatpush1.bf16.xpose.msra.mxu0 0
        %408 = vmatprep.mubr.bf16.mxu0 0
        %409 = vmatmul.mubr.bf16.gmra.mrb[0].mxu0 %v371
        %v410 = vpop.f32.mrb[0].mxu0
        %v411 = vadd.f32 0.0, %v410
        %v412 = vpop.f32.mrb[0].mxu0
        %v413 = vpop.f32.mrb[0].mxu0
        %v414 = vpop.f32.mrb[0].mxu0
        %415 = vdwg.mxu0
        %v416 = vmul.f32 %v411, 0.35355338
        %v417 = vadd.f32 %v416, %v138
        %v418 = vsel %vm144, %v417, -inf
        %419 = vmax.xlane.f32.xlu0 %v418
        %v420 = vpop.xlane.xlu0 %419
        %v421 = vsub.f32 %v417, %v420
        %v422 = vmul.f32 %v421, 1.442695
        %v423 = vpow.pop %v422
        %v424 = vsel %vm144, %v423, 0.0
        %425 = vadd.xlane.f32.xlu0 %v424
        %v426 = vpop.xlane.xlu0 %425
        %v427 = vrcp.pop %v426
        %v428 = vmul.f32 %v423, %v427
        %v429 = vpack.c.bf16 %v428, %v428
        %430 = vrot.lane.b32.xlu0 %v140, 48
        %v431 = vpop.permute.xlu0 %430
        %v433 = vsel %vm144, %v429, 0
        %v436 = vsel %vm210, %v431, 0
        %438 = vmatprep.subr.bf16.mxu0 0
        %439 = vmatpush1.bf16.msra.mxu0 %v436
        %440 = vmatprep.subr.bf16.mxu0 0
        %441 = vmatpush1.bf16.msra.mxu0 0
        %442 = vmatprep.subr.bf16.mxu0 0
        %443 = vmatpush1.bf16.msra.mxu0 0
        %444 = vmatprep.subr.bf16.mxu0 0
        %445 = vmatpush1.bf16.msra.mxu0 0
        %446 = vmatprep.subr.bf16.mxu0 0
        %447 = vmatpush1.bf16.msra.mxu0 0
        %448 = vmatprep.subr.bf16.mxu0 0
        %449 = vmatpush1.bf16.msra.mxu0 0
        %450 = vmatprep.subr.bf16.mxu0 0
        %451 = vmatpush1.bf16.msra.mxu0 0
        %452 = vmatprep.subr.bf16.mxu0 0
        %453 = vmatpush1.bf16.msra.mxu0 0
        %454 = vmatprep.subr.bf16.mxu0 0
        %455 = vmatpush1.bf16.msra.mxu0 0
        %456 = vmatprep.subr.bf16.mxu0 0
        %457 = vmatpush1.bf16.msra.mxu0 0
        %458 = vmatprep.subr.bf16.mxu0 0
        %459 = vmatpush1.bf16.msra.mxu0 0
        %460 = vmatprep.subr.bf16.mxu0 0
        %461 = vmatpush1.bf16.msra.mxu0 0
        %462 = vmatprep.subr.bf16.mxu0 0
        %463 = vmatpush1.bf16.msra.mxu0 0
        %464 = vmatprep.subr.bf16.mxu0 0
        %465 = vmatpush1.bf16.msra.mxu0 0
        %466 = vmatprep.subr.bf16.mxu0 0
        %467 = vmatpush1.bf16.msra.mxu0 0
        %468 = vmatprep.subr.bf16.mxu0 0
        %469 = vmatpush1.bf16.msra.mxu0 0
        %470 = vmatprep.mubr.bf16.mxu0 0
        %471 = vmatmul.mubr.bf16.gmra.mrb[0].mxu0 %v433
        %v472 = vpop.f32.mrb[0].mxu0
        %v473 = vadd.f32 0.0, %v472
        %v474 = vpop.f32.mrb[0].mxu0
        %v475 = vpop.f32.mrb[0].mxu0
        %v476 = vpop.f32.mrb[0].mxu0
        %477 = vdwg.mxu0
        %478 = vrot.lane.b32.xlu0 %v140, 104
        %v479 = vpop.permute.xlu0 %478
        %480 = vrot.lane.b32.xlu0 %v140, 72
        %v481 = vpop.permute.xlu0 %480
        %v483 = vsel %vm144, %v479, 0
        %v486 = vsel %vm144, %v481, 0
        %488 = vmatprep.subr.bf16.mxu0 0
        %489 = vmatpush1.bf16.xpose.msra.mxu0 %v486
        %490 = vmatprep.subr.bf16.mxu0 0
        %491 = vmatpush1.bf16.xpose.msra.mxu0 0
        %492 = vmatprep.subr.bf16.mxu0 0
        %493 = vmatpush1.bf16.xpose.msra.mxu0 0
        %494 = vmatprep.subr.bf16.mxu0 0
        %495 = vmatpush1.bf16.xpose.msra.mxu0 0
        %496 = vmatprep.subr.bf16.mxu0 0
        %497 = vmatpush1.bf16.xpose.msra.mxu0 0
        %498 = vmatprep.subr.bf16.mxu0 0
        %499 = vmatpush1.bf16.xpose.msra.mxu0 0
        %500 = vmatprep.subr.bf16.mxu0 0
        %501 = vmatpush1.bf16.xpose.msra.mxu0 0
        %502 = vmatprep.subr.bf16.mxu0 0
        %503 = vmatpush1.bf16.xpose.msra.mxu0 0
        %504 = vmatprep.subr.bf16.mxu0 0
        %505 = vmatpush1.bf16.xpose.msra.mxu0 0
        %506 = vmatprep.subr.bf16.mxu0 0
        %507 = vmatpush1.bf16.xpose.msra.mxu0 0
        %508 = vmatprep.subr.bf16.mxu0 0
        %509 = vmatpush1.bf16.xpose.msra.mxu0 0
        %510 = vmatprep.subr.bf16.mxu0 0
        %511 = vmatpush1.bf16.xpose.msra.mxu0 0
        %512 = vmatprep.subr.bf16.mxu0 0
        %513 = vmatpush1.bf16.xpose.msra.mxu0 0
        %514 = vmatprep.subr.bf16.mxu0 0
        %515 = vmatpush1.bf16.xpose.msra.mxu0 0
        %516 = vmatprep.subr.bf16.mxu0 0
        %517 = vmatpush1.bf16.xpose.msra.mxu0 0
        %518 = vmatprep.subr.bf16.mxu0 0
        %519 = vmatpush1.bf16.xpose.msra.mxu0 0
        %520 = vmatprep.mubr.bf16.mxu0 0
        %521 = vmatmul.mubr.bf16.gmra.mrb[0].mxu0 %v483
        %v522 = vpop.f32.mrb[0].mxu0
        %v523 = vadd.f32 0.0, %v522
        %v524 = vpop.f32.mrb[0].mxu0
        %v525 = vpop.f32.mrb[0].mxu0
        %v526 = vpop.f32.mrb[0].mxu0
        %527 = vdwg.mxu0
        %v528 = vmul.f32 %v523, 0.35355338
        %v529 = vadd.f32 %v528, %v138
        %v530 = vsel %vm144, %v529, -inf
        %531 = vmax.xlane.f32.xlu0 %v530
        %v532 = vpop.xlane.xlu0 %531
        %v533 = vsub.f32 %v529, %v532
        %v534 = vmul.f32 %v533, 1.442695
        %v535 = vpow.pop %v534
        %v536 = vsel %vm144, %v535, 0.0
        %537 = vadd.xlane.f32.xlu0 %v536
        %v538 = vpop.xlane.xlu0 %537
        %v539 = vrcp.pop %v538
        %v540 = vmul.f32 %v535, %v539
        %v541 = vpack.c.bf16 %v540, %v540
        %542 = vrot.lane.b32.xlu0 %v140, 40
        %v543 = vpop.permute.xlu0 %542
        %v545 = vsel %vm144, %v541, 0
        %v548 = vsel %vm210, %v543, 0
        %550 = vmatprep.subr.bf16.mxu0 0
        %551 = vmatpush1.bf16.msra.mxu0 %v548
        %552 = vmatprep.subr.bf16.mxu0 0
        %553 = vmatpush1.bf16.msra.mxu0 0
        %554 = vmatprep.subr.bf16.mxu0 0
        %555 = vmatpush1.bf16.msra.mxu0 0
        %556 = vmatprep.subr.bf16.mxu0 0
        %557 = vmatpush1.bf16.msra.mxu0 0
        %558 = vmatprep.subr.bf16.mxu0 0
        %559 = vmatpush1.bf16.msra.mxu0 0
        %560 = vmatprep.subr.bf16.mxu0 0
        %561 = vmatpush1.bf16.msra.mxu0 0
        %562 = vmatprep.subr.bf16.mxu0 0
        %563 = vmatpush1.bf16.msra.mxu0 0
        %564 = vmatprep.subr.bf16.mxu0 0
        %565 = vmatpush1.bf16.msra.mxu0 0
        %566 = vmatprep.subr.bf16.mxu0 0
        %567 = vmatpush1.bf16.msra.mxu0 0
        %568 = vmatprep.subr.bf16.mxu0 0
        %569 = vmatpush1.bf16.msra.mxu0 0
        %570 = vmatprep.subr.bf16.mxu0 0
        %571 = vmatpush1.bf16.msra.mxu0 0
        %572 = vmatprep.subr.bf16.mxu0 0
        %573 = vmatpush1.bf16.msra.mxu0 0
        %574 = vmatprep.subr.bf16.mxu0 0
        %575 = vmatpush1.bf16.msra.mxu0 0
        %576 = vmatprep.subr.bf16.mxu0 0
        %577 = vmatpush1.bf16.msra.mxu0 0
        %578 = vmatprep.subr.bf16.mxu0 0
        %579 = vmatpush1.bf16.msra.mxu0 0
        %580 = vmatprep.subr.bf16.mxu0 0
        %581 = vmatpush1.bf16.msra.mxu0 0
        %582 = vmatprep.mubr.bf16.mxu0 0
        %583 = vmatmul.mubr.bf16.gmra.mrb[0].mxu0 %v545
        %v584 = vpop.f32.mrb[0].mxu0
        %v585 = vadd.f32 0.0, %v584
        %v586 = vpop.f32.mrb[0].mxu0
        %v587 = vpop.f32.mrb[0].mxu0
        %v588 = vpop.f32.mrb[0].mxu0
        %589 = vdwg.mxu0
        %591 = vrot.lane.b32.xlu0 %v361, 8
        %v592 = vpop.permute.xlu0 %591
        %595 = vrot.lane.b32.xlu0 %v473, 16
        %v596 = vpop.permute.xlu0 %595
        %599 = vrot.lane.b32.xlu0 %v585, 24
        %v600 = vpop.permute.xlu0 %599
        %v602 = vsel %vm144, %v249, %v592
        %vm603 = vcmask 130048
        %v604 = vsel %vm603, %v602, %v596
        %vm605 = vcmask 195584
        %v606 = vsel %vm605, %v604, %v600
        %vm607 = vcmask 261120
        %608 = vst.msk [vmem:[%s131] sm:$0xff] %vm607, %v606
        %s609 = sand.u32 %s52, 1
        %s610 = scalar_lea.sflag [#allocation4], %s609
        %s611 = sand.u32 %s52, 1
        %s612 = smul.addr %s611, 8
        %s613 = scalar_lea.vmem [#allocation5], %s612
        // Predicated region
        $region29: #{encoder_decoder_forward.46} parent=23 // pred_check
          %p614 = pneg %p62
        $region30: #{encoder_decoder_forward.46} parent=23 // pred_check_branch
          %616 = sbr.rel (%p614) target = $region32
        $region31: #{encoder_decoder_forward.46} parent=23 // pred_region
          %s618 = ssub.s32 128, 128
          %619 = vsyncadd %s610, %s618
          %s620 = smul.addr %s18, 128
          %s621 = scalar_lea.hbm %s1, %s620
          %s623 = sshll.u32 %s613, 4
          %s624 = int_to_ptr.vmem [resolvable:$true] %s623
          %626 = dma.vmem_to_hbm [thread:$0]  %s624, 128, %s621, %s610
        $region32: #{encoder_decoder_forward.46} parent=23 // pred_fallthru
          _
      $region24: #{encoder_decoder_forward.46} parent=5 // pred_fallthru
        _
      %p627 = scmp.le.s32.totalorder 2, %s13
      // Predicated region
      $region33: #{encoder_decoder_forward.46} parent=5 // pred_check
        %p628 = pneg %p627
      $region34: #{encoder_decoder_forward.46} parent=5 // pred_check_branch
        %630 = sbr.rel (%p628) target = $region36
      $region35: #{encoder_decoder_forward.46} parent=5 // pred_region
        %s631 = ssub.s32 %s13, 2
        // Predicated region
        $region37: #{encoder_decoder_forward.46} parent=35 // pred_check
          %p632 = pneg %p68
        $region38: #{encoder_decoder_forward.46} parent=35 // pred_check_branch
          %634 = sbr.rel (%p632) target = $region40
        $region39: #{encoder_decoder_forward.46} parent=35 // pred_region
          %s635 = sand.u32 %s53, 1
          %s636 = scalar_lea.sflag [#allocation4], %s635
          %s637 = sand.u32 %s53, 1
          %s638 = smul.addr %s637, 8
          %s639 = scalar_lea.vmem [#allocation5], %s638
          %640 = dma.done %s636, 128
        $region40: #{encoder_decoder_forward.46} parent=35 // pred_fallthru
          _
      $region36: #{encoder_decoder_forward.46} parent=5 // pred_fallthru
        _
    $region6: #{encoder_decoder_forward.46} parent=1 // loop_footer
      %s17 = sadd.s32 1, %s13
    $region7: #{encoder_decoder_forward.46} parent=1 // loop_footer_branch
      %12 = sbr.rel target = $region3
    $region8: #{encoder_decoder_forward.46} parent=1 // loop_exit
      _
    %641 = vsyncpa [#allocation3], 1
    %s642 = scalar_lea.sflag [#allocation3], 1
    %643 = vsyncpa %s642, 1
    %644 = vsyncpa [#allocation4], 1
    %s645 = scalar_lea.sflag [#allocation4], 1
    %646 = vsyncpa %s645, 1

// kernel: encoder_decoder_forward.48
$region0: #{encoder_decoder_forward.48}
  #allocation0 [shape = 'u32[]', space=smem, size = 0x4, offset = 0x4, fixed_abs, tag = 'smem constant byte address 0x4 - core index']
  #allocation1 [shape = 'u32[144,128]{1,0:T(1,128)}', space=vmem, size = 0x12000, scoped, tag = 'internal scratch']
  #allocation2 [shape = 'f32[16,32]{1,0:T(8,128)}', space=vmem, size = 0x2000, scoped, tag = 'scratch operand']
  %s0 = inlined_call_operand.hbm [shape: f32[16,32], index: 0, kind: input, shape index: {}]
  %s1 = inlined_call_operand.hbm [shape: f32[32,32], index: 1, kind: input, shape index: {}]
  %s2 = inlined_call_operand.hbm [shape: f32[1,32], index: 2, kind: input, shape index: {}]
  %s3 = inlined_call_operand.hbm [shape: f32[16,32], index: 3, kind: output, shape index: {}]
  %s4 = sld [smem:[#allocation0]]
  $region42: #{encoder_decoder_forward.48} parent=0
    _
  %s6 = ssub.s32 1, %s4
  %s7 = scalar_select 0, %s6, %s4
  $region1: #{encoder_decoder_forward.48} parent=0
    #allocation3 [shape = 'u8[8192]{0}', space=vmem, size = 0x2000, scoped, tag = 'input window, operand 0, single buffered']
    #allocation4 [shape = 's32[1]{0}', space=sflag, size = 0x4, scoped, tag = 'scoped memory for encoder_decoder_forward.48']
    #allocation5 [shape = 's32[1]{0}', space=sflag, size = 0x4, scoped, tag = 'scoped memory for encoder_decoder_forward.48']
    #allocation6 [shape = 'u8[16384]{0}', space=vmem, size = 0x4000, scoped, tag = 'input window, operand 1, single buffered']
    #allocation7 [shape = 's32[1]{0}', space=sflag, size = 0x4, scoped, tag = 'scoped memory for encoder_decoder_forward.48']
    #allocation8 [shape = 'u8[512]{0}', space=vmem, size = 0x400, scoped, tag = 'input window, operand 2, single buffered']
    #allocation9 [shape = 'u8[8192]{0}', space=vmem, size = 0x2000, scoped, tag = 'output window, operand 0, single buffered']
    %8 = vsyncpa [#allocation4], 0
    %9 = vsyncpa [#allocation7], 0
    %10 = vsyncpa [#allocation5], 0
    // Predicated region
    $region2: #{encoder_decoder_forward.48} parent=1 // pred_check
      _
    $region3: #{encoder_decoder_forward.48} parent=1 // pred_check_branch
      %12 = sbr.rel (0) target = $region5
    $region4: #{encoder_decoder_forward.48} parent=1 // pred_region
      %s14 = ssub.s32 256, 256
      %15 = vsyncadd [#allocation4], %s14
      %s16 = sshll.u32 [#allocation3], 4
      %s17 = int_to_ptr.vmem [resolvable:$true] %s16
      %22 = dma.hbm_to_vmem [thread:$0]  %s0, 256, %s17, [#allocation4], 128, 128, 8
    $region5: #{encoder_decoder_forward.48} parent=1 // pred_fallthru
      _
    // Predicated region
    $region6: #{encoder_decoder_forward.48} parent=1 // pred_check
      _
    $region7: #{encoder_decoder_forward.48} parent=1 // pred_check_branch
      %24 = sbr.rel (0) target = $region9
    $region8: #{encoder_decoder_forward.48} parent=1 // pred_region
      %s26 = ssub.s32 512, 512
      %27 = vsyncadd [#allocation7], %s26
      %s28 = sshll.u32 [#allocation6], 4
      %s29 = int_to_ptr.vmem [resolvable:$true] %s28
      %34 = dma.hbm_to_vmem [thread:$0]  %s1, 512, %s29, [#allocation7], 128, 128, 8
    $region9: #{encoder_decoder_forward.48} parent=1 // pred_fallthru
      _
    // Predicated region
    $region10: #{encoder_decoder_forward.48} parent=1 // pred_check
      _
    $region11: #{encoder_decoder_forward.48} parent=1 // pred_check_branch
      %36 = sbr.rel (0) target = $region13
    $region12: #{encoder_decoder_forward.48} parent=1 // pred_region
      %s38 = ssub.s32 16, 16
      %39 = vsyncadd [#allocation7], %s38
      %s41 = sshll.u32 [#allocation8], 4
      %s42 = int_to_ptr.vmem [resolvable:$true] %s41
      %44 = dma.hbm_to_vmem [thread:$0]  %s2, 16, %s42, [#allocation7]
    $region13: #{encoder_decoder_forward.48} parent=1 // pred_fallthru
      _
    // Predicated region
    $region14: #{encoder_decoder_forward.48} parent=1 // pred_check
      _
    $region15: #{encoder_decoder_forward.48} parent=1 // pred_check_branch
      %46 = sbr.rel (0) target = $region17
    $region16: #{encoder_decoder_forward.48} parent=1 // pred_region
      %47 = dma.done [#allocation4], 256
    $region17: #{encoder_decoder_forward.48} parent=1 // pred_fallthru
      _
    // Predicated region
    $region18: #{encoder_decoder_forward.48} parent=1 // pred_check
      _
    $region19: #{encoder_decoder_forward.48} parent=1 // pred_check_branch
      %49 = sbr.rel (0) target = $region21
    $region20: #{encoder_decoder_forward.48} parent=1 // pred_region
      %50 = dma.done [#allocation7], 512
    $region21: #{encoder_decoder_forward.48} parent=1 // pred_fallthru
      _
    // Predicated region
    $region22: #{encoder_decoder_forward.48} parent=1 // pred_check
      _
    $region23: #{encoder_decoder_forward.48} parent=1 // pred_check_branch
      %52 = sbr.rel (0) target = $region25
    $region24: #{encoder_decoder_forward.48} parent=1 // pred_region
      %53 = dma.done [#allocation7], 16
    $region25: #{encoder_decoder_forward.48} parent=1 // pred_fallthru
      _
    %p55 = scmp.eq.s32.totalorder 0, 0
    // Predicated region
    $region26: #{encoder_decoder_forward.48} parent=1 // pred_check
      %p56 = pneg %p55
    $region27: #{encoder_decoder_forward.48} parent=1 // pred_check_branch
      %58 = sbr.rel (%p56) target = $region29
    $region28: #{encoder_decoder_forward.48} parent=1 // pred_region
      %vm59 = vcmask 261120
      %60 = vst.msk [vmem:[#allocation2] sm:$0xff] %vm59, 0.0
      %61 = vst.msk [vmem:[#allocation2 + $0x8] sm:$0xff] %vm59, 0.0
    $region29: #{encoder_decoder_forward.48} parent=1 // pred_fallthru
      _
    %v62 = vld [vmem:[#allocation2] sm:$0xff]
    %v63 = vld [vmem:[#allocation2 + $0x8] sm:$0xff]
    %v64 = vld [vmem:[#allocation3] sm:$0xff]
    %v65 = vld [vmem:[#allocation3 + $0x8] sm:$0xff]
    %v66 = vpack.c.bf16 %v65, %v64
    %v67 = vld [vmem:[#allocation6] sm:$0xff]
    %v68 = vld [vmem:[#allocation6 + $0x8] sm:$0xff]
    %v69 = vld [vmem:[#allocation6 + $0x10] sm:$0xff]
    %v70 = vld [vmem:[#allocation6 + $0x18] sm:$0xff]
    %v71 = vpack.c.bf16 %v68, %v67
    %v72 = vpack.c.bf16 %v70, %v69
    %vm73 = vcmask 261120
    %v75 = vsel %vm73, %v66, 0
    %77 = vmatprep.subr.bf16.mxu0 0
    %78 = vmatpush1.bf16.msra.mxu0 %v71
    %79 = vmatprep.subr.bf16.mxu0 0
    %80 = vmatpush1.bf16.msra.mxu0 %v72
    %81 = vmatprep.subr.bf16.mxu0 0
    %82 = vmatpush1.bf16.msra.mxu0 0
    %83 = vmatprep.subr.bf16.mxu0 0
    %84 = vmatpush1.bf16.msra.mxu0 0
    %85 = vmatprep.subr.bf16.mxu0 0
    %86 = vmatpush1.bf16.msra.mxu0 0
    %87 = vmatprep.subr.bf16.mxu0 0
    %88 = vmatpush1.bf16.msra.mxu0 0
    %89 = vmatprep.subr.bf16.mxu0 0
    %90 = vmatpush1.bf16.msra.mxu0 0
    %91 = vmatprep.subr.bf16.mxu0 0
    %92 = vmatpush1.bf16.msra.mxu0 0
    %93 = vmatprep.subr.bf16.mxu0 0
    %94 = vmatpush1.bf16.msra.mxu0 0
    %95 = vmatprep.subr.bf16.mxu0 0
    %96 = vmatpush1.bf16.msra.mxu0 0
    %97 = vmatprep.subr.bf16.mxu0 0
    %98 = vmatpush1.bf16.msra.mxu0 0
    %99 = vmatprep.subr.bf16.mxu0 0
    %100 = vmatpush1.bf16.msra.mxu0 0
    %101 = vmatprep.subr.bf16.mxu0 0
    %102 = vmatpush1.bf16.msra.mxu0 0
    %103 = vmatprep.subr.bf16.mxu0 0
    %104 = vmatpush1.bf16.msra.mxu0 0
    %105 = vmatprep.subr.bf16.mxu0 0
    %106 = vmatpush1.bf16.msra.mxu0 0
    %107 = vmatprep.subr.bf16.mxu0 0
    %108 = vmatpush1.bf16.msra.mxu0 0
    %109 = vmatprep.mubr.bf16.mxu0 0
    %110 = vmatmul.mubr.bf16.gmra.mrb[0].mxu0 %v75
    %v111 = vpop.f32.mrb[0].mxu0
    %v112 = vadd.f32 0.0, %v111
    %v113 = vpop.f32.mrb[0].mxu0
    %v114 = vpop.f32.mrb[0].mxu0
    %v115 = vadd.f32 0.0, %v114
    %v116 = vpop.f32.mrb[0].mxu0
    %117 = vdwg.mxu0
    %v118 = vadd.f32 %v62, %v112
    %v119 = vadd.f32 %v63, %v115
    %120 = vst.msk [vmem:[#allocation2] sm:$0xff] %vm73, %v118
    %121 = vst.msk [vmem:[#allocation2 + $0x8] sm:$0xff] %vm73, %v119
    // Predicated region
    $region30: #{encoder_decoder_forward.48} parent=1 // pred_check
      %p122 = pneg %p55
    $region31: #{encoder_decoder_forward.48} parent=1 // pred_check_branch
      %124 = sbr.rel (%p122) target = $region33
    $region32: #{encoder_decoder_forward.48} parent=1 // pred_region
      %v125 = vld [vmem:[#allocation2] sm:$0xff]
      %v126 = vld [vmem:[#allocation2 + $0x8] sm:$0xff]
      %v127 = vld [vmem:[#allocation8] sm:$0x1]
      %v129 = vlaneseq
      %v130 = vshrl.u32 %v129, 7
      %v131 = vsub.s32 0, %v130
      %v132 = vrot.slane %v127, %v131
      %v134 = vadd.f32 %v125, %v132
      %v135 = vadd.f32 %v126, %v132
      %136 = vst.msk [vmem:[#allocation9] sm:$0xff] %vm73, %v134
      %137 = vst.msk [vmem:[#allocation9 + $0x8] sm:$0xff] %vm73, %v135
    $region33: #{encoder_decoder_forward.48} parent=1 // pred_fallthru
      _
    // Predicated region
    $region34: #{encoder_decoder_forward.48} parent=1 // pred_check
      _
    $region35: #{encoder_decoder_forward.48} parent=1 // pred_check_branch
      %139 = sbr.rel (0) target = $region37
    $region36: #{encoder_decoder_forward.48} parent=1 // pred_region
      %s141 = ssub.s32 256, 256
      %142 = vsyncadd [#allocation5], %s141
      %s143 = sshll.u32 [#allocation9], 4
      %s144 = int_to_ptr.vmem [resolvable:$true] %s143
      %149 = dma.vmem_to_hbm [thread:$0]  %s144, 256, %s3, [#allocation5], 128, 128, 8
    $region37: #{encoder_decoder_forward.48} parent=1 // pred_fallthru
      _
    // Predicated region
    $region38: #{encoder_decoder_forward.48} parent=1 // pred_check
      _
    $region39: #{encoder_decoder_forward.48} parent=1 // pred_check_branch
      %151 = sbr.rel (0) target = $region41
    $region40: #{encoder_decoder_forward.48} parent=1 // pred_region
      %152 = dma.done [#allocation5], 256
    $region41: #{encoder_decoder_forward.48} parent=1 // pred_fallthru
      _
    %153 = vsyncpa [#allocation4], 1
    %154 = vsyncpa [#allocation7], 1
    %155 = vsyncpa [#allocation5], 1

// kernel: encoder_decoder_forward.50
$region0: #{encoder_decoder_forward.50}
  #allocation0 [shape = 'u32[]', space=smem, size = 0x4, offset = 0x4, fixed_abs, tag = 'smem constant byte address 0x4 - core index']
  #allocation1 [shape = 'u32[144,128]{1,0:T(1,128)}', space=vmem, size = 0x12000, scoped, tag = 'internal scratch']
  %s0 = inlined_call_operand.hbm [shape: f32[2,8,32], index: 0, kind: input, shape index: {}]
  %s1 = inlined_call_operand.hbm [shape: f32[2,8,64], index: 1, kind: input, shape index: {}]
  %s2 = inlined_call_operand.hbm [shape: f32[2,8,32], index: 2, kind: output, shape index: {}]
  %s3 = sld [smem:[#allocation0]]
  $region49: #{encoder_decoder_forward.50} parent=0
    _
  %s5 = ssub.s32 1, %s3
  %s6 = scalar_select 0, %s5, %s3
  $region1: #{encoder_decoder_forward.50} parent=0
    #allocation2 [shape = 'u8[8192]{0}', space=vmem, size = 0x2000, scoped, tag = 'input window, operand 0']
    #allocation3 [shape = 's32[2]{0}', space=sflag, size = 0x8, scoped, tag = 'scoped memory for encoder_decoder_forward.50']
    #allocation4 [shape = 's32[2]{0}', space=sflag, size = 0x8, scoped, tag = 'scoped memory for encoder_decoder_forward.50']
    #allocation5 [shape = 'u8[8192]{0}', space=vmem, size = 0x2000, scoped, tag = 'input window, operand 1']
    #allocation6 [shape = 's32[2]{0}', space=sflag, size = 0x8, scoped, tag = 'scoped memory for encoder_decoder_forward.50']
    #allocation7 [shape = 'u8[8192]{0}', space=vmem, size = 0x2000, scoped, tag = 'output window, operand 0']
    %7 = vsyncpa [#allocation3], 0
    %s8 = scalar_lea.sflag [#allocation3], 1
    %9 = vsyncpa %s8, 0
    %10 = vsyncpa [#allocation6], 0
    %s11 = scalar_lea.sflag [#allocation6], 1
    %12 = vsyncpa %s11, 0
    %13 = vsyncpa [#allocation4], 0
    %s14 = scalar_lea.sflag [#allocation4], 1
    %15 = vsyncpa %s14, 0
    loop: start=0, step=1, limit=4
    $region2: #{encoder_decoder_forward.50} parent=1 // loop_pre_header
      _
    $region3: #{encoder_decoder_forward.50} parent=1 // loop_header
      %s17 = sphi 0, %s21
      %p18 = scmp.ge.s32.totalorder %s17, 4
      %s27 = sphi 0, %s29
      %s30 = sphi 0, %s27
      %s31 = sphi 0, %s30
      %s47 = sphi 0, %s31
      %s53 = sphi 0, %s55
      %s56 = sphi 0, %s53
      %s57 = sphi 0, %s56
      %s73 = sphi 0, %s57
      %s79 = sphi 0, %s81
      %s82 = sphi 0, %s79
      %s83 = sphi 0, %s82
      %s99 = sphi 0, %s83
    $region4: #{encoder_decoder_forward.50} parent=1 // loop_header_branch
      %20 = sbr.rel (%p18) target = $region8
    $region5: #{encoder_decoder_forward.50} parent=1 // loop_body
      %s22 = ssub.s32 %s17, 1
      %s23 = ssub.s32 %s17, 2
      %s24 = sadd.s32 %s17, 1
      %s25 = ssub.s32 %s17, %s24
      %p26 = scmp.eq.s32.totalorder %s25, 0
      %s28 = sadd.s32 %s27, 1
      %s29 = scalar_select %p26, %s27, %s28
      %p32 = pneg %p26
      %p33 = scmp.eq.s32.totalorder %s17, 1
      %p34 = por %p32, %p33
      %p35 = scmp.ne.s32.totalorder %s27, %s30
      %p36 = scmp.eq.s32.totalorder %s17, 0
      %p37 = por %p35, %p36
      %p38 = scmp.ne.s32.totalorder %s27, %s30
      %p39 = scmp.eq.s32.totalorder %s22, 1
      %p40 = por %p38, %p39
      %p41 = scmp.ne.s32.totalorder %s30, %s31
      %p42 = scmp.eq.s32.totalorder %s22, 0
      %p43 = por %p41, %p42
      %p44 = scmp.ne.s32.totalorder %s30, %s31
      %p45 = scmp.eq.s32.totalorder %s23, 1
      %p46 = por %p44, %p45
      %p48 = scmp.ne.s32.totalorder %s31, %s47
      %p49 = scmp.eq.s32.totalorder %s23, 0
      %p50 = por %p48, %p49
      %s51 = ssub.s32 %s17, %s24
      %p52 = scmp.eq.s32.totalorder %s51, 0
      %s54 = sadd.s32 %s53, 1
      %s55 = scalar_select %p52, %s53, %s54
      %p58 = pneg %p52
      %p59 = scmp.eq.s32.totalorder %s17, 1
      %p60 = por %p58, %p59
      %p61 = scmp.ne.s32.totalorder %s53, %s56
      %p62 = scmp.eq.s32.totalorder %s17, 0
      %p63 = por %p61, %p62
      %p64 = scmp.ne.s32.totalorder %s53, %s56
      %p65 = scmp.eq.s32.totalorder %s22, 1
      %p66 = por %p64, %p65
      %p67 = scmp.ne.s32.totalorder %s56, %s57
      %p68 = scmp.eq.s32.totalorder %s22, 0
      %p69 = por %p67, %p68
      %p70 = scmp.ne.s32.totalorder %s56, %s57
      %p71 = scmp.eq.s32.totalorder %s23, 1
      %p72 = por %p70, %p71
      %p74 = scmp.ne.s32.totalorder %s57, %s73
      %p75 = scmp.eq.s32.totalorder %s23, 0
      %p76 = por %p74, %p75
      %s77 = ssub.s32 %s17, %s24
      %p78 = scmp.eq.s32.totalorder %s77, 0
      %s80 = sadd.s32 %s79, 1
      %s81 = scalar_select %p78, %s79, %s80
      %p84 = pneg %p78
      %p85 = scmp.eq.s32.totalorder %s17, 1
      %p86 = por %p84, %p85
      %p87 = scmp.ne.s32.totalorder %s79, %s82
      %p88 = scmp.eq.s32.totalorder %s17, 0
      %p89 = por %p87, %p88
      %p90 = scmp.ne.s32.totalorder %s79, %s82
      %p91 = scmp.eq.s32.totalorder %s22, 1
      %p92 = por %p90, %p91
      %p93 = scmp.ne.s32.totalorder %s82, %s83
      %p94 = scmp.eq.s32.totalorder %s22, 0
      %p95 = por %p93, %p94
      %p96 = scmp.ne.s32.totalorder %s82, %s83
      %p97 = scmp.eq.s32.totalorder %s23, 1
      %p98 = por %p96, %p97
      %p100 = scmp.ne.s32.totalorder %s83, %s99
      %p101 = scmp.eq.s32.totalorder %s23, 0
      %p102 = por %p100, %p101
      %p103 = scmp.le.s32.totalorder 1, %s17
      %p104 = scmp.lt.s32.totalorder %s17, 3
      %p105 = pnand %p103, %p104
      %p106 = pneg %p105
      // Predicated region
      $region9: #{encoder_decoder_forward.50} parent=5 // pred_check
        _
      $region10: #{encoder_decoder_forward.50} parent=5 // pred_check_branch
        %108 = sbr.rel (%p105) target = $region12
      $region11: #{encoder_decoder_forward.50} parent=5 // pred_region
        %s109 = ssub.s32 %s17, 1
      $region12: #{encoder_decoder_forward.50} parent=5 // pred_fallthru
        _
      %p110 = scmp.lt.s32.totalorder %s17, 2
      // Predicated region
      $region13: #{encoder_decoder_forward.50} parent=5 // pred_check
        %p111 = pneg %p110
      $region14: #{encoder_decoder_forward.50} parent=5 // pred_check_branch
        %113 = sbr.rel (%p111) target = $region16
      $region15: #{encoder_decoder_forward.50} parent=5 // pred_region
        // Predicated region
        $region17: #{encoder_decoder_forward.50} parent=15 // pred_check
          %p114 = pneg %p37
        $region18: #{encoder_decoder_forward.50} parent=15 // pred_check_branch
          %116 = sbr.rel (%p114) target = $region20
        $region19: #{encoder_decoder_forward.50} parent=15 // pred_region
          %s117 = sand.u32 %s27, 1
          %s118 = scalar_lea.sflag [#allocation3], %s117
          %s119 = sand.u32 %s27, 1
          %s120 = smul.addr %s119, 8
          %s121 = scalar_lea.vmem [#allocation2], %s120
          %s123 = ssub.s32 128, 128
          %124 = vsyncadd %s118, %s123
          %s125 = smul.addr %s17, 128
          %s126 = scalar_lea.hbm %s0, %s125
          %s128 = sshll.u32 %s121, 4
          %s129 = int_to_ptr.vmem [resolvable:$true] %s128
          %131 = dma.hbm_to_vmem [thread:$0]  %s126, 128, %s129, %s118
        $region20: #{encoder_decoder_forward.50} parent=15 // pred_fallthru
          _
        // Predicated region
        $region21: #{encoder_decoder_forward.50} parent=15 // pred_check
          %p132 = pneg %p63
        $region22: #{encoder_decoder_forward.50} parent=15 // pred_check_branch
          %134 = sbr.rel (%p132) target = $region24
        $region23: #{encoder_decoder_forward.50} parent=15 // pred_region
          %s135 = sand.u32 %s53, 1
          %s136 = scalar_lea.sflag [#allocation6], %s135
          %s137 = sand.u32 %s53, 1
          %s138 = smul.addr %s137, 8
          %s139 = scalar_lea.vmem [#allocation5], %s138
          %s141 = ssub.s32 128, 128
          %142 = vsyncadd %s136, %s141
          %s143 = smul.addr %s17, 128
          %s144 = scalar_lea.hbm %s1, %s143
          %s146 = sshll.u32 %s139, 4
          %s147 = int_to_ptr.vmem [resolvable:$true] %s146
          %149 = dma.hbm_to_vmem [thread:$0]  %s144, 128, %s147, %s136
        $region24: #{encoder_decoder_forward.50} parent=15 // pred_fallthru
          _
      $region16: #{encoder_decoder_forward.50} parent=5 // pred_fallthru
        _
      %p150 = scmp.le.s32.totalorder 1, %s17
      %p151 = scmp.lt.s32.totalorder %s17, 3
      %p152 = pnand %p150, %p151
      %p153 = pneg %p152
      // Predicated region
      $region25: #{encoder_decoder_forward.50} parent=5 // pred_check
        _
      $region26: #{encoder_decoder_forward.50} parent=5 // pred_check_branch
        %155 = sbr.rel (%p152) target = $region28
      $region27: #{encoder_decoder_forward.50} parent=5 // pred_region
        %s156 = ssub.s32 %s17, 1
        %s157 = sand.u32 %s30, 1
        %s158 = scalar_lea.sflag [#allocation3], %s157
        %s159 = sand.u32 %s30, 1
        %s160 = smul.addr %s159, 8
        %s161 = scalar_lea.vmem [#allocation2], %s160
        // Predicated region
        $region29: #{encoder_decoder_forward.50} parent=27 // pred_check
          %p162 = pneg %p43
        $region30: #{encoder_decoder_forward.50} parent=27 // pred_check_branch
          %164 = sbr.rel (%p162) target = $region32
        $region31: #{encoder_decoder_forward.50} parent=27 // pred_region
          %165 = dma.done %s158, 128
        $region32: #{encoder_decoder_forward.50} parent=27 // pred_fallthru
          _
        %s166 = sand.u32 %s56, 1
        %s167 = scalar_lea.sflag [#allocation6], %s166
        %s168 = sand.u32 %s56, 1
        %s169 = smul.addr %s168, 8
        %s170 = scalar_lea.vmem [#allocation5], %s169
        // Predicated region
        $region33: #{encoder_decoder_forward.50} parent=27 // pred_check
          %p171 = pneg %p69
        $region34: #{encoder_decoder_forward.50} parent=27 // pred_check_branch
          %173 = sbr.rel (%p171) target = $region36
        $region35: #{encoder_decoder_forward.50} parent=27 // pred_region
          %174 = dma.done %s167, 128
        $region36: #{encoder_decoder_forward.50} parent=27 // pred_fallthru
          _
        %s175 = sand.u32 %s30, 1
        %s176 = scalar_lea.sflag [#allocation3], %s175
        %s177 = sand.u32 %s30, 1
        %s178 = smul.addr %s177, 8
        %s179 = scalar_lea.vmem [#allocation2], %s178
        %p180 = pneg %p43
        %p181 = pneg %p40
        %s182 = sand.u32 %s56, 1
        %s183 = scalar_lea.sflag [#allocation6], %s182
        %s184 = sand.u32 %s56, 1
        %s185 = smul.addr %s184, 8
        %s186 = scalar_lea.vmem [#allocation5], %s185
        %p187 = pneg %p69
        %p188 = pneg %p66
        %p189 = pneg %p95
        %p190 = pneg %p92
        %s191 = sand.u32 %s82, 1
        %s192 = scalar_lea.sflag [#allocation4], %s191
        %s193 = sand.u32 %s82, 1
        %s194 = smul.addr %s193, 8
        %s195 = scalar_lea.vmem [#allocation7], %s194
        %v197 = vld [vmem:[%s161] sm:$0xff]
        %v198 = vpack.c.bf16 %v197, %v197
        %v199 = vld [vmem:[%s170] sm:$0xff]
        %v200 = vpack.c.bf16 %v199, %v199
        %vm201 = vcmask 64512
        %v203 = vsel %vm201, %v198, 0
        %v206 = vsel %vm201, %v200, 0
        %208 = vmatprep.subr.bf16.mxu0 0
        %209 = vmatpush1.bf16.xpose.msra.mxu0 %v206
        %210 = vmatprep.subr.bf16.mxu0 0
        %211 = vmatpush1.bf16.xpose.msra.mxu0 0
        %212 = vmatprep.subr.bf16.mxu0 0
        %213 = vmatpush1.bf16.xpose.msra.mxu0 0
        %214 = vmatprep.subr.bf16.mxu0 0
        %215 = vmatpush1.bf16.xpose.msra.mxu0 0
        %216 = vmatprep.subr.bf16.mxu0 0
        %217 = vmatpush1.bf16.xpose.msra.mxu0 0
        %218 = vmatprep.subr.bf16.mxu0 0
        %219 = vmatpush1.bf16.xpose.msra.mxu0 0
        %220 = vmatprep.subr.bf16.mxu0 0
        %221 = vmatpush1.bf16.xpose.msra.mxu0 0
        %222 = vmatprep.subr.bf16.mxu0 0
        %223 = vmatpush1.bf16.xpose.msra.mxu0 0
        %224 = vmatprep.subr.bf16.mxu0 0
        %225 = vmatpush1.bf16.xpose.msra.mxu0 0
        %226 = vmatprep.subr.bf16.mxu0 0
        %227 = vmatpush1.bf16.xpose.msra.mxu0 0
        %228 = vmatprep.subr.bf16.mxu0 0
        %229 = vmatpush1.bf16.xpose.msra.mxu0 0
        %230 = vmatprep.subr.bf16.mxu0 0
        %231 = vmatpush1.bf16.xpose.msra.mxu0 0
        %232 = vmatprep.subr.bf16.mxu0 0
        %233 = vmatpush1.bf16.xpose.msra.mxu0 0
        %234 = vmatprep.subr.bf16.mxu0 0
        %235 = vmatpush1.bf16.xpose.msra.mxu0 0
        %236 = vmatprep.subr.bf16.mxu0 0
        %237 = vmatpush1.bf16.xpose.msra.mxu0 0
        %238 = vmatprep.subr.bf16.mxu0 0
        %239 = vmatpush1.bf16.xpose.msra.mxu0 0
        %240 = vmatprep.mubr.bf16.mxu0 0
        %241 = vmatmul.mubr.bf16.gmra.mrb[0].mxu0 %v203
        %v242 = vpop.f32.mrb[0].mxu0
        %v243 = vadd.f32 0.0, %v242
        %v244 = vpop.f32.mrb[0].mxu0
        %v245 = vpop.f32.mrb[0].mxu0
        %v246 = vpop.f32.mrb[0].mxu0
        %247 = vdwg.mxu0
        %v248 = vmul.f32 %v243, 0.35355338
        %v249 = vsel %vm201, %v248, -inf
        %250 = vmax.xlane.f32.xlu0 %v249
        %v251 = vpop.xlane.xlu0 %250
        %v252 = vsub.f32 %v248, %v251
        %v253 = vmul.f32 %v252, 1.442695
        %v254 = vpow.pop %v253
        %v255 = vsel %vm201, %v254, 0.0
        %256 = vadd.xlane.f32.xlu0 %v255
        %v257 = vpop.xlane.xlu0 %256
        %v258 = vrcp.pop %v257
        %v259 = vmul.f32 %v254, %v258
        %v260 = vpack.c.bf16 %v259, %v259
        %262 = vrot.lane.b32.xlu0 %v200, 96
        %v263 = vpop.permute.xlu0 %262
        %v265 = vsel %vm201, %v260, 0
        %vm267 = vcmask 1043456
        %v269 = vsel %vm267, %v263, 0
        %271 = vmatprep.subr.bf16.mxu0 0
        %272 = vmatpush1.bf16.msra.mxu0 %v269
        %273 = vmatprep.subr.bf16.mxu0 0
        %274 = vmatpush1.bf16.msra.mxu0 0
        %275 = vmatprep.subr.bf16.mxu0 0
        %276 = vmatpush1.bf16.msra.mxu0 0
        %277 = vmatprep.subr.bf16.mxu0 0
        %278 = vmatpush1.bf16.msra.mxu0 0
        %279 = vmatprep.subr.bf16.mxu0 0
        %280 = vmatpush1.bf16.msra.mxu0 0
        %281 = vmatprep.subr.bf16.mxu0 0
        %282 = vmatpush1.bf16.msra.mxu0 0
        %283 = vmatprep.subr.bf16.mxu0 0
        %284 = vmatpush1.bf16.msra.mxu0 0
        %285 = vmatprep.subr.bf16.mxu0 0
        %286 = vmatpush1.bf16.msra.mxu0 0
        %287 = vmatprep.subr.bf16.mxu0 0
        %288 = vmatpush1.bf16.msra.mxu0 0
        %289 = vmatprep.subr.bf16.mxu0 0
        %290 = vmatpush1.bf16.msra.mxu0 0
        %291 = vmatprep.subr.bf16.mxu0 0
        %292 = vmatpush1.bf16.msra.mxu0 0
        %293 = vmatprep.subr.bf16.mxu0 0
        %294 = vmatpush1.bf16.msra.mxu0 0
        %295 = vmatprep.subr.bf16.mxu0 0
        %296 = vmatpush1.bf16.msra.mxu0 0
        %297 = vmatprep.subr.bf16.mxu0 0
        %298 = vmatpush1.bf16.msra.mxu0 0
        %299 = vmatprep.subr.bf16.mxu0 0
        %300 = vmatpush1.bf16.msra.mxu0 0
        %301 = vmatprep.subr.bf16.mxu0 0
        %302 = vmatpush1.bf16.msra.mxu0 0
        %303 = vmatprep.mubr.bf16.mxu0 0
        %304 = vmatmul.mubr.bf16.gmra.mrb[0].mxu0 %v265
        %v305 = vpop.f32.mrb[0].mxu0
        %v306 = vadd.f32 0.0, %v305
        %v307 = vpop.f32.mrb[0].mxu0
        %v308 = vpop.f32.mrb[0].mxu0
        %v309 = vpop.f32.mrb[0].mxu0
        %310 = vdwg.mxu0
        %312 = vrot.lane.b32.xlu0 %v198, 120
        %v313 = vpop.permute.xlu0 %312
        %314 = vrot.lane.b32.xlu0 %v200, 120
        %v315 = vpop.permute.xlu0 %314
        %v317 = vsel %vm201, %v313, 0
        %v320 = vsel %vm201, %v315, 0
        %322 = vmatprep.subr.bf16.mxu0 0
        %323 = vmatpush1.bf16.xpose.msra.mxu0 %v320
        %324 = vmatprep.subr.bf16.mxu0 0
        %325 = vmatpush1.bf16.xpose.msra.mxu0 0
        %326 = vmatprep.subr.bf16.mxu0 0
        %327 = vmatpush1.bf16.xpose.msra.mxu0 0
        %328 = vmatprep.subr.bf16.mxu0 0
        %329 = vmatpush1.bf16.xpose.msra.mxu0 0
        %330 = vmatprep.subr.bf16.mxu0 0
        %331 = vmatpush1.bf16.xpose.msra.mxu0 0
        %332 = vmatprep.subr.bf16.mxu0 0
        %333 = vmatpush1.bf16.xpose.msra.mxu0 0
        %334 = vmatprep.subr.bf16.mxu0 0
        %335 = vmatpush1.bf16.xpose.msra.mxu0 0
        %336 = vmatprep.subr.bf16.mxu0 0
        %337 = vmatpush1.bf16.xpose.msra.mxu0 0
        %338 = vmatprep.subr.bf16.mxu0 0
        %339 = vmatpush1.bf16.xpose.msra.mxu0 0
        %340 = vmatprep.subr.bf16.mxu0 0
        %341 = vmatpush1.bf16.xpose.msra.mxu0 0
        %342 = vmatprep.subr.bf16.mxu0 0
        %343 = vmatpush1.bf16.xpose.msra.mxu0 0
        %344 = vmatprep.subr.bf16.mxu0 0
        %345 = vmatpush1.bf16.xpose.msra.mxu0 0
        %346 = vmatprep.subr.bf16.mxu0 0
        %347 = vmatpush1.bf16.xpose.msra.mxu0 0
        %348 = vmatprep.subr.bf16.mxu0 0
        %349 = vmatpush1.bf16.xpose.msra.mxu0 0
        %350 = vmatprep.subr.bf16.mxu0 0
        %351 = vmatpush1.bf16.xpose.msra.mxu0 0
        %352 = vmatprep.subr.bf16.mxu0 0
        %353 = vmatpush1.bf16.xpose.msra.mxu0 0
        %354 = vmatprep.mubr.bf16.mxu0 0
        %355 = vmatmul.mubr.bf16.gmra.mrb[0].mxu0 %v317
        %v356 = vpop.f32.mrb[0].mxu0
        %v357 = vadd.f32 0.0, %v356
        %v358 = vpop.f32.mrb[0].mxu0
        %v359 = vpop.f32.mrb[0].mxu0
        %v360 = vpop.f32.mrb[0].mxu0
        %361 = vdwg.mxu0
        %v362 = vmul.f32 %v357, 0.35355338
        %v363 = vsel %vm201, %v362, -inf
        %364 = vmax.xlane.f32.xlu0 %v363
        %v365 = vpop.xlane.xlu0 %364
        %v366 = vsub.f32 %v362, %v365
        %v367 = vmul.f32 %v366, 1.442695
        %v368 = vpow.pop %v367
        %v369 = vsel %vm201, %v368, 0.0
        %370 = vadd.xlane.f32.xlu0 %v369
        %v371 = vpop.xlane.xlu0 %370
        %v372 = vrcp.pop %v371
        %v373 = vmul.f32 %v368, %v372
        %v374 = vpack.c.bf16 %v373, %v373
        %375 = vrot.lane.b32.xlu0 %v200, 88
        %v376 = vpop.permute.xlu0 %375
        %v378 = vsel %vm201, %v374, 0
        %v381 = vsel %vm267, %v376, 0
        %383 = vmatprep.subr.bf16.mxu0 0
        %384 = vmatpush1.bf16.msra.mxu0 %v381
        %385 = vmatprep.subr.bf16.mxu0 0
        %386 = vmatpush1.bf16.msra.mxu0 0
        %387 = vmatprep.subr.bf16.mxu0 0
        %388 = vmatpush1.bf16.msra.mxu0 0
        %389 = vmatprep.subr.bf16.mxu0 0
        %390 = vmatpush1.bf16.msra.mxu0 0
        %391 = vmatprep.subr.bf16.mxu0 0
        %392 = vmatpush1.bf16.msra.mxu0 0
        %393 = vmatprep.subr.bf16.mxu0 0
        %394 = vmatpush1.bf16.msra.mxu0 0
        %395 = vmatprep.subr.bf16.mxu0 0
        %396 = vmatpush1.bf16.msra.mxu0 0
        %397 = vmatprep.subr.bf16.mxu0 0
        %398 = vmatpush1.bf16.msra.mxu0 0
        %399 = vmatprep.subr.bf16.mxu0 0
        %400 = vmatpush1.bf16.msra.mxu0 0
        %401 = vmatprep.subr.bf16.mxu0 0
        %402 = vmatpush1.bf16.msra.mxu0 0
        %403 = vmatprep.subr.bf16.mxu0 0
        %404 = vmatpush1.bf16.msra.mxu0 0
        %405 = vmatprep.subr.bf16.mxu0 0
        %406 = vmatpush1.bf16.msra.mxu0 0
        %407 = vmatprep.subr.bf16.mxu0 0
        %408 = vmatpush1.bf16.msra.mxu0 0
        %409 = vmatprep.subr.bf16.mxu0 0
        %410 = vmatpush1.bf16.msra.mxu0 0
        %411 = vmatprep.subr.bf16.mxu0 0
        %412 = vmatpush1.bf16.msra.mxu0 0
        %413 = vmatprep.subr.bf16.mxu0 0
        %414 = vmatpush1.bf16.msra.mxu0 0
        %415 = vmatprep.mubr.bf16.mxu0 0
        %416 = vmatmul.mubr.bf16.gmra.mrb[0].mxu0 %v378
        %v417 = vpop.f32.mrb[0].mxu0
        %v418 = vadd.f32 0.0, %v417
        %v419 = vpop.f32.mrb[0].mxu0
        %v420 = vpop.f32.mrb[0].mxu0
        %v421 = vpop.f32.mrb[0].mxu0
        %422 = vdwg.mxu0
        %423 = vrot.lane.b32.xlu0 %v198, 112
        %v424 = vpop.permute.xlu0 %423
        %425 = vrot.lane.b32.xlu0 %v200, 112
        %v426 = vpop.permute.xlu0 %425
        %v428 = vsel %vm201, %v424, 0
        %v431 = vsel %vm201, %v426, 0
        %433 = vmatprep.subr.bf16.mxu0 0
        %434 = vmatpush1.bf16.xpose.msra.mxu0 %v431
        %435 = vmatprep.subr.bf16.mxu0 0
        %436 = vmatpush1.bf16.xpose.msra.mxu0 0
        %437 = vmatprep.subr.bf16.mxu0 0
        %438 = vmatpush1.bf16.xpose.msra.mxu0 0
        %439 = vmatprep.subr.bf16.mxu0 0
        %440 = vmatpush1.bf16.xpose.msra.mxu0 0
        %441 = vmatprep.subr.bf16.mxu0 0
        %442 = vmatpush1.bf16.xpose.msra.mxu0 0
        %443 = vmatprep.subr.bf16.mxu0 0
        %444 = vmatpush1.bf16.xpose.msra.mxu0 0
        %445 = vmatprep.subr.bf16.mxu0 0
        %446 = vmatpush1.bf16.xpose.msra.mxu0 0
        %447 = vmatprep.subr.bf16.mxu0 0
        %448 = vmatpush1.bf16.xpose.msra.mxu0 0
        %449 = vmatprep.subr.bf16.mxu0 0
        %450 = vmatpush1.bf16.xpose.msra.mxu0 0
        %451 = vmatprep.subr.bf16.mxu0 0
        %452 = vmatpush1.bf16.xpose.msra.mxu0 0
        %453 = vmatprep.subr.bf16.mxu0 0
        %454 = vmatpush1.bf16.xpose.msra.mxu0 0
        %455 = vmatprep.subr.bf16.mxu0 0
        %456 = vmatpush1.bf16.xpose.msra.mxu0 0
        %457 = vmatprep.subr.bf16.mxu0 0
        %458 = vmatpush1.bf16.xpose.msra.mxu0 0
        %459 = vmatprep.subr.bf16.mxu0 0
        %460 = vmatpush1.bf16.xpose.msra.mxu0 0
        %461 = vmatprep.subr.bf16.mxu0 0
        %462 = vmatpush1.bf16.xpose.msra.mxu0 0
        %463 = vmatprep.subr.bf16.mxu0 0
        %464 = vmatpush1.bf16.xpose.msra.mxu0 0
        %465 = vmatprep.mubr.bf16.mxu0 0
        %466 = vmatmul.mubr.bf16.gmra.mrb[0].mxu0 %v428
        %v467 = vpop.f32.mrb[0].mxu0
        %v468 = vadd.f32 0.0, %v467
        %v469 = vpop.f32.mrb[0].mxu0
        %v470 = vpop.f32.mrb[0].mxu0
        %v471 = vpop.f32.mrb[0].mxu0
        %472 = vdwg.mxu0
        %v473 = vmul.f32 %v468, 0.35355338
        %v474 = vsel %vm201, %v473, -inf
        %475 = vmax.xlane.f32.xlu0 %v474
        %v476 = vpop.xlane.xlu0 %475
        %v477 = vsub.f32 %v473, %v476
        %v478 = vmul.f32 %v477, 1.442695
        %v479 = vpow.pop %v478
        %v480 = vsel %vm201, %v479, 0.0
        %481 = vadd.xlane.f32.xlu0 %v480
        %v482 = vpop.xlane.xlu0 %481
        %v483 = vrcp.pop %v482
        %v484 = vmul.f32 %v479, %v483
        %v485 = vpack.c.bf16 %v484, %v484
        %486 = vrot.lane.b32.xlu0 %v200, 80
        %v487 = vpop.permute.xlu0 %486
        %v489 = vsel %vm201, %v485, 0
        %v492 = vsel %vm267, %v487, 0
        %494 = vmatprep.subr.bf16.mxu0 0
        %495 = vmatpush1.bf16.msra.mxu0 %v492
        %496 = vmatprep.subr.bf16.mxu0 0
        %497 = vmatpush1.bf16.msra.mxu0 0
        %498 = vmatprep.subr.bf16.mxu0 0
        %499 = vmatpush1.bf16.msra.mxu0 0
        %500 = vmatprep.subr.bf16.mxu0 0
        %501 = vmatpush1.bf16.msra.mxu0 0
        %502 = vmatprep.subr.bf16.mxu0 0
        %503 = vmatpush1.bf16.msra.mxu0 0
        %504 = vmatprep.subr.bf16.mxu0 0
        %505 = vmatpush1.bf16.msra.mxu0 0
        %506 = vmatprep.subr.bf16.mxu0 0
        %507 = vmatpush1.bf16.msra.mxu0 0
        %508 = vmatprep.subr.bf16.mxu0 0
        %509 = vmatpush1.bf16.msra.mxu0 0
        %510 = vmatprep.subr.bf16.mxu0 0
        %511 = vmatpush1.bf16.msra.mxu0 0
        %512 = vmatprep.subr.bf16.mxu0 0
        %513 = vmatpush1.bf16.msra.mxu0 0
        %514 = vmatprep.subr.bf16.mxu0 0
        %515 = vmatpush1.bf16.msra.mxu0 0
        %516 = vmatprep.subr.bf16.mxu0 0
        %517 = vmatpush1.bf16.msra.mxu0 0
        %518 = vmatprep.subr.bf16.mxu0 0
        %519 = vmatpush1.bf16.msra.mxu0 0
        %520 = vmatprep.subr.bf16.mxu0 0
        %521 = vmatpush1.bf16.msra.mxu0 0
        %522 = vmatprep.subr.bf16.mxu0 0
        %523 = vmatpush1.bf16.msra.mxu0 0
        %524 = vmatprep.subr.bf16.mxu0 0
        %525 = vmatpush1.bf16.msra.mxu0 0
        %526 = vmatprep.mubr.bf16.mxu0 0
        %527 = vmatmul.mubr.bf16.gmra.mrb[0].mxu0 %v489
        %v528 = vpop.f32.mrb[0].mxu0
        %v529 = vadd.f32 0.0, %v528
        %v530 = vpop.f32.mrb[0].mxu0
        %v531 = vpop.f32.mrb[0].mxu0
        %v532 = vpop.f32.mrb[0].mxu0
        %533 = vdwg.mxu0
        %534 = vrot.lane.b32.xlu0 %v198, 104
        %v535 = vpop.permute.xlu0 %534
        %536 = vrot.lane.b32.xlu0 %v200, 104
        %v537 = vpop.permute.xlu0 %536
        %v539 = vsel %vm201, %v535, 0
        %v542 = vsel %vm201, %v537, 0
        %544 = vmatprep.subr.bf16.mxu0 0
        %545 = vmatpush1.bf16.xpose.msra.mxu0 %v542
        %546 = vmatprep.subr.bf16.mxu0 0
        %547 = vmatpush1.bf16.xpose.msra.mxu0 0
        %548 = vmatprep.subr.bf16.mxu0 0
        %549 = vmatpush1.bf16.xpose.msra.mxu0 0
        %550 = vmatprep.subr.bf16.mxu0 0
        %551 = vmatpush1.bf16.xpose.msra.mxu0 0
        %552 = vmatprep.subr.bf16.mxu0 0
        %553 = vmatpush1.bf16.xpose.msra.mxu0 0
        %554 = vmatprep.subr.bf16.mxu0 0
        %555 = vmatpush1.bf16.xpose.msra.mxu0 0
        %556 = vmatprep.subr.bf16.mxu0 0
        %557 = vmatpush1.bf16.xpose.msra.mxu0 0
        %558 = vmatprep.subr.bf16.mxu0 0
        %559 = vmatpush1.bf16.xpose.msra.mxu0 0
        %560 = vmatprep.subr.bf16.mxu0 0
        %561 = vmatpush1.bf16.xpose.msra.mxu0 0
        %562 = vmatprep.subr.bf16.mxu0 0
        %563 = vmatpush1.bf16.xpose.msra.mxu0 0
        %564 = vmatprep.subr.bf16.mxu0 0
        %565 = vmatpush1.bf16.xpose.msra.mxu0 0
        %566 = vmatprep.subr.bf16.mxu0 0
        %567 = vmatpush1.bf16.xpose.msra.mxu0 0
        %568 = vmatprep.subr.bf16.mxu0 0
        %569 = vmatpush1.bf16.xpose.msra.mxu0 0
        %570 = vmatprep.subr.bf16.mxu0 0
        %571 = vmatpush1.bf16.xpose.msra.mxu0 0
        %572 = vmatprep.subr.bf16.mxu0 0
        %573 = vmatpush1.bf16.xpose.msra.mxu0 0
        %574 = vmatprep.subr.bf16.mxu0 0
        %575 = vmatpush1.bf16.xpose.msra.mxu0 0
        %576 = vmatprep.mubr.bf16.mxu0 0
        %577 = vmatmul.mubr.bf16.gmra.mrb[0].mxu0 %v539
        %v578 = vpop.f32.mrb[0].mxu0
        %v579 = vadd.f32 0.0, %v578
        %v580 = vpop.f32.mrb[0].mxu0
        %v581 = vpop.f32.mrb[0].mxu0
        %v582 = vpop.f32.mrb[0].mxu0
        %583 = vdwg.mxu0
        %v584 = vmul.f32 %v579, 0.35355338
        %v585 = vsel %vm201, %v584, -inf
        %586 = vmax.xlane.f32.xlu0 %v585
        %v587 = vpop.xlane.xlu0 %586
        %v588 = vsub.f32 %v584, %v587
        %v589 = vmul.f32 %v588, 1.442695
        %v590 = vpow.pop %v589
        %v591 = vsel %vm201, %v590, 0.0
        %592 = vadd.xlane.f32.xlu0 %v591
        %v593 = vpop.xlane.xlu0 %592
        %v594 = vrcp.pop %v593
        %v595 = vmul.f32 %v590, %v594
        %v596 = vpack.c.bf16 %v595, %v595
        %597 = vrot.lane.b32.xlu0 %v200, 72
        %v598 = vpop.permute.xlu0 %597
        %v600 = vsel %vm201, %v596, 0
        %v603 = vsel %vm267, %v598, 0
        %605 = vmatprep.subr.bf16.mxu0 0
        %606 = vmatpush1.bf16.msra.mxu0 %v603
        %607 = vmatprep.subr.bf16.mxu0 0
        %608 = vmatpush1.bf16.msra.mxu0 0
        %609 = vmatprep.subr.bf16.mxu0 0
        %610 = vmatpush1.bf16.msra.mxu0 0
        %611 = vmatprep.subr.bf16.mxu0 0
        %612 = vmatpush1.bf16.msra.mxu0 0
        %613 = vmatprep.subr.bf16.mxu0 0
        %614 = vmatpush1.bf16.msra.mxu0 0
        %615 = vmatprep.subr.bf16.mxu0 0
        %616 = vmatpush1.bf16.msra.mxu0 0
        %617 = vmatprep.subr.bf16.mxu0 0
        %618 = vmatpush1.bf16.msra.mxu0 0
        %619 = vmatprep.subr.bf16.mxu0 0
        %620 = vmatpush1.bf16.msra.mxu0 0
        %621 = vmatprep.subr.bf16.mxu0 0
        %622 = vmatpush1.bf16.msra.mxu0 0
        %623 = vmatprep.subr.bf16.mxu0 0
        %624 = vmatpush1.bf16.msra.mxu0 0
        %625 = vmatprep.subr.bf16.mxu0 0
        %626 = vmatpush1.bf16.msra.mxu0 0
        %627 = vmatprep.subr.bf16.mxu0 0
        %628 = vmatpush1.bf16.msra.mxu0 0
        %629 = vmatprep.subr.bf16.mxu0 0
        %630 = vmatpush1.bf16.msra.mxu0 0
        %631 = vmatprep.subr.bf16.mxu0 0
        %632 = vmatpush1.bf16.msra.mxu0 0
        %633 = vmatprep.subr.bf16.mxu0 0
        %634 = vmatpush1.bf16.msra.mxu0 0
        %635 = vmatprep.subr.bf16.mxu0 0
        %636 = vmatpush1.bf16.msra.mxu0 0
        %637 = vmatprep.mubr.bf16.mxu0 0
        %638 = vmatmul.mubr.bf16.gmra.mrb[0].mxu0 %v600
        %v639 = vpop.f32.mrb[0].mxu0
        %v640 = vadd.f32 0.0, %v639
        %v641 = vpop.f32.mrb[0].mxu0
        %v642 = vpop.f32.mrb[0].mxu0
        %v643 = vpop.f32.mrb[0].mxu0
        %644 = vdwg.mxu0
        %646 = vrot.lane.b32.xlu0 %v418, 8
        %v647 = vpop.permute.xlu0 %646
        %650 = vrot.lane.b32.xlu0 %v529, 16
        %v651 = vpop.permute.xlu0 %650
        %654 = vrot.lane.b32.xlu0 %v640, 24
        %v655 = vpop.permute.xlu0 %654
        %v657 = vsel %vm201, %v306, %v647
        %vm658 = vcmask 130048
        %v659 = vsel %vm658, %v657, %v651
        %vm660 = vcmask 195584
        %v661 = vsel %vm660, %v659, %v655
        %vm662 = vcmask 261120
        %663 = vst.msk [vmem:[%s195] sm:$0xff] %vm662, %v661
        %s664 = sand.u32 %s82, 1
        %s665 = scalar_lea.sflag [#allocation4], %s664
        %s666 = sand.u32 %s82, 1
        %s667 = smul.addr %s666, 8
        %s668 = scalar_lea.vmem [#allocation7], %s667
        // Predicated region
        $region37: #{encoder_decoder_forward.50} parent=27 // pred_check
          %p669 = pneg %p92
        $region38: #{encoder_decoder_forward.50} parent=27 // pred_check_branch
          %671 = sbr.rel (%p669) target = $region40
        $region39: #{encoder_decoder_forward.50} parent=27 // pred_region
          %s673 = ssub.s32 128, 128
          %674 = vsyncadd %s665, %s673
          %s675 = smul.addr %s22, 128
          %s676 = scalar_lea.hbm %s2, %s675
          %s678 = sshll.u32 %s668, 4
          %s679 = int_to_ptr.vmem [resolvable:$true] %s678
          %681 = dma.vmem_to_hbm [thread:$0]  %s679, 128, %s676, %s665
        $region40: #{encoder_decoder_forward.50} parent=27 // pred_fallthru
          _
      $region28: #{encoder_decoder_forward.50} parent=5 // pred_fallthru
        _
      %p682 = scmp.le.s32.totalorder 2, %s17
      // Predicated region
      $region41: #{encoder_decoder_forward.50} parent=5 // pred_check
        %p683 = pneg %p682
      $region42: #{encoder_decoder_forward.50} parent=5 // pred_check_branch
        %685 = sbr.rel (%p683) target = $region44
      $region43: #{encoder_decoder_forward.50} parent=5 // pred_region
        %s686 = ssub.s32 %s17, 2
        // Predicated region
        $region45: #{encoder_decoder_forward.50} parent=43 // pred_check
          %p687 = pneg %p98
        $region46: #{encoder_decoder_forward.50} parent=43 // pred_check_branch
          %689 = sbr.rel (%p687) target = $region48
        $region47: #{encoder_decoder_forward.50} parent=43 // pred_region
          %s690 = sand.u32 %s83, 1
          %s691 = scalar_lea.sflag [#allocation4], %s690
          %s692 = sand.u32 %s83, 1
          %s693 = smul.addr %s692, 8
          %s694 = scalar_lea.vmem [#allocation7], %s693
          %695 = dma.done %s691, 128
        $region48: #{encoder_decoder_forward.50} parent=43 // pred_fallthru
          _
      $region44: #{encoder_decoder_forward.50} parent=5 // pred_fallthru
        _
    $region6: #{encoder_decoder_forward.50} parent=1 // loop_footer
      %s21 = sadd.s32 1, %s17
    $region7: #{encoder_decoder_forward.50} parent=1 // loop_footer_branch
      %16 = sbr.rel target = $region3
    $region8: #{encoder_decoder_forward.50} parent=1 // loop_exit
      _
    %696 = vsyncpa [#allocation3], 1
    %s697 = scalar_lea.sflag [#allocation3], 1
    %698 = vsyncpa %s697, 1
    %699 = vsyncpa [#allocation6], 1
    %s700 = scalar_lea.sflag [#allocation6], 1
    %701 = vsyncpa %s700, 1
    %702 = vsyncpa [#allocation4], 1
    %s703 = scalar_lea.sflag [#allocation4], 1
    %704 = vsyncpa %s703, 1

// kernel: encoder_decoder_forward.52
$region0: #{encoder_decoder_forward.52}
  #allocation0 [shape = 'u32[]', space=smem, size = 0x4, offset = 0x4, fixed_abs, tag = 'smem constant byte address 0x4 - core index']
  #allocation1 [shape = 'u32[144,128]{1,0:T(1,128)}', space=vmem, size = 0x12000, scoped, tag = 'internal scratch']
  %s0 = inlined_call_operand.hbm [shape: f32[16,32], index: 0, kind: input, shape index: {}]
  %s1 = inlined_call_operand.hbm [shape: f32[32,64], index: 1, kind: input, shape index: {}]
  %s2 = inlined_call_operand.hbm [shape: f32[1,64], index: 2, kind: input, shape index: {}]
  %s3 = inlined_call_operand.hbm [shape: f32[64,32], index: 3, kind: input, shape index: {}]
  %s4 = inlined_call_operand.hbm [shape: f32[1,32], index: 4, kind: input, shape index: {}]
  %s5 = inlined_call_operand.hbm [shape: f32[1,32], index: 5, kind: input, shape index: {}]
  %s6 = inlined_call_operand.hbm [shape: f32[1,32], index: 6, kind: input, shape index: {}]
  %s7 = inlined_call_operand.hbm [shape: f32[16,32], index: 7, kind: output, shape index: {}]
  %s8 = sld [smem:[#allocation0]]
  $region66: #{encoder_decoder_forward.52} parent=0
    _
  %s10 = ssub.s32 1, %s8
  %s11 = scalar_select 0, %s10, %s8
  $region1: #{encoder_decoder_forward.52} parent=0
    #allocation2 [shape = 'u8[8192]{0}', space=vmem, size = 0x2000, scoped, tag = 'input window, operand 0, single buffered']
    #allocation3 [shape = 's32[1]{0}', space=sflag, size = 0x4, scoped, tag = 'scoped memory for encoder_decoder_forward.52']
    #allocation4 [shape = 's32[1]{0}', space=sflag, size = 0x4, scoped, tag = 'scoped memory for encoder_decoder_forward.52']
    #allocation5 [shape = 'u8[16384]{0}', space=vmem, size = 0x4000, scoped, tag = 'input window, operand 1, single buffered']
    #allocation6 [shape = 's32[1]{0}', space=sflag, size = 0x4, scoped, tag = 'scoped memory for encoder_decoder_forward.52']
    #allocation7 [shape = 'u8[512]{0}', space=vmem, size = 0x400, scoped, tag = 'input window, operand 2, single buffered']
    #allocation8 [shape = 'u8[32768]{0}', space=vmem, size = 0x8000, scoped, tag = 'input window, operand 3, single buffered']
    #allocation9 [shape = 's32[1]{0}', space=sflag, size = 0x4, scoped, tag = 'scoped memory for encoder_decoder_forward.52']
    #allocation10 [shape = 'u8[512]{0}', space=vmem, size = 0x400, scoped, tag = 'input window, operand 4, single buffered']
    #allocation11 [shape = 'u8[512]{0}', space=vmem, size = 0x400, scoped, tag = 'input window, operand 5, single buffered']
    #allocation12 [shape = 's32[1]{0}', space=sflag, size = 0x4, scoped, tag = 'scoped memory for encoder_decoder_forward.52']
    #allocation13 [shape = 'u8[512]{0}', space=vmem, size = 0x400, scoped, tag = 'input window, operand 6, single buffered']
    #allocation14 [shape = 'u8[8192]{0}', space=vmem, size = 0x2000, scoped, tag = 'output window, operand 0, single buffered']
    %12 = vsyncpa [#allocation3], 0
    %13 = vsyncpa [#allocation6], 0
    %14 = vsyncpa [#allocation9], 0
    %15 = vsyncpa [#allocation12], 0
    %16 = vsyncpa [#allocation4], 0
    // Predicated region
    $region2: #{encoder_decoder_forward.52} parent=1 // pred_check
      _
    $region3: #{encoder_decoder_forward.52} parent=1 // pred_check_branch
      %18 = sbr.rel (0) target = $region5
    $region4: #{encoder_decoder_forward.52} parent=1 // pred_region
      %s20 = ssub.s32 256, 256
      %21 = vsyncadd [#allocation3], %s20
      %s22 = sshll.u32 [#allocation2], 4
      %s23 = int_to_ptr.vmem [resolvable:$true] %s22
      %28 = dma.hbm_to_vmem [thread:$0]  %s0, 256, %s23, [#allocation3], 128, 128, 8
    $region5: #{encoder_decoder_forward.52} parent=1 // pred_fallthru
      _
    // Predicated region
    $region6: #{encoder_decoder_forward.52} parent=1 // pred_check
      _
    $region7: #{encoder_decoder_forward.52} parent=1 // pred_check_branch
      %30 = sbr.rel (0) target = $region9
    $region8: #{encoder_decoder_forward.52} parent=1 // pred_region
      %s32 = ssub.s32 512, 512
      %33 = vsyncadd [#allocation6], %s32
      %s34 = sshll.u32 [#allocation5], 4
      %s35 = int_to_ptr.vmem [resolvable:$true] %s34
      %40 = dma.hbm_to_vmem [thread:$0]  %s1, 512, %s35, [#allocation6], 128, 128, 8
    $region9: #{encoder_decoder_forward.52} parent=1 // pred_fallthru
      _
    // Predicated region
    $region10: #{encoder_decoder_forward.52} parent=1 // pred_check
      _
    $region11: #{encoder_decoder_forward.52} parent=1 // pred_check_branch
      %42 = sbr.rel (0) target = $region13
    $region12: #{encoder_decoder_forward.52} parent=1 // pred_region
      %s44 = ssub.s32 16, 16
      %45 = vsyncadd [#allocation6], %s44
      %s47 = sshll.u32 [#allocation7], 4
      %s48 = int_to_ptr.vmem [resolvable:$true] %s47
      %50 = dma.hbm_to_vmem [thread:$0]  %s2, 16, %s48, [#allocation6]
    $region13: #{encoder_decoder_forward.52} parent=1 // pred_fallthru
      _
    // Predicated region
    $region14: #{encoder_decoder_forward.52} parent=1 // pred_check
      _
    $region15: #{encoder_decoder_forward.52} parent=1 // pred_check_branch
      %52 = sbr.rel (0) target = $region17
    $region16: #{encoder_decoder_forward.52} parent=1 // pred_region
      %s54 = ssub.s32 1024, 1024
      %55 = vsyncadd [#allocation9], %s54
      %s56 = sshll.u32 [#allocation8], 4
      %s57 = int_to_ptr.vmem [resolvable:$true] %s56
      %62 = dma.hbm_to_vmem [thread:$0]  %s3, 1024, %s57, [#allocation9], 128, 128, 8
    $region17: #{encoder_decoder_forward.52} parent=1 // pred_fallthru
      _
    // Predicated region
    $region18: #{encoder_decoder_forward.52} parent=1 // pred_check
      _
    $region19: #{encoder_decoder_forward.52} parent=1 // pred_check_branch
      %64 = sbr.rel (0) target = $region21
    $region20: #{encoder_decoder_forward.52} parent=1 // pred_region
      %s66 = ssub.s32 16, 16
      %67 = vsyncadd [#allocation9], %s66
      %s69 = sshll.u32 [#allocation10], 4
      %s70 = int_to_ptr.vmem [resolvable:$true] %s69
      %72 = dma.hbm_to_vmem [thread:$0]  %s4, 16, %s70, [#allocation9]
    $region21: #{encoder_decoder_forward.52} parent=1 // pred_fallthru
      _
    // Predicated region
    $region22: #{encoder_decoder_forward.52} parent=1 // pred_check
      _
    $region23: #{encoder_decoder_forward.52} parent=1 // pred_check_branch
      %74 = sbr.rel (0) target = $region25
    $region24: #{encoder_decoder_forward.52} parent=1 // pred_region
      %s76 = ssub.s32 16, 16
      %77 = vsyncadd [#allocation12], %s76
      %s79 = sshll.u32 [#allocation11], 4
      %s80 = int_to_ptr.vmem [resolvable:$true] %s79
      %82 = dma.hbm_to_vmem [thread:$0]  %s5, 16, %s80, [#allocation12]
    $region25: #{encoder_decoder_forward.52} parent=1 // pred_fallthru
      _
    // Predicated region
    $region26: #{encoder_decoder_forward.52} parent=1 // pred_check
      _
    $region27: #{encoder_decoder_forward.52} parent=1 // pred_check_branch
      %84 = sbr.rel (0) target = $region29
    $region28: #{encoder_decoder_forward.52} parent=1 // pred_region
      %s86 = ssub.s32 16, 16
      %87 = vsyncadd [#allocation12], %s86
      %s89 = sshll.u32 [#allocation13], 4
      %s90 = int_to_ptr.vmem [resolvable:$true] %s89
      %92 = dma.hbm_to_vmem [thread:$0]  %s6, 16, %s90, [#allocation12]
    $region29: #{encoder_decoder_forward.52} parent=1 // pred_fallthru
      _
    // Predicated region
    $region30: #{encoder_decoder_forward.52} parent=1 // pred_check
      _
    $region31: #{encoder_decoder_forward.52} parent=1 // pred_check_branch
      %94 = sbr.rel (0) target = $region33
    $region32: #{encoder_decoder_forward.52} parent=1 // pred_region
      %95 = dma.done [#allocation3], 256
    $region33: #{encoder_decoder_forward.52} parent=1 // pred_fallthru
      _
    // Predicated region
    $region34: #{encoder_decoder_forward.52} parent=1 // pred_check
      _
    $region35: #{encoder_decoder_forward.52} parent=1 // pred_check_branch
      %97 = sbr.rel (0) target = $region37
    $region36: #{encoder_decoder_forward.52} parent=1 // pred_region
      %98 = dma.done [#allocation6], 512
    $region37: #{encoder_decoder_forward.52} parent=1 // pred_fallthru
      _
    // Predicated region
    $region38: #{encoder_decoder_forward.52} parent=1 // pred_check
      _
    $region39: #{encoder_decoder_forward.52} parent=1 // pred_check_branch
      %100 = sbr.rel (0) target = $region41
    $region40: #{encoder_decoder_forward.52} parent=1 // pred_region
      %101 = dma.done [#allocation6], 16
    $region41: #{encoder_decoder_forward.52} parent=1 // pred_fallthru
      _
    // Predicated region
    $region42: #{encoder_decoder_forward.52} parent=1 // pred_check
      _
    $region43: #{encoder_decoder_forward.52} parent=1 // pred_check_branch
      %103 = sbr.rel (0) target = $region45
    $region44: #{encoder_decoder_forward.52} parent=1 // pred_region
      %104 = dma.done [#allocation9], 1024
    $region45: #{encoder_decoder_forward.52} parent=1 // pred_fallthru
      _
    // Predicated region
    $region46: #{encoder_decoder_forward.52} parent=1 // pred_check
      _
    $region47: #{encoder_decoder_forward.52} parent=1 // pred_check_branch
      %106 = sbr.rel (0) target = $region49
    $region48: #{encoder_decoder_forward.52} parent=1 // pred_region
      %107 = dma.done [#allocation9], 16
    $region49: #{encoder_decoder_forward.52} parent=1 // pred_fallthru
      _
    // Predicated region
    $region50: #{encoder_decoder_forward.52} parent=1 // pred_check
      _
    $region51: #{encoder_decoder_forward.52} parent=1 // pred_check_branch
      %109 = sbr.rel (0) target = $region53
    $region52: #{encoder_decoder_forward.52} parent=1 // pred_region
      %110 = dma.done [#allocation12], 16
    $region53: #{encoder_decoder_forward.52} parent=1 // pred_fallthru
      _
    // Predicated region
    $region54: #{encoder_decoder_forward.52} parent=1 // pred_check
      _
    $region55: #{encoder_decoder_forward.52} parent=1 // pred_check_branch
      %112 = sbr.rel (0) target = $region57
    $region56: #{encoder_decoder_forward.52} parent=1 // pred_region
      %113 = dma.done [#allocation12], 16
    $region57: #{encoder_decoder_forward.52} parent=1 // pred_fallthru
      _
    %v115 = vld [vmem:[#allocation2] sm:$0xff]
    %v116 = vld [vmem:[#allocation2 + $0x8] sm:$0xff]
    %v117 = vpack.c.bf16 %v116, %v115
    %v118 = vld [vmem:[#allocation5] sm:$0xff]
    %v119 = vld [vmem:[#allocation5 + $0x8] sm:$0xff]
    %v120 = vld [vmem:[#allocation5 + $0x10] sm:$0xff]
    %v121 = vld [vmem:[#allocation5 + $0x18] sm:$0xff]
    %v122 = vpack.c.bf16 %v119, %v118
    %v123 = vpack.c.bf16 %v121, %v120
    %v124 = vld [vmem:[#allocation7] sm:$0x1]
    %v126 = vlaneseq
    %v127 = vshrl.u32 %v126, 7
    %v128 = vsub.s32 0, %v127
    %v129 = vrot.slane %v124, %v128
    %vm131 = vcmask 261120
    %v133 = vsel %vm131, %v117, 0
    %135 = vmatprep.subr.bf16.mxu0 0
    %136 = vmatpush1.bf16.msra.mxu0 %v122
    %137 = vmatprep.subr.bf16.mxu0 0
    %138 = vmatpush1.bf16.msra.mxu0 %v123
    %139 = vmatprep.subr.bf16.mxu0 0
    %140 = vmatpush1.bf16.msra.mxu0 0
    %141 = vmatprep.subr.bf16.mxu0 0
    %142 = vmatpush1.bf16.msra.mxu0 0
    %143 = vmatprep.subr.bf16.mxu0 0
    %144 = vmatpush1.bf16.msra.mxu0 0
    %145 = vmatprep.subr.bf16.mxu0 0
    %146 = vmatpush1.bf16.msra.mxu0 0
    %147 = vmatprep.subr.bf16.mxu0 0
    %148 = vmatpush1.bf16.msra.mxu0 0
    %149 = vmatprep.subr.bf16.mxu0 0
    %150 = vmatpush1.bf16.msra.mxu0 0
    %151 = vmatprep.subr.bf16.mxu0 0
    %152 = vmatpush1.bf16.msra.mxu0 0
    %153 = vmatprep.subr.bf16.mxu0 0
    %154 = vmatpush1.bf16.msra.mxu0 0
    %155 = vmatprep.subr.bf16.mxu0 0
    %156 = vmatpush1.bf16.msra.mxu0 0
    %157 = vmatprep.subr.bf16.mxu0 0
    %158 = vmatpush1.bf16.msra.mxu0 0
    %159 = vmatprep.subr.bf16.mxu0 0
    %160 = vmatpush1.bf16.msra.mxu0 0
    %161 = vmatprep.subr.bf16.mxu0 0
    %162 = vmatpush1.bf16.msra.mxu0 0
    %163 = vmatprep.subr.bf16.mxu0 0
    %164 = vmatpush1.bf16.msra.mxu0 0
    %165 = vmatprep.subr.bf16.mxu0 0
    %166 = vmatpush1.bf16.msra.mxu0 0
    %167 = vmatprep.mubr.bf16.mxu0 0
    %168 = vmatmul.mubr.bf16.gmra.mrb[0].mxu0 %v133
    %v169 = vpop.f32.mrb[0].mxu0
    %v170 = vadd.f32 %v129, %v169
    %v171 = vpop.f32.mrb[0].mxu0
    %v172 = vpop.f32.mrb[0].mxu0
    %v173 = vadd.f32 %v129, %v172
    %v174 = vpop.f32.mrb[0].mxu0
    %175 = vdwg.mxu0
    %v176 = vmul.f32 %v170, %v170
    %v177 = vmul.f32 %v173, %v173
    %v178 = vmul.f32 %v170, %v176
    %v179 = vmul.f32 %v173, %v177
    %v180 = vmul.f32 %v178, 0.044715
    %v181 = vmul.f32 %v179, 0.044715
    %v182 = vadd.f32 %v170, %v180
    %v183 = vadd.f32 %v173, %v181
    %v184 = vmul.f32 %v182, 0.7978846
    %v185 = vmul.f32 %v183, 0.7978846
    %v186 = vtanh.pop %v184
    %v187 = vtanh.pop %v185
    %v188 = vadd.f32 %v186, 1.0
    %v189 = vadd.f32 %v187, 1.0
    %v190 = vmul.f32 %v188, 0.5
    %v191 = vmul.f32 %v189, 0.5
    %v192 = vmul.f32 %v170, %v190
    %v193 = vmul.f32 %v173, %v191
    %v194 = vpack.c.bf16 %v193, %v192
    %v195 = vld [vmem:[#allocation8] sm:$0xff]
    %v196 = vld [vmem:[#allocation8 + $0x8] sm:$0xff]
    %v197 = vld [vmem:[#allocation8 + $0x10] sm:$0xff]
    %v198 = vld [vmem:[#allocation8 + $0x18] sm:$0xff]
    %v199 = vld [vmem:[#allocation8 + $0x20] sm:$0xff]
    %v200 = vld [vmem:[#allocation8 + $0x28] sm:$0xff]
    %v201 = vld [vmem:[#allocation8 + $0x30] sm:$0xff]
    %v202 = vld [vmem:[#allocation8 + $0x38] sm:$0xff]
    %v203 = vpack.c.bf16 %v196, %v195
    %v204 = vpack.c.bf16 %v198, %v197
    %v205 = vpack.c.bf16 %v200, %v199
    %v206 = vpack.c.bf16 %v202, %v201
    %v207 = vld [vmem:[#allocation10] sm:$0x1]
    %v209 = vlaneseq
    %v210 = vshrl.u32 %v209, 7
    %v211 = vsub.s32 0, %v210
    %v212 = vrot.slane %v207, %v211
    %vm214 = vcmask 523264
    %v216 = vsel %vm214, %v194, 0
    %218 = vmatprep.subr.bf16.mxu0 0
    %219 = vmatpush1.bf16.msra.mxu0 %v203
    %220 = vmatprep.subr.bf16.mxu0 0
    %221 = vmatpush1.bf16.msra.mxu0 %v204
    %222 = vmatprep.subr.bf16.mxu0 0
    %223 = vmatpush1.bf16.msra.mxu0 %v205
    %224 = vmatprep.subr.bf16.mxu0 0
    %225 = vmatpush1.bf16.msra.mxu0 %v206
    %226 = vmatprep.subr.bf16.mxu0 0
    %227 = vmatpush1.bf16.msra.mxu0 0
    %228 = vmatprep.subr.bf16.mxu0 0
    %229 = vmatpush1.bf16.msra.mxu0 0
    %230 = vmatprep.subr.bf16.mxu0 0
    %231 = vmatpush1.bf16.msra.mxu0 0
    %232 = vmatprep.subr.bf16.mxu0 0
    %233 = vmatpush1.bf16.msra.mxu0 0
    %234 = vmatprep.subr.bf16.mxu0 0
    %235 = vmatpush1.bf16.msra.mxu0 0
    %236 = vmatprep.subr.bf16.mxu0 0
    %237 = vmatpush1.bf16.msra.mxu0 0
    %238 = vmatprep.subr.bf16.mxu0 0
    %239 = vmatpush1.bf16.msra.mxu0 0
    %240 = vmatprep.subr.bf16.mxu0 0
    %241 = vmatpush1.bf16.msra.mxu0 0
    %242 = vmatprep.subr.bf16.mxu0 0
    %243 = vmatpush1.bf16.msra.mxu0 0
    %244 = vmatprep.subr.bf16.mxu0 0
    %245 = vmatpush1.bf16.msra.mxu0 0
    %246 = vmatprep.subr.bf16.mxu0 0
    %247 = vmatpush1.bf16.msra.mxu0 0
    %248 = vmatprep.subr.bf16.mxu0 0
    %249 = vmatpush1.bf16.msra.mxu0 0
    %250 = vmatprep.mubr.bf16.mxu0 0
    %251 = vmatmul.mubr.bf16.gmra.mrb[0].mxu0 %v216
    %v252 = vpop.f32.mrb[0].mxu0
    %v253 = vadd.f32 %v212, %v252
    %v254 = vpop.f32.mrb[0].mxu0
    %v255 = vpop.f32.mrb[0].mxu0
    %v256 = vadd.f32 %v212, %v255
    %v257 = vpop.f32.mrb[0].mxu0
    %258 = vdwg.mxu0
    %v259 = vadd.f32 %v253, %v115
    %v260 = vadd.f32 %v256, %v116
    %v261 = vld [vmem:[#allocation11] sm:$0x1]
    %v262 = vld [vmem:[#allocation13] sm:$0x1]
    %v263 = vsel %vm131, %v259, 0.0
    %264 = vadd.xlane.f32.xlu0 %v263
    %v265 = vpop.xlane.xlu0 %264
    %v266 = vsel %vm131, %v260, 0.0
    %267 = vadd.xlane.f32.xlu0 %v266
    %v268 = vpop.xlane.xlu0 %267
    %v269 = vrcp.pop 32.0
    %v270 = vmul.f32 %v265, %v269
    %v271 = vmul.f32 %v268, %v269
    %v272 = vsub.f32 %v259, %v270
    %v273 = vsub.f32 %v260, %v271
    %v274 = vmul.f32 %v272, %v272
    %v275 = vmul.f32 %v273, %v273
    %v276 = vsel %vm131, %v274, 0.0
    %277 = vadd.xlane.f32.xlu0 %v276
    %v278 = vpop.xlane.xlu0 %277
    %v279 = vsel %vm131, %v275, 0.0
    %280 = vadd.xlane.f32.xlu0 %v279
    %v281 = vpop.xlane.xlu0 %280
    %v282 = vmul.f32 %v278, %v269
    %v283 = vmul.f32 %v281, %v269
    %v284 = vadd.f32 %v282, 1e-12
    %v285 = vadd.f32 %v283, 1e-12
    %v286 = vrsqrt.pop %v284
    %v287 = vrsqrt.pop %v285
    %v288 = vmul.f32 %v272, %v286
    %v289 = vmul.f32 %v273, %v287
    %v291 = vlaneseq
    %v292 = vshrl.u32 %v291, 7
    %v293 = vsub.s32 0, %v292
    %v294 = vrot.slane %v261, %v293
    %v296 = vmul.f32 %v288, %v294
    %v297 = vmul.f32 %v289, %v294
    %v299 = vlaneseq
    %v300 = vshrl.u32 %v299, 7
    %v301 = vsub.s32 0, %v300
    %v302 = vrot.slane %v262, %v301
    %v304 = vadd.f32 %v296, %v302
    %v305 = vadd.f32 %v297, %v302
    %306 = vst.msk [vmem:[#allocation14] sm:$0xff] %vm131, %v304
    %307 = vst.msk [vmem:[#allocation14 + $0x8] sm:$0xff] %vm131, %v305
    // Predicated region
    $region58: #{encoder_decoder_forward.52} parent=1 // pred_check
      _
    $region59: #{encoder_decoder_forward.52} parent=1 // pred_check_branch
      %309 = sbr.rel (0) target = $region61
    $region60: #{encoder_decoder_forward.52} parent=1 // pred_region
      %s311 = ssub.s32 256, 256
      %312 = vsyncadd [#allocation4], %s311
      %s313 = sshll.u32 [#allocation14], 4
      %s314 = int_to_ptr.vmem [resolvable:$true] %s313
      %319 = dma.vmem_to_hbm [thread:$0]  %s314, 256, %s7, [#allocation4], 128, 128, 8
    $region61: #{encoder_decoder_forward.52} parent=1 // pred_fallthru
      _
    // Predicated region
    $region62: #{encoder_decoder_forward.52} parent=1 // pred_check
      _
    $region63: #{encoder_decoder_forward.52} parent=1 // pred_check_branch
      %321 = sbr.rel (0) target = $region65
    $region64: #{encoder_decoder_forward.52} parent=1 // pred_region
      %322 = dma.done [#allocation4], 256
    $region65: #{encoder_decoder_forward.52} parent=1 // pred_fallthru
      _
    %323 = vsyncpa [#allocation3], 1
    %324 = vsyncpa [#allocation6], 1
    %325 = vsyncpa [#allocation9], 1
    %326 = vsyncpa [#allocation12], 1
    %327 = vsyncpa [#allocation4], 1

</llo_original>
